<compile_context>
chip_gen: v7x
topology: tpu7x:2x2x1
jax: 0.10.0
libtpu: 0.0.40
codegen_flags: <defaults>
</compile_context>

<pallas_src>
import functools

import jax
import jax.numpy as jnp
from jax import lax
from jax.experimental import pallas as pl
from jax.experimental.pallas import tpu as pltpu


def _subcross_gmn_kernel(num_layers, h_dim,
                         # VMEM inputs
                         h0_t_ref, h0_q_ref, a_t_ref, a_q_ref,
                         wl_ref, wr_ref, b_ref,
                         # SMEM inputs
                         coef_t_ref, coef_q_ref,
                         # VMEM inputs
                         fmask_ref, qvalid_ref,
                         # HBM output (memory_space=pl.ANY)
                         out_hbm,
                         # scratch
                         att_scr, dma_sem):
    """One (target, query) graph pair per grid step; all layers run in-kernel."""
    b = pl.program_id(0)
    n_maps = num_layers + 1
    bf16, f32 = jnp.bfloat16, jnp.float32

    # Hoisted (used by every softmax call; JAX will not CSE repeated compares).
    mvalid = fmask_ref[...] > 0.0            # [Nq_pad, Nt_pad] bool
    qvalid = qvalid_ref[...]                 # [Nq_pad, 1] f32 (0 on padded query rows)
    inv_sqrt_h = 1.0 / float(h_dim) ** 0.5
    neg_big = -1e9                           # matches the PyTorch -1000000000.0 sentinel

    def elu(x):
        # F.elu(alpha=1); exp(x)-1 (abs err < 1.2e-7 vs expm1) — exp lowers to the EUP.
        return jnp.where(x > 0.0, x, jnp.exp(x) - 1.0)

    def masked_softmax(z_t, z_q):
        # get_att(): scaled, masked softmax over targets (last axis).  1/sqrt(H) is
        # folded into the small z_q operand; MXU operands bf16, f32 accumulation.
        s = lax.dot_general((z_q * inv_sqrt_h).astype(bf16), z_t.astype(bf16),
                            (((1,), (1,)), ((), ())),
                            preferred_element_type=f32)       # [Nq_pad, Nt_pad]
        s = jnp.where(mvalid, s, neg_big)
        s = s - jnp.max(s, axis=-1, keepdims=True)
        e = jnp.exp(s)
        den = jnp.sum(e, axis=-1, keepdims=True)
        inv = pl.reciprocal(den, approx=True)
        inv = inv * (2.0 - den * inv)        # one Newton step -> ~exact normalization
        # qvalid folded into the cheap [Nq,1] factor; zeroes padded query rows so
        # they cannot leak into the cross terms.
        return e * (inv * qvalid)

    pending = [None, None]                   # per-slot outstanding att -> HBM DMA

    def write_att(i, att):
        # Stream this layer's attention map to HBM, double-buffered so the DMA
        # overlaps the cross matmuls / next layer (<= 2 maps VMEM-resident).
        slot = i % 2
        if pending[slot] is not None:
            pending[slot].wait()             # slot reuse: previous copy must be done
        att_scr[slot, :, :] = att
        cp = pltpu.make_async_copy(att_scr.at[slot],
                                   out_hbm.at[b * n_maps + i],
                                   dma_sem.at[slot])
        cp.start()
        pending[slot] = cp

    h_t = h0_t_ref[...]                      # [Nt_pad, Hp] f32 (pad lanes/rows are 0)
    h_q = h0_q_ref[...]                      # [Nq_pad, Hp] f32

    for i in range(num_layers):              # static unroll (num_layers = 3)
        wl = wl_ref[i]                       # [Hp, Hp] bf16 (= lin_l.weight^T, padded)
        wr = wr_ref[i]                       # [Hp, Hp] bf16 (= lin_r.weight^T, padded)
        bias = b_ref[i]                      # [1, Hp] f32

        # --- SAGEConv(mean) + ELU on each graph.  Separate per-graph adjacencies
        #     (no block-diag zeros), bf16 MXU operands, f32 accumulation.  No
        #     [agg|h] concat: z = agg@Wl^T + h@Wr^T + b as two matmuls.
        h_t_bf = h_t.astype(bf16)
        h_q_bf = h_q.astype(bf16)
        agg_t = jnp.dot(a_t_ref[...], h_t_bf, preferred_element_type=f32)
        agg_q = jnp.dot(a_q_ref[...], h_q_bf, preferred_element_type=f32)
        z_t = elu(jnp.dot(agg_t.astype(bf16), wl, preferred_element_type=f32)
                  + jnp.dot(h_t_bf, wr, preferred_element_type=f32) + bias)
        z_q = elu(jnp.dot(agg_q.astype(bf16), wl, preferred_element_type=f32)
                  + jnp.dot(h_q_bf, wr, preferred_element_type=f32) + bias)

        # --- SIM[i] == get_att ---
        att = masked_softmax(z_t, z_q)       # [Nq_pad, Nt_pad] f32
        write_att(i, att)

        # --- cross terms + residual mixing with per-layer coefficients (SMEM scalars)
        att_bf = att.astype(bf16)
        z_t_bf = z_t.astype(bf16)
        z_q_bf = z_q.astype(bf16)
        # cross_t contracts att over its query axis (dim 0): no explicit att.T copy.
        cross_t = lax.dot_general(att_bf, z_q_bf, (((0,), (0,)), ((), ())),
                                  preferred_element_type=f32)            # [Nt_pad, Hp]
        cross_q = jnp.dot(att_bf, z_t_bf, preferred_element_type=f32)    # [Nq_pad, Hp]
        h_t = (coef_t_ref[i, 0] * h0_t_ref[...] + coef_t_ref[i, 1] * z_t
               + coef_t_ref[i, 2] * cross_t)
        h_q = (coef_q_ref[i, 0] * h0_q_ref[...] + coef_q_ref[i, 1] * z_q
               + coef_q_ref[i, 2] * cross_q)

    # final attention from the mixed embeddings
    write_att(num_layers, masked_softmax(h_t, h_q))

    for cp in pending:                       # all DMAs must complete before exit
        if cp is not None:
            cp.wait()


def _round_up(x, m):
    return ((x + m - 1) // m) * m


def build_norm_adj(edge_index, n):
    """Dense row-normalized adjacency from a PyG-style edge_index [2, E].

    Message flow src->dst; row i divided by in-degree (mean aggregation);
    rows with no incoming edges stay all-zero, like PyG."""
    src, dst = edge_index[0], edge_index[1]
    a = jnp.zeros((n, n), jnp.float32).at[dst, src].add(1.0)
    deg = jnp.sum(a, axis=1, keepdims=True)
    return a / jnp.maximum(deg, 1.0)


def subcross_gmn_forward(params, target_x, target_adj_norm,
                         query_x, query_adj_norm, mask):
    """Batched forward.  target_x [B,Nt] int, target_adj_norm [B,Nt,Nt],
    query_x [B,Nq] int, query_adj_norm [B,Nq,Nq], mask [B,Nq,Nt] bool.
    Returns [B, num_layers+1, Nq, Nt] attention stacks (one per graph pair)."""
    f32, bf16 = jnp.float32, jnp.bfloat16
    h_dim = params["embed"].shape[1]
    num_layers = params["wl"].shape[0]
    n_maps = num_layers + 1
    batch, nq, nt = mask.shape

    # Padding: H and Nt -> multiples of 128 so every large array (h/z/agg/cross/att)
    # is lane-dense and the MXU output columns are full; Nq -> multiple of 8 (it is
    # the sublane dim everywhere; the only array with last dim Nq is the tiny a_q).
    # Every *real* query row is assumed to have at least one unmasked target.
    hp = _round_up(h_dim, 128)
    nt_pad = _round_up(nt, 128)
    nq_pad = _round_up(nq, 8)

    # nn.Embedding lookup (gather) — glue, stays in plain JAX.
    emb_t = jnp.take(params["embed"], target_x, axis=0)          # [B, Nt, H]
    emb_q = jnp.take(params["embed"], query_x, axis=0)           # [B, Nq, H]
    h0_t = jnp.zeros((batch, nt_pad, hp), f32).at[:, :nt, :h_dim].set(emb_t)
    h0_q = jnp.zeros((batch, nq_pad, hp), f32).at[:, :nq, :h_dim].set(emb_q)

    # Separate per-graph row-normalized adjacencies, bf16 MXU operands (pad = 0).
    a_t = jnp.zeros((batch, nt_pad, nt_pad), bf16).at[:, :nt, :nt].set(
        target_adj_norm.astype(bf16))
    a_q = jnp.zeros((batch, nq_pad, nq_pad), bf16).at[:, :nq, :nq].set(
        query_adj_norm.astype(bf16))

    # Pre-transposed SAGE weights padded to [Hp, Hp] (zero pad rows/cols keep the
    # pad lanes of z exactly zero):  z = agg @ Wl^T + h @ Wr^T + b.
    def pad_w(w):                                                # [L,H,H] (out,in)
        wt = jnp.transpose(w, (0, 2, 1)).astype(bf16)
        return jnp.zeros((num_layers, hp, hp), bf16).at[:, :h_dim, :h_dim].set(wt)

    wl_t = pad_w(params["wl"])
    wr_t = pad_w(params["wr"])
    bias = jnp.zeros((num_layers, 1, hp), f32).at[:, :, :h_dim].set(
        params["b"].astype(f32))

    fmask = jnp.zeros((batch, nq_pad, nt_pad), f32).at[:, :nq, :nt].set(
        mask.astype(f32))
    qvalid = jnp.zeros((batch, nq_pad, 1), f32).at[:, :nq].set(1.0)

    coef_t = params["coef_t"].astype(f32)                        # [L, 3] -> SMEM
    coef_q = params["coef_q"].astype(f32)

    kernel = functools.partial(_subcross_gmn_kernel, num_layers, h_dim)

    # VMEM budget: double-buffered per-pair inputs + shared weights + att scratch
    # + working-set allowance; clamp to [32 MiB, 64 MiB] (v7x physical cap).
    per_pair = (4 * (nt_pad * hp + nq_pad * hp + nq_pad * nt_pad + nq_pad)
                + 2 * (nt_pad * nt_pad + nq_pad * nq_pad))
    shared = 2 * 2 * num_layers * hp * hp + 4 * num_layers * hp
    scratch = 2 * nq_pad * nt_pad * 4
    work = 4 * (10 * (nt_pad + nq_pad) * hp + 6 * nq_pad * nt_pad)
    vmem_limit = int(min(max(2 * per_pair + 2 * shared + scratch + work, 32 << 20),
                         64 << 20))

    # Advisory cost estimate so XLA schedules the surrounding gathers/pads.
    mm_flops_pair = num_layers * 2 * (
        nt_pad * nt_pad * hp + nq_pad * nq_pad * hp        # aggregation
        + 2 * (nt_pad + nq_pad) * hp * hp                  # SAGE weight matmuls
        + 3 * nq_pad * nt_pad * hp)                        # att scores + 2 cross
    mm_flops_pair += 2 * nq_pad * nt_pad * hp              # final attention scores
    transc_pair = (num_layers * ((nt_pad + nq_pad) * hp + nq_pad * nt_pad)
                   + nq_pad * nt_pad + n_maps * nq_pad)
    bytes_accessed = int(h0_t.nbytes + h0_q.nbytes + a_t.nbytes + a_q.nbytes
                         + wl_t.nbytes + wr_t.nbytes + bias.nbytes
                         + fmask.nbytes + qvalid.nbytes
                         + batch * n_maps * nq_pad * nt_pad * 4)
    cost = pl.CostEstimate(flops=int(batch * mm_flops_pair),
                           transcendentals=int(batch * transc_pair),
                           bytes_accessed=bytes_accessed)

    att_stack = pl.pallas_call(
        kernel,
        out_shape=jax.ShapeDtypeStruct((batch * n_maps, nq_pad, nt_pad), f32),
        grid=(batch,),
        in_specs=[
            pl.BlockSpec((None, nt_pad, hp), lambda b: (b, 0, 0)),       # h0_t
            pl.BlockSpec((None, nq_pad, hp), lambda b: (b, 0, 0)),       # h0_q
            pl.BlockSpec((None, nt_pad, nt_pad), lambda b: (b, 0, 0)),   # a_t
            pl.BlockSpec((None, nq_pad, nq_pad), lambda b: (b, 0, 0)),   # a_q
            pl.BlockSpec((num_layers, hp, hp), lambda b: (0, 0, 0)),     # wl^T (shared)
            pl.BlockSpec((num_layers, hp, hp), lambda b: (0, 0, 0)),     # wr^T (shared)
            pl.BlockSpec((num_layers, 1, hp), lambda b: (0, 0, 0)),      # bias (shared)
            pl.BlockSpec(memory_space=pltpu.MemorySpace.SMEM),           # coef_t
            pl.BlockSpec(memory_space=pltpu.MemorySpace.SMEM),           # coef_q
            pl.BlockSpec((None, nq_pad, nt_pad), lambda b: (b, 0, 0)),   # fmask
            pl.BlockSpec((None, nq_pad, 1), lambda b: (b, 0, 0)),        # qvalid
        ],
        # Attention stack lives in HBM; the kernel streams each map out with a
        # double-buffered async copy instead of keeping (L+1) maps VMEM-resident.
        out_specs=pl.BlockSpec(memory_space=pl.ANY),
        scratch_shapes=[
            pltpu.VMEM((2, nq_pad, nt_pad), f32),
            pltpu.SemaphoreType.DMA((2,)),
        ],
        compiler_params=pltpu.CompilerParams(
            dimension_semantics=("parallel",),        # graph pairs are independent
            vmem_limit_bytes=vmem_limit),
        cost_estimate=cost,
    )(h0_t, h0_q, a_t, a_q, wl_t, wr_t, bias, coef_t, coef_q, fmask, qvalid)

    # torch.stack(att_list) per pair -> [B, num_layers + 1, Nq, Nt]; strip padding.
    att_stack = att_stack.reshape(batch, n_maps, nq_pad, nt_pad)
    return att_stack[:, :, :nq, :nt]


def subcross_gmn_reference(params, target_x, a_t, query_x, a_q, mask):
    """Pure-JAX reference mirroring the PyTorch forward (HIGHEST precision matmuls)."""
    hp = jax.lax.Precision.HIGHEST
    h_dim = params["embed"].shape[1]
    num_layers = params["wl"].shape[0]
    fmask = mask.astype(jnp.float32)

    def elu(x):
        return jnp.where(x > 0.0, x, jnp.exp(x) - 1.0)

    def sage(h, a, wl, wr, b):
        agg = jnp.matmul(a, h, precision=hp)
        return elu(jnp.matmul(agg, wl.T, precision=hp)
                   + jnp.matmul(h, wr.T, precision=hp) + b)

    def get_att(embed_t, embed_q):
        att = jnp.matmul(embed_q, embed_t.T, precision=hp)
        att = att * fmask
        att = att / (float(h_dim) ** 0.5)
        att = att + (-1e9) * (1.0 - fmask)
        att = att - jnp.max(att, axis=-1, keepdims=True)
        e = jnp.exp(att)
        return e / jnp.sum(e, axis=-1, keepdims=True)

    h_t = h_t0 = jnp.take(params["embed"], target_x, axis=0)
    h_q = h_q0 = jnp.take(params["embed"], query_x, axis=0)
    atts = []
    for i in range(num_layers):
        h_t = sage(h_t, a_t, params["wl"][i], params["wr"][i], params["b"][i])
        h_q = sage(h_q, a_q, params["wl"][i], params["wr"][i], params["b"][i])
        att = get_att(h_t, h_q)
        atts.append(att)
        cross_t = jnp.matmul(att.T, h_q, precision=hp)
        cross_q = jnp.matmul(att, h_t, precision=hp)
        ct, cq = params["coef_t"][i], params["coef_q"][i]
        h_q = cq[0] * h_q0 + cq[1] * h_q + cq[2] * cross_q
        h_t = ct[0] * h_t0 + ct[1] * h_t + ct[2] * cross_t
    atts.append(get_att(h_t, h_q))
    return jnp.stack(atts)


def init_params(key, num_features, h_dim, num_layers):
    ks = jax.random.split(key, 4)
    return {
        # nn.Embedding(num_features + 1, h_dim)
        "embed": jax.random.normal(ks[0], (num_features + 1, h_dim), jnp.float32),
        # SAGEConv lin_l / lin_r weights (out, in) and lin_l bias, stacked over layers
        "wl": 0.1 * jax.random.normal(ks[1], (num_layers, h_dim, h_dim), jnp.float32),
        "wr": 0.1 * jax.random.normal(ks[2], (num_layers, h_dim, h_dim), jnp.float32),
        "b": 0.1 * jax.random.normal(ks[3], (num_layers, 1, h_dim), jnp.float32),
        # coef_t / coef_q initialized to 1/3 (nn.init.constant_)
        "coef_t": jnp.full((num_layers, 3), 1.0 / 3.0, jnp.float32),
        "coef_q": jnp.full((num_layers, 3), 1.0 / 3.0, jnp.float32),
    }


if __name__ == "__main__":
    num_features, h_dim, num_layers = 4, 32, 3
    nt, nq, batch = 16, 8, 2

    key = jax.random.PRNGKey(0)
    k_params, k_tx, k_qx, k_mask = jax.random.split(key, 4)
    params = init_params(k_params, num_features, h_dim, num_layers)

    # Node feature indices (inputs to nn.Embedding), values in [0, num_features].
    target_x = jax.random.randint(k_tx, (batch, nt), 0, num_features + 1)
    query_x = jax.random.randint(k_qx, (batch, nq), 0, num_features + 1)

    # Bidirectional ring graphs as edge_index [2, E] (same topology per pair).
    t_idx = jnp.arange(nt)
    target_edge_index = jnp.stack([
        jnp.concatenate([t_idx, (t_idx + 1) % nt]),
        jnp.concatenate([(t_idx + 1) % nt, t_idx]),
    ])
    q_idx = jnp.arange(nq)
    query_edge_index = jnp.stack([
        jnp.concatenate([q_idx, (q_idx + 1) % nq]),
        jnp.concatenate([(q_idx + 1) % nq, q_idx]),
    ])
    a_t = jnp.broadcast_to(build_norm_adj(target_edge_index, nt), (batch, nt, nt))
    a_q = jnp.broadcast_to(build_norm_adj(query_edge_index, nq), (batch, nq, nq))

    # Boolean masks [B, Nq, Nt]; guarantee at least one valid target per query row.
    mask = jax.random.bernoulli(k_mask, 0.7, (batch, nq, nt))
    mask = mask.at[:, :, 0].set(True)

    fwd = jax.jit(subcross_gmn_forward)
    out = jax.block_until_ready(fwd(params, target_x, a_t, query_x, a_q, mask))

    assert out.shape == (batch, num_layers + 1, nq, nt), out.shape
    assert out.dtype == jnp.float32

    max_err = 0.0
    for b in range(batch):
        ref = subcross_gmn_reference(params, target_x[b], a_t[b],
                                     query_x[b], a_q[b], mask[b])
        max_err = max(max_err, float(jnp.max(jnp.abs(out[b] - ref))))
    assert max_err < 3e-2, f"max abs error vs reference too large: {max_err}"
    # rows of every softmax must sum to ~1 (Newton-refined reciprocal -> tight)
    assert bool(jnp.allclose(jnp.sum(out, axis=-1), 1.0, atol=1e-3))
    print("KERNEL_OK")
</pallas_src>

<mosaic_0001>
module attributes {stable_mosaic.version = 11 : i64} {
  func.func @_subcross_gmn_kernel(%arg0: i32, %arg1: memref<1x128x128xf32, #tpu.memory_space<vmem>>, %arg2: memref<1x8x128xf32, #tpu.memory_space<vmem>>, %arg3: memref<1x128x128xbf16, #tpu.memory_space<vmem>>, %arg4: memref<1x8x8xbf16, #tpu.memory_space<vmem>>, %arg5: memref<3x128x128xbf16, #tpu.memory_space<vmem>>, %arg6: memref<3x128x128xbf16, #tpu.memory_space<vmem>>, %arg7: memref<3x1x128xf32, #tpu.memory_space<vmem>>, %arg8: memref<3x3xf32, #tpu.memory_space<smem>>, %arg9: memref<3x3xf32, #tpu.memory_space<smem>>, %arg10: memref<1x8x128xf32, #tpu.memory_space<vmem>>, %arg11: memref<1x8x1xf32, #tpu.memory_space<vmem>>, %arg12: memref<8x8x128xf32, #tpu.memory_space<any>>, %arg13: memref<2x8x128xf32, #tpu.memory_space<vmem>>, %arg14: memref<2x!tpu.dma_semaphore, #tpu.memory_space<semaphore_mem>>) attributes {dimension_semantics = [#tpu.dimension_semantics<parallel>], iteration_bounds = array<i64: 2>, scalar_prefetch = 0 : i64, scratch_operands = 2 : i64, tpu.core_type = #tpu.core_type<tc>, window_params = [{transform_indices = @transform_0, window_bounds = array<i64: 1, 128, 128>}, {transform_indices = @transform_1, window_bounds = array<i64: 1, 8, 128>}, {transform_indices = @transform_2, window_bounds = array<i64: 1, 128, 128>}, {transform_indices = @transform_3, window_bounds = array<i64: 1, 8, 8>}, {pipeline_mode = #tpu.pipeline_mode<synchronous>, transform_indices = @transform_4, window_bounds = array<i64: 3, 128, 128>}, {pipeline_mode = #tpu.pipeline_mode<synchronous>, transform_indices = @transform_5, window_bounds = array<i64: 3, 128, 128>}, {pipeline_mode = #tpu.pipeline_mode<synchronous>, transform_indices = @transform_6, window_bounds = array<i64: 3, 1, 128>}, {transform_indices = @transform_7, window_bounds = array<i64: 3, 3>}, {transform_indices = @transform_8, window_bounds = array<i64: 3, 3>}, {transform_indices = @transform_9, window_bounds = array<i64: 1, 8, 128>}, {transform_indices = @transform_10, window_bounds = array<i64: 1, 8, 1>}, {}]} {
    %c0 = arith.constant 0 : index
    %c0_0 = arith.constant 0 : index
    %c0_1 = arith.constant 0 : index
    %0 = vector.load %arg10[%c0, %c0_0, %c0_1] : memref<1x8x128xf32, #tpu.memory_space<vmem>>, vector<1x8x128xf32>
    %1 = vector.shape_cast %0 : vector<1x8x128xf32> to vector<8x128xf32>
    %cst = arith.constant 0.000000e+00 : f32
    %2 = vector.broadcast %cst : f32 to vector<8x128xf32>
    %3 = arith.cmpf ogt, %1, %2 : vector<8x128xf32>
    %c0_2 = arith.constant 0 : index
    %c0_3 = arith.constant 0 : index
    %c0_4 = arith.constant 0 : index
    %4 = vector.load %arg11[%c0_2, %c0_3, %c0_4] : memref<1x8x1xf32, #tpu.memory_space<vmem>>, vector<1x8x1xf32>
    %5 = vector.shape_cast %4 : vector<1x8x1xf32> to vector<8x1xf32>
    %c0_5 = arith.constant 0 : index
    %c0_6 = arith.constant 0 : index
    %c0_7 = arith.constant 0 : index
    %6 = vector.load %arg1[%c0_5, %c0_6, %c0_7] : memref<1x128x128xf32, #tpu.memory_space<vmem>>, vector<1x128x128xf32>
    %7 = vector.shape_cast %6 : vector<1x128x128xf32> to vector<128x128xf32>
    %c0_8 = arith.constant 0 : index
    %c0_9 = arith.constant 0 : index
    %c0_10 = arith.constant 0 : index
    %8 = vector.load %arg2[%c0_8, %c0_9, %c0_10] : memref<1x8x128xf32, #tpu.memory_space<vmem>>, vector<1x8x128xf32>
    %9 = vector.shape_cast %8 : vector<1x8x128xf32> to vector<8x128xf32>
    %c0_11 = arith.constant 0 : index
    %c0_12 = arith.constant 0 : index
    %c0_13 = arith.constant 0 : index
    %10 = vector.load %arg5[%c0_11, %c0_12, %c0_13] : memref<3x128x128xbf16, #tpu.memory_space<vmem>>, vector<1x128x128xbf16>
    %11 = vector.shape_cast %10 : vector<1x128x128xbf16> to vector<128x128xbf16>
    %c0_14 = arith.constant 0 : index
    %c0_15 = arith.constant 0 : index
    %c0_16 = arith.constant 0 : index
    %12 = vector.load %arg6[%c0_14, %c0_15, %c0_16] : memref<3x128x128xbf16, #tpu.memory_space<vmem>>, vector<1x128x128xbf16>
    %13 = vector.shape_cast %12 : vector<1x128x128xbf16> to vector<128x128xbf16>
    %c0_17 = arith.constant 0 : index
    %c0_18 = arith.constant 0 : index
    %c0_19 = arith.constant 0 : index
    %14 = vector.load %arg7[%c0_17, %c0_18, %c0_19] : memref<3x1x128xf32, #tpu.memory_space<vmem>>, vector<1x1x128xf32>
    %15 = vector.shape_cast %14 : vector<1x1x128xf32> to vector<1x128xf32>
    %16 = arith.truncf %7 : vector<128x128xf32> to vector<128x128xbf16>
    %17 = arith.truncf %9 : vector<8x128xf32> to vector<8x128xbf16>
    %c0_20 = arith.constant 0 : index
    %c0_21 = arith.constant 0 : index
    %c0_22 = arith.constant 0 : index
    %18 = vector.load %arg3[%c0_20, %c0_21, %c0_22] : memref<1x128x128xbf16, #tpu.memory_space<vmem>>, vector<1x128x128xbf16>
    %19 = vector.shape_cast %18 : vector<1x128x128xbf16> to vector<128x128xbf16>
    %cst_23 = arith.constant dense<0.000000e+00> : vector<128x128xf32>
    %20 = tpu.matmul %19, %16, %cst_23 {dimension_numbers = #tpu.dot_dimension_numbers<[1], [0], [0], [1], [0, 0, 1, 1], [], []>} : vector<128x128xbf16>, vector<128x128xbf16>, vector<128x128xf32> -> vector<128x128xf32>
    %c0_24 = arith.constant 0 : index
    %c0_25 = arith.constant 0 : index
    %c0_26 = arith.constant 0 : index
    %21 = vector.load %arg4[%c0_24, %c0_25, %c0_26] : memref<1x8x8xbf16, #tpu.memory_space<vmem>>, vector<1x8x8xbf16>
    %22 = vector.shape_cast %21 : vector<1x8x8xbf16> to vector<8x8xbf16>
    %cst_27 = arith.constant dense<0.000000e+00> : vector<8x128xf32>
    %23 = tpu.matmul %22, %17, %cst_27 {dimension_numbers = #tpu.dot_dimension_numbers<[1], [0], [0], [1], [0, 0, 1, 1], [], []>} : vector<8x8xbf16>, vector<8x128xbf16>, vector<8x128xf32> -> vector<8x128xf32>
    %24 = arith.truncf %20 : vector<128x128xf32> to vector<128x128xbf16>
    %cst_28 = arith.constant dense<0.000000e+00> : vector<128x128xf32>
    %25 = tpu.matmul %24, %11, %cst_28 {dimension_numbers = #tpu.dot_dimension_numbers<[1], [0], [0], [1], [0, 0, 1, 1], [], []>} : vector<128x128xbf16>, vector<128x128xbf16>, vector<128x128xf32> -> vector<128x128xf32>
    %cst_29 = arith.constant dense<0.000000e+00> : vector<128x128xf32>
    %26 = tpu.matmul %16, %13, %cst_29 {dimension_numbers = #tpu.dot_dimension_numbers<[1], [0], [0], [1], [0, 0, 1, 1], [], []>} : vector<128x128xbf16>, vector<128x128xbf16>, vector<128x128xf32> -> vector<128x128xf32>
    %27 = arith.addf %25, %26 : vector<128x128xf32>
    %28 = vector.broadcast %15 : vector<1x128xf32> to vector<128x128xf32>
    %29 = arith.addf %27, %28 : vector<128x128xf32>
    %cst_30 = arith.constant 0.000000e+00 : f32
    %30 = vector.broadcast %cst_30 : f32 to vector<128x128xf32>
    %31 = arith.cmpf ogt, %29, %30 : vector<128x128xf32>
    %32 = math.exp %29 : vector<128x128xf32>
    %cst_31 = arith.constant 1.000000e+00 : f32
    %33 = vector.broadcast %cst_31 : f32 to vector<128x128xf32>
    %34 = arith.subf %32, %33 : vector<128x128xf32>
    %35 = arith.select %31, %29, %34 : vector<128x128xi1>, vector<128x128xf32>
    %36 = arith.truncf %23 : vector<8x128xf32> to vector<8x128xbf16>
    %cst_32 = arith.constant dense<0.000000e+00> : vector<8x128xf32>
    %37 = tpu.matmul %36, %11, %cst_32 {dimension_numbers = #tpu.dot_dimension_numbers<[1], [0], [0], [1], [0, 0, 1, 1], [], []>} : vector<8x128xbf16>, vector<128x128xbf16>, vector<8x128xf32> -> vector<8x128xf32>
    %cst_33 = arith.constant dense<0.000000e+00> : vector<8x128xf32>
    %38 = tpu.matmul %17, %13, %cst_33 {dimension_numbers = #tpu.dot_dimension_numbers<[1], [0], [0], [1], [0, 0, 1, 1], [], []>} : vector<8x128xbf16>, vector<128x128xbf16>, vector<8x128xf32> -> vector<8x128xf32>
    %39 = arith.addf %37, %38 : vector<8x128xf32>
    %40 = vector.broadcast %15 : vector<1x128xf32> to vector<8x128xf32>
    %41 = arith.addf %39, %40 : vector<8x128xf32>
    %cst_34 = arith.constant 0.000000e+00 : f32
    %42 = vector.broadcast %cst_34 : f32 to vector<8x128xf32>
    %43 = arith.cmpf ogt, %41, %42 : vector<8x128xf32>
    %44 = math.exp %41 : vector<8x128xf32>
    %cst_35 = arith.constant 1.000000e+00 : f32
    %45 = vector.broadcast %cst_35 : f32 to vector<8x128xf32>
    %46 = arith.subf %44, %45 : vector<8x128xf32>
    %47 = arith.select %43, %41, %46 : vector<8x128xi1>, vector<8x128xf32>
    %cst_36 = arith.constant 0.176776692 : f32
    %48 = vector.broadcast %cst_36 : f32 to vector<8x128xf32>
    %49 = arith.mulf %47, %48 : vector<8x128xf32>
    %50 = arith.truncf %49 : vector<8x128xf32> to vector<8x128xbf16>
    %51 = arith.truncf %35 : vector<128x128xf32> to vector<128x128xbf16>
    %cst_37 = arith.constant dense<0.000000e+00> : vector<8x128xf32>
    %52 = tpu.matmul %50, %51, %cst_37 {dimension_numbers = #tpu.dot_dimension_numbers<[1], [1], [0], [0], [0, 0, 1, 0], [], []>} : vector<8x128xbf16>, vector<128x128xbf16>, vector<8x128xf32> -> vector<8x128xf32>
    %cst_38 = arith.constant -1.000000e+09 : f32
    %53 = vector.broadcast %cst_38 : f32 to vector<8x128xf32>
    %54 = arith.select %3, %52, %53 : vector<8x128xi1>, vector<8x128xf32>
    %cst_39 = arith.constant dense<0xFF800000> : vector<8xf32>
    %55 = vector.multi_reduction <maximumf>, %54, %cst_39 [1] : vector<8x128xf32> to vector<8xf32>
    %56 = vector.shape_cast %55 : vector<8xf32> to vector<8x1xf32>
    %57 = vector.broadcast %56 : vector<8x1xf32> to vector<8x128xf32>
    %58 = arith.subf %54, %57 : vector<8x128xf32>
    %59 = math.exp %58 : vector<8x128xf32>
    %cst_40 = arith.constant dense<0.000000e+00> : vector<8xf32>
    %60 = vector.multi_reduction <add>, %59, %cst_40 [1] : vector<8x128xf32> to vector<8xf32>
    %61 = vector.shape_cast %60 : vector<8xf32> to vector<8x1xf32>
    %62 = tpu.reciprocal %61 {approx = true} : vector<8x1xf32> -> vector<8x1xf32>
    %63 = arith.mulf %61, %62 : vector<8x1xf32>
    %cst_41 = arith.constant 2.000000e+00 : f32
    %64 = vector.broadcast %cst_41 : f32 to vector<8x1xf32>
    %65 = arith.subf %64, %63 : vector<8x1xf32>
    %66 = arith.mulf %62, %65 : vector<8x1xf32>
    %67 = arith.mulf %66, %5 : vector<8x1xf32>
    %68 = vector.broadcast %67 : vector<8x1xf32> to vector<8x128xf32>
    %69 = arith.mulf %59, %68 : vector<8x128xf32>
    %c0_42 = arith.constant 0 : index
    %c0_43 = arith.constant 0 : index
    %c0_44 = arith.constant 0 : index
    %70 = vector.load %arg13[%c0_42, %c0_43, %c0_44] : memref<2x8x128xf32, #tpu.memory_space<vmem>>, vector<1x8x128xf32>
    %71 = vector.shape_cast %70 : vector<1x8x128xf32> to vector<8x128xf32>
    %72 = vector.shape_cast %69 : vector<8x128xf32> to vector<1x8x128xf32>
    tpu.vector_store %arg13[%c0_42, %c0_43, %c0_44], %72 {strides = array<i32>} : memref<2x8x128xf32, #tpu.memory_space<vmem>>, vector<1x8x128xf32>,
    %c4_i32 = arith.constant 4 : i32
    %73 = arith.muli %arg0, %c4_i32 : i32
    %c0_i32 = arith.constant 0 : i32
    %74 = arith.addi %73, %c0_i32 : i32
    %c0_i32_45 = arith.constant 0 : i32
    %c0_i32_46 = arith.constant 0 : i32
    %c0_i32_47 = arith.constant 0 : i32
    %c0_i32_48 = arith.constant 0 : i32
    %75 = tpu.memref_slice %arg13[%c0_i32_45, %c0_i32_47, %c0_i32_48] : memref<2x8x128xf32, #tpu.memory_space<vmem>> -> memref<1x8x128xf32, #tpu.memory_space<vmem>>
    %76 = tpu.memref_squeeze %75 : memref<1x8x128xf32, #tpu.memory_space<vmem>> -> memref<8x128xf32, #tpu.memory_space<vmem>>
    %c0_i32_49 = arith.constant 0 : i32
    %c0_i32_50 = arith.constant 0 : i32
    %77 = tpu.memref_slice %arg12[%74, %c0_i32_49, %c0_i32_50] : memref<8x8x128xf32, #tpu.memory_space<any>> -> memref<1x8x128xf32, #tpu.memory_space<any>>
    %78 = tpu.memref_squeeze %77 : memref<1x8x128xf32, #tpu.memory_space<any>> -> memref<8x128xf32, #tpu.memory_space<any>>
    %79 = tpu.memref_slice %arg14[%c0_i32_46] : memref<2x!tpu.dma_semaphore, #tpu.memory_space<semaphore_mem>> -> memref<1x!tpu.dma_semaphore, #tpu.memory_space<semaphore_mem>>
    %80 = tpu.memref_squeeze %79 : memref<1x!tpu.dma_semaphore, #tpu.memory_space<semaphore_mem>> -> memref<!tpu.dma_semaphore, #tpu.memory_space<semaphore_mem>>
    tpu.enqueue_dma source(%76 : memref<8x128xf32, #tpu.memory_space<vmem>>) target(%78 : memref<8x128xf32, #tpu.memory_space<any>>) target_semaphore(%80 : memref<!tpu.dma_semaphore, #tpu.memory_space<semaphore_mem>>)
    %81 = arith.truncf %69 : vector<8x128xf32> to vector<8x128xbf16>
    %82 = arith.truncf %35 : vector<128x128xf32> to vector<128x128xbf16>
    %83 = arith.truncf %47 : vector<8x128xf32> to vector<8x128xbf16>
    %cst_51 = arith.constant dense<0.000000e+00> : vector<128x128xf32>
    %84 = tpu.matmul %81, %83, %cst_51 {dimension_numbers = #tpu.dot_dimension_numbers<[0], [0], [1], [1], [0, 1, 1, 1], [], []>} : vector<8x128xbf16>, vector<8x128xbf16>, vector<128x128xf32> -> vector<128x128xf32>
    %cst_52 = arith.constant dense<0.000000e+00> : vector<8x128xf32>
    %85 = tpu.matmul %81, %82, %cst_52 {dimension_numbers = #tpu.dot_dimension_numbers<[1], [0], [0], [1], [0, 0, 1, 1], [], []>} : vector<8x128xbf16>, vector<128x128xbf16>, vector<8x128xf32> -> vector<8x128xf32>
    %c0_53 = arith.constant 0 : index
    %c0_54 = arith.constant 0 : index
    %86 = memref.load %arg8[%c0_53, %c0_54] : memref<3x3xf32, #tpu.memory_space<smem>>
    %c0_55 = arith.constant 0 : index
    %c0_56 = arith.constant 0 : index
    %c0_57 = arith.constant 0 : index
    %87 = vector.load %arg1[%c0_55, %c0_56, %c0_57] : memref<1x128x128xf32, #tpu.memory_space<vmem>>, vector<1x128x128xf32>
    %88 = vector.shape_cast %87 : vector<1x128x128xf32> to vector<128x128xf32>
    %89 = vector.broadcast %86 : f32 to vector<128x128xf32>
    %90 = arith.mulf %89, %88 : vector<128x128xf32>
    %c0_58 = arith.constant 0 : index
    %c1 = arith.constant 1 : index
    %91 = memref.load %arg8[%c0_58, %c1] : memref<3x3xf32, #tpu.memory_space<smem>>
    %92 = vector.broadcast %91 : f32 to vector<128x128xf32>
    %93 = arith.mulf %92, %35 : vector<128x128xf32>
    %94 = arith.addf %90, %93 : vector<128x128xf32>
    %c0_59 = arith.constant 0 : index
    %c2 = arith.constant 2 : index
    %95 = memref.load %arg8[%c0_59, %c2] : memref<3x3xf32, #tpu.memory_space<smem>>
    %96 = vector.broadcast %95 : f32 to vector<128x128xf32>
    %97 = arith.mulf %96, %84 : vector<128x128xf32>
    %98 = arith.addf %94, %97 : vector<128x128xf32>
    %c0_60 = arith.constant 0 : index
    %c0_61 = arith.constant 0 : index
    %99 = memref.load %arg9[%c0_60, %c0_61] : memref<3x3xf32, #tpu.memory_space<smem>>
    %c0_62 = arith.constant 0 : index
    %c0_63 = arith.constant 0 : index
    %c0_64 = arith.constant 0 : index
    %100 = vector.load %arg2[%c0_62, %c0_63, %c0_64] : memref<1x8x128xf32, #tpu.memory_space<vmem>>, vector<1x8x128xf32>
    %101 = vector.shape_cast %100 : vector<1x8x128xf32> to vector<8x128xf32>
    %102 = vector.broadcast %99 : f32 to vector<8x128xf32>
    %103 = arith.mulf %102, %101 : vector<8x128xf32>
    %c0_65 = arith.constant 0 : index
    %c1_66 = arith.constant 1 : index
    %104 = memref.load %arg9[%c0_65, %c1_66] : memref<3x3xf32, #tpu.memory_space<smem>>
    %105 = vector.broadcast %104 : f32 to vector<8x128xf32>
    %106 = arith.mulf %105, %47 : vector<8x128xf32>
    %107 = arith.addf %103, %106 : vector<8x128xf32>
    %c0_67 = arith.constant 0 : index
    %c2_68 = arith.constant 2 : index
    %108 = memref.load %arg9[%c0_67, %c2_68] : memref<3x3xf32, #tpu.memory_space<smem>>
    %109 = vector.broadcast %108 : f32 to vector<8x128xf32>
    %110 = arith.mulf %109, %85 : vector<8x128xf32>
    %111 = arith.addf %107, %110 : vector<8x128xf32>
    %c1_69 = arith.constant 1 : index
    %c0_70 = arith.constant 0 : index
    %c0_71 = arith.constant 0 : index
    %112 = vector.load %arg5[%c1_69, %c0_70, %c0_71] : memref<3x128x128xbf16, #tpu.memory_space<vmem>>, vector<1x128x128xbf16>
    %113 = vector.shape_cast %112 : vector<1x128x128xbf16> to vector<128x128xbf16>
    %c1_72 = arith.constant 1 : index
    %c0_73 = arith.constant 0 : index
    %c0_74 = arith.constant 0 : index
    %114 = vector.load %arg6[%c1_72, %c0_73, %c0_74] : memref<3x128x128xbf16, #tpu.memory_space<vmem>>, vector<1x128x128xbf16>
    %115 = vector.shape_cast %114 : vector<1x128x128xbf16> to vector<128x128xbf16>
    %c1_75 = arith.constant 1 : index
    %c0_76 = arith.constant 0 : index
    %c0_77 = arith.constant 0 : index
    %116 = vector.load %arg7[%c1_75, %c0_76, %c0_77] : memref<3x1x128xf32, #tpu.memory_space<vmem>>, vector<1x1x128xf32>
    %117 = vector.shape_cast %116 : vector<1x1x128xf32> to vector<1x128xf32>
    %118 = arith.truncf %98 : vector<128x128xf32> to vector<128x128xbf16>
    %119 = arith.truncf %111 : vector<8x128xf32> to vector<8x128xbf16>
    %c0_78 = arith.constant 0 : index
    %c0_79 = arith.constant 0 : index
    %c0_80 = arith.constant 0 : index
    %120 = vector.load %arg3[%c0_78, %c0_79, %c0_80] : memref<1x128x128xbf16, #tpu.memory_space<vmem>>, vector<1x128x128xbf16>
    %121 = vector.shape_cast %120 : vector<1x128x128xbf16> to vector<128x128xbf16>
    %cst_81 = arith.constant dense<0.000000e+00> : vector<128x128xf32>
    %122 = tpu.matmul %121, %118, %cst_81 {dimension_numbers = #tpu.dot_dimension_numbers<[1], [0], [0], [1], [0, 0, 1, 1], [], []>} : vector<128x128xbf16>, vector<128x128xbf16>, vector<128x128xf32> -> vector<128x128xf32>
    %c0_82 = arith.constant 0 : index
    %c0_83 = arith.constant 0 : index
    %c0_84 = arith.constant 0 : index
    %123 = vector.load %arg4[%c0_82, %c0_83, %c0_84] : memref<1x8x8xbf16, #tpu.memory_space<vmem>>, vector<1x8x8xbf16>
    %124 = vector.shape_cast %123 : vector<1x8x8xbf16> to vector<8x8xbf16>
    %cst_85 = arith.constant dense<0.000000e+00> : vector<8x128xf32>
    %125 = tpu.matmul %124, %119, %cst_85 {dimension_numbers = #tpu.dot_dimension_numbers<[1], [0], [0], [1], [0, 0, 1, 1], [], []>} : vector<8x8xbf16>, vector<8x128xbf16>, vector<8x128xf32> -> vector<8x128xf32>
    %126 = arith.truncf %122 : vector<128x128xf32> to vector<128x128xbf16>
    %cst_86 = arith.constant dense<0.000000e+00> : vector<128x128xf32>
    %127 = tpu.matmul %126, %113, %cst_86 {dimension_numbers = #tpu.dot_dimension_numbers<[1], [0], [0], [1], [0, 0, 1, 1], [], []>} : vector<128x128xbf16>, vector<128x128xbf16>, vector<128x128xf32> -> vector<128x128xf32>
    %cst_87 = arith.constant dense<0.000000e+00> : vector<128x128xf32>
    %128 = tpu.matmul %118, %115, %cst_87 {dimension_numbers = #tpu.dot_dimension_numbers<[1], [0], [0], [1], [0, 0, 1, 1], [], []>} : vector<128x128xbf16>, vector<128x128xbf16>, vector<128x128xf32> -> vector<128x128xf32>
    %129 = arith.addf %127, %128 : vector<128x128xf32>
    %130 = vector.broadcast %117 : vector<1x128xf32> to vector<128x128xf32>
    %131 = arith.addf %129, %130 : vector<128x128xf32>
    %cst_88 = arith.constant 0.000000e+00 : f32
    %132 = vector.broadcast %cst_88 : f32 to vector<128x128xf32>
    %133 = arith.cmpf ogt, %131, %132 : vector<128x128xf32>
    %134 = math.exp %131 : vector<128x128xf32>
    %cst_89 = arith.constant 1.000000e+00 : f32
    %135 = vector.broadcast %cst_89 : f32 to vector<128x128xf32>
    %136 = arith.subf %134, %135 : vector<128x128xf32>
    %137 = arith.select %133, %131, %136 : vector<128x128xi1>, vector<128x128xf32>
    %138 = arith.truncf %125 : vector<8x128xf32> to vector<8x128xbf16>
    %cst_90 = arith.constant dense<0.000000e+00> : vector<8x128xf32>
    %139 = tpu.matmul %138, %113, %cst_90 {dimension_numbers = #tpu.dot_dimension_numbers<[1], [0], [0], [1], [0, 0, 1, 1], [], []>} : vector<8x128xbf16>, vector<128x128xbf16>, vector<8x128xf32> -> vector<8x128xf32>
    %cst_91 = arith.constant dense<0.000000e+00> : vector<8x128xf32>
    %140 = tpu.matmul %119, %115, %cst_91 {dimension_numbers = #tpu.dot_dimension_numbers<[1], [0], [0], [1], [0, 0, 1, 1], [], []>} : vector<8x128xbf16>, vector<128x128xbf16>, vector<8x128xf32> -> vector<8x128xf32>
    %141 = arith.addf %139, %140 : vector<8x128xf32>
    %142 = vector.broadcast %117 : vector<1x128xf32> to vector<8x128xf32>
    %143 = arith.addf %141, %142 : vector<8x128xf32>
    %cst_92 = arith.constant 0.000000e+00 : f32
    %144 = vector.broadcast %cst_92 : f32 to vector<8x128xf32>
    %145 = arith.cmpf ogt, %143, %144 : vector<8x128xf32>
    %146 = math.exp %143 : vector<8x128xf32>
    %cst_93 = arith.constant 1.000000e+00 : f32
    %147 = vector.broadcast %cst_93 : f32 to vector<8x128xf32>
    %148 = arith.subf %146, %147 : vector<8x128xf32>
    %149 = arith.select %145, %143, %148 : vector<8x128xi1>, vector<8x128xf32>
    %cst_94 = arith.constant 0.176776692 : f32
    %150 = vector.broadcast %cst_94 : f32 to vector<8x128xf32>
    %151 = arith.mulf %149, %150 : vector<8x128xf32>
    %152 = arith.truncf %151 : vector<8x128xf32> to vector<8x128xbf16>
    %153 = arith.truncf %137 : vector<128x128xf32> to vector<128x128xbf16>
    %cst_95 = arith.constant dense<0.000000e+00> : vector<8x128xf32>
    %154 = tpu.matmul %152, %153, %cst_95 {dimension_numbers = #tpu.dot_dimension_numbers<[1], [1], [0], [0], [0, 0, 1, 0], [], []>} : vector<8x128xbf16>, vector<128x128xbf16>, vector<8x128xf32> -> vector<8x128xf32>
    %cst_96 = arith.constant -1.000000e+09 : f32
    %155 = vector.broadcast %cst_96 : f32 to vector<8x128xf32>
    %156 = arith.select %3, %154, %155 : vector<8x128xi1>, vector<8x128xf32>
    %cst_97 = arith.constant dense<0xFF800000> : vector<8xf32>
    %157 = vector.multi_reduction <maximumf>, %156, %cst_97 [1] : vector<8x128xf32> to vector<8xf32>
    %158 = vector.shape_cast %157 : vector<8xf32> to vector<8x1xf32>
    %159 = vector.broadcast %158 : vector<8x1xf32> to vector<8x128xf32>
    %160 = arith.subf %156, %159 : vector<8x128xf32>
    %161 = math.exp %160 : vector<8x128xf32>
    %cst_98 = arith.constant dense<0.000000e+00> : vector<8xf32>
    %162 = vector.multi_reduction <add>, %161, %cst_98 [1] : vector<8x128xf32> to vector<8xf32>
    %163 = vector.shape_cast %162 : vector<8xf32> to vector<8x1xf32>
    %164 = tpu.reciprocal %163 {approx = true} : vector<8x1xf32> -> vector<8x1xf32>
    %165 = arith.mulf %163, %164 : vector<8x1xf32>
    %cst_99 = arith.constant 2.000000e+00 : f32
    %166 = vector.broadcast %cst_99 : f32 to vector<8x1xf32>
    %167 = arith.subf %166, %165 : vector<8x1xf32>
    %168 = arith.mulf %164, %167 : vector<8x1xf32>
    %169 = arith.mulf %168, %5 : vector<8x1xf32>
    %170 = vector.broadcast %169 : vector<8x1xf32> to vector<8x128xf32>
    %171 = arith.mulf %161, %170 : vector<8x128xf32>
    %c1_100 = arith.constant 1 : index
    %c0_101 = arith.constant 0 : index
    %c0_102 = arith.constant 0 : index
    %172 = vector.load %arg13[%c1_100, %c0_101, %c0_102] : memref<2x8x128xf32, #tpu.memory_space<vmem>>, vector<1x8x128xf32>
    %173 = vector.shape_cast %172 : vector<1x8x128xf32> to vector<8x128xf32>
    %174 = vector.shape_cast %171 : vector<8x128xf32> to vector<1x8x128xf32>
    tpu.vector_store %arg13[%c1_100, %c0_101, %c0_102], %174 {strides = array<i32>} : memref<2x8x128xf32, #tpu.memory_space<vmem>>, vector<1x8x128xf32>,
    %c4_i32_103 = arith.constant 4 : i32
    %175 = arith.muli %arg0, %c4_i32_103 : i32
    %c1_i32 = arith.constant 1 : i32
    %176 = arith.addi %175, %c1_i32 : i32
    %c1_i32_104 = arith.constant 1 : i32
    %c1_i32_105 = arith.constant 1 : i32
    %c0_i32_106 = arith.constant 0 : i32
    %c0_i32_107 = arith.constant 0 : i32
    %177 = tpu.memref_slice %arg13[%c1_i32_104, %c0_i32_106, %c0_i32_107] : memref<2x8x128xf32, #tpu.memory_space<vmem>> -> memref<1x8x128xf32, #tpu.memory_space<vmem>>
    %178 = tpu.memref_squeeze %177 : memref<1x8x128xf32, #tpu.memory_space<vmem>> -> memref<8x128xf32, #tpu.memory_space<vmem>>
    %c0_i32_108 = arith.constant 0 : i32
    %c0_i32_109 = arith.constant 0 : i32
    %179 = tpu.memref_slice %arg12[%176, %c0_i32_108, %c0_i32_109] : memref<8x8x128xf32, #tpu.memory_space<any>> -> memref<1x8x128xf32, #tpu.memory_space<any>>
    %180 = tpu.memref_squeeze %179 : memref<1x8x128xf32, #tpu.memory_space<any>> -> memref<8x128xf32, #tpu.memory_space<any>>
    %181 = tpu.memref_slice %arg14[%c1_i32_105] : memref<2x!tpu.dma_semaphore, #tpu.memory_space<semaphore_mem>> -> memref<1x!tpu.dma_semaphore, #tpu.memory_space<semaphore_mem>>
    %182 = tpu.memref_squeeze %181 : memref<1x!tpu.dma_semaphore, #tpu.memory_space<semaphore_mem>> -> memref<!tpu.dma_semaphore, #tpu.memory_space<semaphore_mem>>
    tpu.enqueue_dma source(%178 : memref<8x128xf32, #tpu.memory_space<vmem>>) target(%180 : memref<8x128xf32, #tpu.memory_space<any>>) target_semaphore(%182 : memref<!tpu.dma_semaphore, #tpu.memory_space<semaphore_mem>>)
    %183 = arith.truncf %171 : vector<8x128xf32> to vector<8x128xbf16>
    %184 = arith.truncf %137 : vector<128x128xf32> to vector<128x128xbf16>
    %185 = arith.truncf %149 : vector<8x128xf32> to vector<8x128xbf16>
    %cst_110 = arith.constant dense<0.000000e+00> : vector<128x128xf32>
    %186 = tpu.matmul %183, %185, %cst_110 {dimension_numbers = #tpu.dot_dimension_numbers<[0], [0], [1], [1], [0, 1, 1, 1], [], []>} : vector<8x128xbf16>, vector<8x128xbf16>, vector<128x128xf32> -> vector<128x128xf32>
    %cst_111 = arith.constant dense<0.000000e+00> : vector<8x128xf32>
    %187 = tpu.matmul %183, %184, %cst_111 {dimension_numbers = #tpu.dot_dimension_numbers<[1], [0], [0], [1], [0, 0, 1, 1], [], []>} : vector<8x128xbf16>, vector<128x128xbf16>, vector<8x128xf32> -> vector<8x128xf32>
    %c1_112 = arith.constant 1 : index
    %c0_113 = arith.constant 0 : index
    %188 = memref.load %arg8[%c1_112, %c0_113] : memref<3x3xf32, #tpu.memory_space<smem>>
    %c0_114 = arith.constant 0 : index
    %c0_115 = arith.constant 0 : index
    %c0_116 = arith.constant 0 : index
    %189 = vector.load %arg1[%c0_114, %c0_115, %c0_116] : memref<1x128x128xf32, #tpu.memory_space<vmem>>, vector<1x128x128xf32>
    %190 = vector.shape_cast %189 : vector<1x128x128xf32> to vector<128x128xf32>
    %191 = vector.broadcast %188 : f32 to vector<128x128xf32>
    %192 = arith.mulf %191, %190 : vector<128x128xf32>
    %c1_117 = arith.constant 1 : index
    %c1_118 = arith.constant 1 : index
    %193 = memref.load %arg8[%c1_117, %c1_118] : memref<3x3xf32, #tpu.memory_space<smem>>
    %194 = vector.broadcast %193 : f32 to vector<128x128xf32>
    %195 = arith.mulf %194, %137 : vector<128x128xf32>
    %196 = arith.addf %192, %195 : vector<128x128xf32>
    %c1_119 = arith.constant 1 : index
    %c2_120 = arith.constant 2 : index
    %197 = memref.load %arg8[%c1_119, %c2_120] : memref<3x3xf32, #tpu.memory_space<smem>>
    %198 = vector.broadcast %197 : f32 to vector<128x128xf32>
    %199 = arith.mulf %198, %186 : vector<128x128xf32>
    %200 = arith.addf %196, %199 : vector<128x128xf32>
    %c1_121 = arith.constant 1 : index
    %c0_122 = arith.constant 0 : index
    %201 = memref.load %arg9[%c1_121, %c0_122] : memref<3x3xf32, #tpu.memory_space<smem>>
    %c0_123 = arith.constant 0 : index
    %c0_124 = arith.constant 0 : index
    %c0_125 = arith.constant 0 : index
    %202 = vector.load %arg2[%c0_123, %c0_124, %c0_125] : memref<1x8x128xf32, #tpu.memory_space<vmem>>, vector<1x8x128xf32>
    %203 = vector.shape_cast %202 : vector<1x8x128xf32> to vector<8x128xf32>
    %204 = vector.broadcast %201 : f32 to vector<8x128xf32>
    %205 = arith.mulf %204, %203 : vector<8x128xf32>
    %c1_126 = arith.constant 1 : index
    %c1_127 = arith.constant 1 : index
    %206 = memref.load %arg9[%c1_126, %c1_127] : memref<3x3xf32, #tpu.memory_space<smem>>
    %207 = vector.broadcast %206 : f32 to vector<8x128xf32>
    %208 = arith.mulf %207, %149 : vector<8x128xf32>
    %209 = arith.addf %205, %208 : vector<8x128xf32>
    %c1_128 = arith.constant 1 : index
    %c2_129 = arith.constant 2 : index
    %210 = memref.load %arg9[%c1_128, %c2_129] : memref<3x3xf32, #tpu.memory_space<smem>>
    %211 = vector.broadcast %210 : f32 to vector<8x128xf32>
    %212 = arith.mulf %211, %187 : vector<8x128xf32>
    %213 = arith.addf %209, %212 : vector<8x128xf32>
    %c2_130 = arith.constant 2 : index
    %c0_131 = arith.constant 0 : index
    %c0_132 = arith.constant 0 : index
    %214 = vector.load %arg5[%c2_130, %c0_131, %c0_132] : memref<3x128x128xbf16, #tpu.memory_space<vmem>>, vector<1x128x128xbf16>
    %215 = vector.shape_cast %214 : vector<1x128x128xbf16> to vector<128x128xbf16>
    %c2_133 = arith.constant 2 : index
    %c0_134 = arith.constant 0 : index
    %c0_135 = arith.constant 0 : index
    %216 = vector.load %arg6[%c2_133, %c0_134, %c0_135] : memref<3x128x128xbf16, #tpu.memory_space<vmem>>, vector<1x128x128xbf16>
    %217 = vector.shape_cast %216 : vector<1x128x128xbf16> to vector<128x128xbf16>
    %c2_136 = arith.constant 2 : index
    %c0_137 = arith.constant 0 : index
    %c0_138 = arith.constant 0 : index
    %218 = vector.load %arg7[%c2_136, %c0_137, %c0_138] : memref<3x1x128xf32, #tpu.memory_space<vmem>>, vector<1x1x128xf32>
    %219 = vector.shape_cast %218 : vector<1x1x128xf32> to vector<1x128xf32>
    %220 = arith.truncf %200 : vector<128x128xf32> to vector<128x128xbf16>
    %221 = arith.truncf %213 : vector<8x128xf32> to vector<8x128xbf16>
    %c0_139 = arith.constant 0 : index
    %c0_140 = arith.constant 0 : index
    %c0_141 = arith.constant 0 : index
    %222 = vector.load %arg3[%c0_139, %c0_140, %c0_141] : memref<1x128x128xbf16, #tpu.memory_space<vmem>>, vector<1x128x128xbf16>
    %223 = vector.shape_cast %222 : vector<1x128x128xbf16> to vector<128x128xbf16>
    %cst_142 = arith.constant dense<0.000000e+00> : vector<128x128xf32>
    %224 = tpu.matmul %223, %220, %cst_142 {dimension_numbers = #tpu.dot_dimension_numbers<[1], [0], [0], [1], [0, 0, 1, 1], [], []>} : vector<128x128xbf16>, vector<128x128xbf16>, vector<128x128xf32> -> vector<128x128xf32>
    %c0_143 = arith.constant 0 : index
    %c0_144 = arith.constant 0 : index
    %c0_145 = arith.constant 0 : index
    %225 = vector.load %arg4[%c0_143, %c0_144, %c0_145] : memref<1x8x8xbf16, #tpu.memory_space<vmem>>, vector<1x8x8xbf16>
    %226 = vector.shape_cast %225 : vector<1x8x8xbf16> to vector<8x8xbf16>
    %cst_146 = arith.constant dense<0.000000e+00> : vector<8x128xf32>
    %227 = tpu.matmul %226, %221, %cst_146 {dimension_numbers = #tpu.dot_dimension_numbers<[1], [0], [0], [1], [0, 0, 1, 1], [], []>} : vector<8x8xbf16>, vector<8x128xbf16>, vector<8x128xf32> -> vector<8x128xf32>
    %228 = arith.truncf %224 : vector<128x128xf32> to vector<128x128xbf16>
    %cst_147 = arith.constant dense<0.000000e+00> : vector<128x128xf32>
    %229 = tpu.matmul %228, %215, %cst_147 {dimension_numbers = #tpu.dot_dimension_numbers<[1], [0], [0], [1], [0, 0, 1, 1], [], []>} : vector<128x128xbf16>, vector<128x128xbf16>, vector<128x128xf32> -> vector<128x128xf32>
    %cst_148 = arith.constant dense<0.000000e+00> : vector<128x128xf32>
    %230 = tpu.matmul %220, %217, %cst_148 {dimension_numbers = #tpu.dot_dimension_numbers<[1], [0], [0], [1], [0, 0, 1, 1], [], []>} : vector<128x128xbf16>, vector<128x128xbf16>, vector<128x128xf32> -> vector<128x128xf32>
    %231 = arith.addf %229, %230 : vector<128x128xf32>
    %232 = vector.broadcast %219 : vector<1x128xf32> to vector<128x128xf32>
    %233 = arith.addf %231, %232 : vector<128x128xf32>
    %cst_149 = arith.constant 0.000000e+00 : f32
    %234 = vector.broadcast %cst_149 : f32 to vector<128x128xf32>
    %235 = arith.cmpf ogt, %233, %234 : vector<128x128xf32>
    %236 = math.exp %233 : vector<128x128xf32>
    %cst_150 = arith.constant 1.000000e+00 : f32
    %237 = vector.broadcast %cst_150 : f32 to vector<128x128xf32>
    %238 = arith.subf %236, %237 : vector<128x128xf32>
    %239 = arith.select %235, %233, %238 : vector<128x128xi1>, vector<128x128xf32>
    %240 = arith.truncf %227 : vector<8x128xf32> to vector<8x128xbf16>
    %cst_151 = arith.constant dense<0.000000e+00> : vector<8x128xf32>
    %241 = tpu.matmul %240, %215, %cst_151 {dimension_numbers = #tpu.dot_dimension_numbers<[1], [0], [0], [1], [0, 0, 1, 1], [], []>} : vector<8x128xbf16>, vector<128x128xbf16>, vector<8x128xf32> -> vector<8x128xf32>
    %cst_152 = arith.constant dense<0.000000e+00> : vector<8x128xf32>
    %242 = tpu.matmul %221, %217, %cst_152 {dimension_numbers = #tpu.dot_dimension_numbers<[1], [0], [0], [1], [0, 0, 1, 1], [], []>} : vector<8x128xbf16>, vector<128x128xbf16>, vector<8x128xf32> -> vector<8x128xf32>
    %243 = arith.addf %241, %242 : vector<8x128xf32>
    %244 = vector.broadcast %219 : vector<1x128xf32> to vector<8x128xf32>
    %245 = arith.addf %243, %244 : vector<8x128xf32>
    %cst_153 = arith.constant 0.000000e+00 : f32
    %246 = vector.broadcast %cst_153 : f32 to vector<8x128xf32>
    %247 = arith.cmpf ogt, %245, %246 : vector<8x128xf32>
    %248 = math.exp %245 : vector<8x128xf32>
    %cst_154 = arith.constant 1.000000e+00 : f32
    %249 = vector.broadcast %cst_154 : f32 to vector<8x128xf32>
    %250 = arith.subf %248, %249 : vector<8x128xf32>
    %251 = arith.select %247, %245, %250 : vector<8x128xi1>, vector<8x128xf32>
    %cst_155 = arith.constant 0.176776692 : f32
    %252 = vector.broadcast %cst_155 : f32 to vector<8x128xf32>
    %253 = arith.mulf %251, %252 : vector<8x128xf32>
    %254 = arith.truncf %253 : vector<8x128xf32> to vector<8x128xbf16>
    %255 = arith.truncf %239 : vector<128x128xf32> to vector<128x128xbf16>
    %cst_156 = arith.constant dense<0.000000e+00> : vector<8x128xf32>
    %256 = tpu.matmul %254, %255, %cst_156 {dimension_numbers = #tpu.dot_dimension_numbers<[1], [1], [0], [0], [0, 0, 1, 0], [], []>} : vector<8x128xbf16>, vector<128x128xbf16>, vector<8x128xf32> -> vector<8x128xf32>
    %cst_157 = arith.constant -1.000000e+09 : f32
    %257 = vector.broadcast %cst_157 : f32 to vector<8x128xf32>
    %258 = arith.select %3, %256, %257 : vector<8x128xi1>, vector<8x128xf32>
    %cst_158 = arith.constant dense<0xFF800000> : vector<8xf32>
    %259 = vector.multi_reduction <maximumf>, %258, %cst_158 [1] : vector<8x128xf32> to vector<8xf32>
    %260 = vector.shape_cast %259 : vector<8xf32> to vector<8x1xf32>
    %261 = vector.broadcast %260 : vector<8x1xf32> to vector<8x128xf32>
    %262 = arith.subf %258, %261 : vector<8x128xf32>
    %263 = math.exp %262 : vector<8x128xf32>
    %cst_159 = arith.constant dense<0.000000e+00> : vector<8xf32>
    %264 = vector.multi_reduction <add>, %263, %cst_159 [1] : vector<8x128xf32> to vector<8xf32>
    %265 = vector.shape_cast %264 : vector<8xf32> to vector<8x1xf32>
    %266 = tpu.reciprocal %265 {approx = true} : vector<8x1xf32> -> vector<8x1xf32>
    %267 = arith.mulf %265, %266 : vector<8x1xf32>
    %cst_160 = arith.constant 2.000000e+00 : f32
    %268 = vector.broadcast %cst_160 : f32 to vector<8x1xf32>
    %269 = arith.subf %268, %267 : vector<8x1xf32>
    %270 = arith.mulf %266, %269 : vector<8x1xf32>
    %271 = arith.mulf %270, %5 : vector<8x1xf32>
    %272 = vector.broadcast %271 : vector<8x1xf32> to vector<8x128xf32>
    %273 = arith.mulf %263, %272 : vector<8x128xf32>
    %c0_i32_161 = arith.constant 0 : i32
    %c0_i32_162 = arith.constant 0 : i32
    %c0_i32_163 = arith.constant 0 : i32
    %c0_i32_164 = arith.constant 0 : i32
    %274 = tpu.memref_slice %arg13[%c0_i32_161, %c0_i32_163, %c0_i32_164] : memref<2x8x128xf32, #tpu.memory_space<vmem>> -> memref<1x8x128xf32, #tpu.memory_space<vmem>>
    %275 = tpu.memref_squeeze %274 : memref<1x8x128xf32, #tpu.memory_space<vmem>> -> memref<8x128xf32, #tpu.memory_space<vmem>>
    %c0_i32_165 = arith.constant 0 : i32
    %c0_i32_166 = arith.constant 0 : i32
    %276 = tpu.memref_slice %arg12[%74, %c0_i32_165, %c0_i32_166] : memref<8x8x128xf32, #tpu.memory_space<any>> -> memref<1x8x128xf32, #tpu.memory_space<any>>
    %277 = tpu.memref_squeeze %276 : memref<1x8x128xf32, #tpu.memory_space<any>> -> memref<8x128xf32, #tpu.memory_space<any>>
    %278 = tpu.memref_slice %arg14[%c0_i32_162] : memref<2x!tpu.dma_semaphore, #tpu.memory_space<semaphore_mem>> -> memref<1x!tpu.dma_semaphore, #tpu.memory_space<semaphore_mem>>
    %279 = tpu.memref_squeeze %278 : memref<1x!tpu.dma_semaphore, #tpu.memory_space<semaphore_mem>> -> memref<!tpu.dma_semaphore, #tpu.memory_space<semaphore_mem>>
    tpu.wait_dma2 semaphore(%279 : memref<!tpu.dma_semaphore, #tpu.memory_space<semaphore_mem>>) src(%275 : memref<8x128xf32, #tpu.memory_space<vmem>>) dst(%277 : memref<8x128xf32, #tpu.memory_space<any>>)
    %c0_167 = arith.constant 0 : index
    %c0_168 = arith.constant 0 : index
    %c0_169 = arith.constant 0 : index
    %280 = vector.load %arg13[%c0_167, %c0_168, %c0_169] : memref<2x8x128xf32, #tpu.memory_space<vmem>>, vector<1x8x128xf32>
    %281 = vector.shape_cast %280 : vector<1x8x128xf32> to vector<8x128xf32>
    %282 = vector.shape_cast %273 : vector<8x128xf32> to vector<1x8x128xf32>
    tpu.vector_store %arg13[%c0_167, %c0_168, %c0_169], %282 {strides = array<i32>} : memref<2x8x128xf32, #tpu.memory_space<vmem>>, vector<1x8x128xf32>,
    %c4_i32_170 = arith.constant 4 : i32
    %283 = arith.muli %arg0, %c4_i32_170 : i32
    %c2_i32 = arith.constant 2 : i32
    %284 = arith.addi %283, %c2_i32 : i32
    %c0_i32_171 = arith.constant 0 : i32
    %c0_i32_172 = arith.constant 0 : i32
    %c0_i32_173 = arith.constant 0 : i32
    %c0_i32_174 = arith.constant 0 : i32
    %285 = tpu.memref_slice %arg13[%c0_i32_171, %c0_i32_173, %c0_i32_174] : memref<2x8x128xf32, #tpu.memory_space<vmem>> -> memref<1x8x128xf32, #tpu.memory_space<vmem>>
    %286 = tpu.memref_squeeze %285 : memref<1x8x128xf32, #tpu.memory_space<vmem>> -> memref<8x128xf32, #tpu.memory_space<vmem>>
    %c0_i32_175 = arith.constant 0 : i32
    %c0_i32_176 = arith.constant 0 : i32
    %287 = tpu.memref_slice %arg12[%284, %c0_i32_175, %c0_i32_176] : memref<8x8x128xf32, #tpu.memory_space<any>> -> memref<1x8x128xf32, #tpu.memory_space<any>>
    %288 = tpu.memref_squeeze %287 : memref<1x8x128xf32, #tpu.memory_space<any>> -> memref<8x128xf32, #tpu.memory_space<any>>
    %289 = tpu.memref_slice %arg14[%c0_i32_172] : memref<2x!tpu.dma_semaphore, #tpu.memory_space<semaphore_mem>> -> memref<1x!tpu.dma_semaphore, #tpu.memory_space<semaphore_mem>>
    %290 = tpu.memref_squeeze %289 : memref<1x!tpu.dma_semaphore, #tpu.memory_space<semaphore_mem>> -> memref<!tpu.dma_semaphore, #tpu.memory_space<semaphore_mem>>
    tpu.enqueue_dma source(%286 : memref<8x128xf32, #tpu.memory_space<vmem>>) target(%288 : memref<8x128xf32, #tpu.memory_space<any>>) target_semaphore(%290 : memref<!tpu.dma_semaphore, #tpu.memory_space<semaphore_mem>>)
    %291 = arith.truncf %273 : vector<8x128xf32> to vector<8x128xbf16>
    %292 = arith.truncf %239 : vector<128x128xf32> to vector<128x128xbf16>
    %293 = arith.truncf %251 : vector<8x128xf32> to vector<8x128xbf16>
    %cst_177 = arith.constant dense<0.000000e+00> : vector<128x128xf32>
    %294 = tpu.matmul %291, %293, %cst_177 {dimension_numbers = #tpu.dot_dimension_numbers<[0], [0], [1], [1], [0, 1, 1, 1], [], []>} : vector<8x128xbf16>, vector<8x128xbf16>, vector<128x128xf32> -> vector<128x128xf32>
    %cst_178 = arith.constant dense<0.000000e+00> : vector<8x128xf32>
    %295 = tpu.matmul %291, %292, %cst_178 {dimension_numbers = #tpu.dot_dimension_numbers<[1], [0], [0], [1], [0, 0, 1, 1], [], []>} : vector<8x128xbf16>, vector<128x128xbf16>, vector<8x128xf32> -> vector<8x128xf32>
    %c2_179 = arith.constant 2 : index
    %c0_180 = arith.constant 0 : index
    %296 = memref.load %arg8[%c2_179, %c0_180] : memref<3x3xf32, #tpu.memory_space<smem>>
    %c0_181 = arith.constant 0 : index
    %c0_182 = arith.constant 0 : index
    %c0_183 = arith.constant 0 : index
    %297 = vector.load %arg1[%c0_181, %c0_182, %c0_183] : memref<1x128x128xf32, #tpu.memory_space<vmem>>, vector<1x128x128xf32>
    %298 = vector.shape_cast %297 : vector<1x128x128xf32> to vector<128x128xf32>
    %299 = vector.broadcast %296 : f32 to vector<128x128xf32>
    %300 = arith.mulf %299, %298 : vector<128x128xf32>
    %c2_184 = arith.constant 2 : index
    %c1_185 = arith.constant 1 : index
    %301 = memref.load %arg8[%c2_184, %c1_185] : memref<3x3xf32, #tpu.memory_space<smem>>
    %302 = vector.broadcast %301 : f32 to vector<128x128xf32>
    %303 = arith.mulf %302, %239 : vector<128x128xf32>
    %304 = arith.addf %300, %303 : vector<128x128xf32>
    %c2_186 = arith.constant 2 : index
    %c2_187 = arith.constant 2 : index
    %305 = memref.load %arg8[%c2_186, %c2_187] : memref<3x3xf32, #tpu.memory_space<smem>>
    %306 = vector.broadcast %305 : f32 to vector<128x128xf32>
    %307 = arith.mulf %306, %294 : vector<128x128xf32>
    %308 = arith.addf %304, %307 : vector<128x128xf32>
    %c2_188 = arith.constant 2 : index
    %c0_189 = arith.constant 0 : index
    %309 = memref.load %arg9[%c2_188, %c0_189] : memref<3x3xf32, #tpu.memory_space<smem>>
    %c0_190 = arith.constant 0 : index
    %c0_191 = arith.constant 0 : index
    %c0_192 = arith.constant 0 : index
    %310 = vector.load %arg2[%c0_190, %c0_191, %c0_192] : memref<1x8x128xf32, #tpu.memory_space<vmem>>, vector<1x8x128xf32>
    %311 = vector.shape_cast %310 : vector<1x8x128xf32> to vector<8x128xf32>
    %312 = vector.broadcast %309 : f32 to vector<8x128xf32>
    %313 = arith.mulf %312, %311 : vector<8x128xf32>
    %c2_193 = arith.constant 2 : index
    %c1_194 = arith.constant 1 : index
    %314 = memref.load %arg9[%c2_193, %c1_194] : memref<3x3xf32, #tpu.memory_space<smem>>
    %315 = vector.broadcast %314 : f32 to vector<8x128xf32>
    %316 = arith.mulf %315, %251 : vector<8x128xf32>
    %317 = arith.addf %313, %316 : vector<8x128xf32>
    %c2_195 = arith.constant 2 : index
    %c2_196 = arith.constant 2 : index
    %318 = memref.load %arg9[%c2_195, %c2_196] : memref<3x3xf32, #tpu.memory_space<smem>>
    %319 = vector.broadcast %318 : f32 to vector<8x128xf32>
    %320 = arith.mulf %319, %295 : vector<8x128xf32>
    %321 = arith.addf %317, %320 : vector<8x128xf32>
    %cst_197 = arith.constant 0.176776692 : f32
    %322 = vector.broadcast %cst_197 : f32 to vector<8x128xf32>
    %323 = arith.mulf %321, %322 : vector<8x128xf32>
    %324 = arith.truncf %323 : vector<8x128xf32> to vector<8x128xbf16>
    %325 = arith.truncf %308 : vector<128x128xf32> to vector<128x128xbf16>
    %cst_198 = arith.constant dense<0.000000e+00> : vector<8x128xf32>
    %326 = tpu.matmul %324, %325, %cst_198 {dimension_numbers = #tpu.dot_dimension_numbers<[1], [1], [0], [0], [0, 0, 1, 0], [], []>} : vector<8x128xbf16>, vector<128x128xbf16>, vector<8x128xf32> -> vector<8x128xf32>
    %cst_199 = arith.constant -1.000000e+09 : f32
    %327 = vector.broadcast %cst_199 : f32 to vector<8x128xf32>
    %328 = arith.select %3, %326, %327 : vector<8x128xi1>, vector<8x128xf32>
    %cst_200 = arith.constant dense<0xFF800000> : vector<8xf32>
    %329 = vector.multi_reduction <maximumf>, %328, %cst_200 [1] : vector<8x128xf32> to vector<8xf32>
    %330 = vector.shape_cast %329 : vector<8xf32> to vector<8x1xf32>
    %331 = vector.broadcast %330 : vector<8x1xf32> to vector<8x128xf32>
    %332 = arith.subf %328, %331 : vector<8x128xf32>
    %333 = math.exp %332 : vector<8x128xf32>
    %cst_201 = arith.constant dense<0.000000e+00> : vector<8xf32>
    %334 = vector.multi_reduction <add>, %333, %cst_201 [1] : vector<8x128xf32> to vector<8xf32>
    %335 = vector.shape_cast %334 : vector<8xf32> to vector<8x1xf32>
    %336 = tpu.reciprocal %335 {approx = true} : vector<8x1xf32> -> vector<8x1xf32>
    %337 = arith.mulf %335, %336 : vector<8x1xf32>
    %cst_202 = arith.constant 2.000000e+00 : f32
    %338 = vector.broadcast %cst_202 : f32 to vector<8x1xf32>
    %339 = arith.subf %338, %337 : vector<8x1xf32>
    %340 = arith.mulf %336, %339 : vector<8x1xf32>
    %341 = arith.mulf %340, %5 : vector<8x1xf32>
    %342 = vector.broadcast %341 : vector<8x1xf32> to vector<8x128xf32>
    %343 = arith.mulf %333, %342 : vector<8x128xf32>
    %c1_i32_203 = arith.constant 1 : i32
    %c1_i32_204 = arith.constant 1 : i32
    %c0_i32_205 = arith.constant 0 : i32
    %c0_i32_206 = arith.constant 0 : i32
    %344 = tpu.memref_slice %arg13[%c1_i32_203, %c0_i32_205, %c0_i32_206] : memref<2x8x128xf32, #tpu.memory_space<vmem>> -> memref<1x8x128xf32, #tpu.memory_space<vmem>>
    %345 = tpu.memref_squeeze %344 : memref<1x8x128xf32, #tpu.memory_space<vmem>> -> memref<8x128xf32, #tpu.memory_space<vmem>>
    %c0_i32_207 = arith.constant 0 : i32
    %c0_i32_208 = arith.constant 0 : i32
    %346 = tpu.memref_slice %arg12[%176, %c0_i32_207, %c0_i32_208] : memref<8x8x128xf32, #tpu.memory_space<any>> -> memref<1x8x128xf32, #tpu.memory_space<any>>
    %347 = tpu.memref_squeeze %346 : memref<1x8x128xf32, #tpu.memory_space<any>> -> memref<8x128xf32, #tpu.memory_space<any>>
    %348 = tpu.memref_slice %arg14[%c1_i32_204] : memref<2x!tpu.dma_semaphore, #tpu.memory_space<semaphore_mem>> -> memref<1x!tpu.dma_semaphore, #tpu.memory_space<semaphore_mem>>
    %349 = tpu.memref_squeeze %348 : memref<1x!tpu.dma_semaphore, #tpu.memory_space<semaphore_mem>> -> memref<!tpu.dma_semaphore, #tpu.memory_space<semaphore_mem>>
    tpu.wait_dma2 semaphore(%349 : memref<!tpu.dma_semaphore, #tpu.memory_space<semaphore_mem>>) src(%345 : memref<8x128xf32, #tpu.memory_space<vmem>>) dst(%347 : memref<8x128xf32, #tpu.memory_space<any>>)
    %c1_209 = arith.constant 1 : index
    %c0_210 = arith.constant 0 : index
    %c0_211 = arith.constant 0 : index
    %350 = vector.load %arg13[%c1_209, %c0_210, %c0_211] : memref<2x8x128xf32, #tpu.memory_space<vmem>>, vector<1x8x128xf32>
    %351 = vector.shape_cast %350 : vector<1x8x128xf32> to vector<8x128xf32>
    %352 = vector.shape_cast %343 : vector<8x128xf32> to vector<1x8x128xf32>
    tpu.vector_store %arg13[%c1_209, %c0_210, %c0_211], %352 {strides = array<i32>} : memref<2x8x128xf32, #tpu.memory_space<vmem>>, vector<1x8x128xf32>,
    %c4_i32_212 = arith.constant 4 : i32
    %353 = arith.muli %arg0, %c4_i32_212 : i32
    %c3_i32 = arith.constant 3 : i32
    %354 = arith.addi %353, %c3_i32 : i32
    %c1_i32_213 = arith.constant 1 : i32
    %c1_i32_214 = arith.constant 1 : i32
    %c0_i32_215 = arith.constant 0 : i32
    %c0_i32_216 = arith.constant 0 : i32
    %355 = tpu.memref_slice %arg13[%c1_i32_213, %c0_i32_215, %c0_i32_216] : memref<2x8x128xf32, #tpu.memory_space<vmem>> -> memref<1x8x128xf32, #tpu.memory_space<vmem>>
    %356 = tpu.memref_squeeze %355 : memref<1x8x128xf32, #tpu.memory_space<vmem>> -> memref<8x128xf32, #tpu.memory_space<vmem>>
    %c0_i32_217 = arith.constant 0 : i32
    %c0_i32_218 = arith.constant 0 : i32
    %357 = tpu.memref_slice %arg12[%354, %c0_i32_217, %c0_i32_218] : memref<8x8x128xf32, #tpu.memory_space<any>> -> memref<1x8x128xf32, #tpu.memory_space<any>>
    %358 = tpu.memref_squeeze %357 : memref<1x8x128xf32, #tpu.memory_space<any>> -> memref<8x128xf32, #tpu.memory_space<any>>
    %359 = tpu.memref_slice %arg14[%c1_i32_214] : memref<2x!tpu.dma_semaphore, #tpu.memory_space<semaphore_mem>> -> memref<1x!tpu.dma_semaphore, #tpu.memory_space<semaphore_mem>>
    %360 = tpu.memref_squeeze %359 : memref<1x!tpu.dma_semaphore, #tpu.memory_space<semaphore_mem>> -> memref<!tpu.dma_semaphore, #tpu.memory_space<semaphore_mem>>
    tpu.enqueue_dma source(%356 : memref<8x128xf32, #tpu.memory_space<vmem>>) target(%358 : memref<8x128xf32, #tpu.memory_space<any>>) target_semaphore(%360 : memref<!tpu.dma_semaphore, #tpu.memory_space<semaphore_mem>>)
    %c0_i32_219 = arith.constant 0 : i32
    %c0_i32_220 = arith.constant 0 : i32
    %c0_i32_221 = arith.constant 0 : i32
    %c0_i32_222 = arith.constant 0 : i32
    %361 = tpu.memref_slice %arg13[%c0_i32_219, %c0_i32_221, %c0_i32_222] : memref<2x8x128xf32, #tpu.memory_space<vmem>> -> memref<1x8x128xf32, #tpu.memory_space<vmem>>
    %362 = tpu.memref_squeeze %361 : memref<1x8x128xf32, #tpu.memory_space<vmem>> -> memref<8x128xf32, #tpu.memory_space<vmem>>
    %c0_i32_223 = arith.constant 0 : i32
    %c0_i32_224 = arith.constant 0 : i32
    %363 = tpu.memref_slice %arg12[%284, %c0_i32_223, %c0_i32_224] : memref<8x8x128xf32, #tpu.memory_space<any>> -> memref<1x8x128xf32, #tpu.memory_space<any>>
    %364 = tpu.memref_squeeze %363 : memref<1x8x128xf32, #tpu.memory_space<any>> -> memref<8x128xf32, #tpu.memory_space<any>>
    %365 = tpu.memref_slice %arg14[%c0_i32_220] : memref<2x!tpu.dma_semaphore, #tpu.memory_space<semaphore_mem>> -> memref<1x!tpu.dma_semaphore, #tpu.memory_space<semaphore_mem>>
    %366 = tpu.memref_squeeze %365 : memref<1x!tpu.dma_semaphore, #tpu.memory_space<semaphore_mem>> -> memref<!tpu.dma_semaphore, #tpu.memory_space<semaphore_mem>>
    tpu.wait_dma2 semaphore(%366 : memref<!tpu.dma_semaphore, #tpu.memory_space<semaphore_mem>>) src(%362 : memref<8x128xf32, #tpu.memory_space<vmem>>) dst(%364 : memref<8x128xf32, #tpu.memory_space<any>>)
    %c1_i32_225 = arith.constant 1 : i32
    %c1_i32_226 = arith.constant 1 : i32
    %c0_i32_227 = arith.constant 0 : i32
    %c0_i32_228 = arith.constant 0 : i32
    %367 = tpu.memref_slice %arg13[%c1_i32_225, %c0_i32_227, %c0_i32_228] : memref<2x8x128xf32, #tpu.memory_space<vmem>> -> memref<1x8x128xf32, #tpu.memory_space<vmem>>
    %368 = tpu.memref_squeeze %367 : memref<1x8x128xf32, #tpu.memory_space<vmem>> -> memref<8x128xf32, #tpu.memory_space<vmem>>
    %c0_i32_229 = arith.constant 0 : i32
    %c0_i32_230 = arith.constant 0 : i32
    %369 = tpu.memref_slice %arg12[%354, %c0_i32_229, %c0_i32_230] : memref<8x8x128xf32, #tpu.memory_space<any>> -> memref<1x8x128xf32, #tpu.memory_space<any>>
    %370 = tpu.memref_squeeze %369 : memref<1x8x128xf32, #tpu.memory_space<any>> -> memref<8x128xf32, #tpu.memory_space<any>>
    %371 = tpu.memref_slice %arg14[%c1_i32_226] : memref<2x!tpu.dma_semaphore, #tpu.memory_space<semaphore_mem>> -> memref<1x!tpu.dma_semaphore, #tpu.memory_space<semaphore_mem>>
    %372 = tpu.memref_squeeze %371 : memref<1x!tpu.dma_semaphore, #tpu.memory_space<semaphore_mem>> -> memref<!tpu.dma_semaphore, #tpu.memory_space<semaphore_mem>>
    tpu.wait_dma2 semaphore(%372 : memref<!tpu.dma_semaphore, #tpu.memory_space<semaphore_mem>>) src(%368 : memref<8x128xf32, #tpu.memory_space<vmem>>) dst(%370 : memref<8x128xf32, #tpu.memory_space<any>>)
    return
  }
  func.func @transform_0(%arg0: i32) -> (i32, i32, i32) {
    %c0_i32 = arith.constant 0 : i32
    %c0_i32_0 = arith.constant 0 : i32
    %c0_i32_1 = arith.constant 0 : i32
    return %arg0, %c0_i32, %c0_i32_0 : i32, i32, i32
  }
  func.func @transform_1(%arg0: i32) -> (i32, i32, i32) {
    %c0_i32 = arith.constant 0 : i32
    %c0_i32_0 = arith.constant 0 : i32
    %c0_i32_1 = arith.constant 0 : i32
    return %arg0, %c0_i32, %c0_i32_0 : i32, i32, i32
  }
  func.func @transform_2(%arg0: i32) -> (i32, i32, i32) {
    %c0_i32 = arith.constant 0 : i32
    %c0_i32_0 = arith.constant 0 : i32
    %c0_i32_1 = arith.constant 0 : i32
    return %arg0, %c0_i32, %c0_i32_0 : i32, i32, i32
  }
  func.func @transform_3(%arg0: i32) -> (i32, i32, i32) {
    %c0_i32 = arith.constant 0 : i32
    %c0_i32_0 = arith.constant 0 : i32
    %c0_i32_1 = arith.constant 0 : i32
    return %arg0, %c0_i32, %c0_i32_0 : i32, i32, i32
  }
  func.func @transform_4(%arg0: i32) -> (i32, i32, i32) {
    %c0_i32 = arith.constant 0 : i32
    %c0_i32_0 = arith.constant 0 : i32
    %c0_i32_1 = arith.constant 0 : i32
    %c0_i32_2 = arith.constant 0 : i32
    return %c0_i32, %c0_i32_0, %c0_i32_1 : i32, i32, i32
  }
  func.func @transform_5(%arg0: i32) -> (i32, i32, i32) {
    %c0_i32 = arith.constant 0 : i32
    %c0_i32_0 = arith.constant 0 : i32
    %c0_i32_1 = arith.constant 0 : i32
    %c0_i32_2 = arith.constant 0 : i32
    return %c0_i32, %c0_i32_0, %c0_i32_1 : i32, i32, i32
  }
  func.func @transform_6(%arg0: i32) -> (i32, i32, i32) {
    %c0_i32 = arith.constant 0 : i32
    %c0_i32_0 = arith.constant 0 : i32
    %c0_i32_1 = arith.constant 0 : i32
    %c0_i32_2 = arith.constant 0 : i32
    return %c0_i32, %c0_i32_0, %c0_i32_1 : i32, i32, i32
  }
  func.func @transform_7(%arg0: i32) -> (i32, i32) {
    %c0_i32 = arith.constant 0 : i32
    %c0_i32_0 = arith.constant 0 : i32
    %c0_i32_1 = arith.constant 0 : i32
    return %c0_i32, %c0_i32_0 : i32, i32
  }
  func.func @transform_8(%arg0: i32) -> (i32, i32) {
    %c0_i32 = arith.constant 0 : i32
    %c0_i32_0 = arith.constant 0 : i32
    %c0_i32_1 = arith.constant 0 : i32
    return %c0_i32, %c0_i32_0 : i32, i32
  }
  func.func @transform_9(%arg0: i32) -> (i32, i32, i32) {
    %c0_i32 = arith.constant 0 : i32
    %c0_i32_0 = arith.constant 0 : i32
    %c0_i32_1 = arith.constant 0 : i32
    return %arg0, %c0_i32, %c0_i32_0 : i32, i32, i32
  }
  func.func @transform_10(%arg0: i32) -> (i32, i32, i32) {
    %c0_i32 = arith.constant 0 : i32
    %c0_i32_0 = arith.constant 0 : i32
    %c0_i32_1 = arith.constant 0 : i32
    return %arg0, %c0_i32, %c0_i32_0 : i32, i32, i32
  }
}

</mosaic_0001>

<llo_original>
// kernel: subcross_gmn_forward.1
$region0: #{subcross_gmn_forward.1}
  #allocation0 [shape = 'u32[]', space=smem, size = 0x4, offset = 0x4, fixed_abs, tag = 'smem constant byte address 0x4 - core index']
  #allocation1 [shape = 'u32[144,128]{1,0:T(1,128)}', space=vmem, size = 0x12000, scoped, tag = 'internal scratch']
  #allocation2 [shape = 'f32[2,8,128]{2,1,0:T(8,128)}', space=vmem, size = 0x2000, scoped, tag = 'scratch operand']
  #allocation3 [shape = 's32[2]{0}', space=sflag, size = 0x8, scoped, tag = 'scratch operand']
  #allocation8 [shape = 's32[]', space=sflag, size = 0x4, offset = 0, fixed_abs, tag = 'sflag constant byte address 0x0 - dummy sync flag']
  #allocation9 [shape = 's32[]', space=sflag, size = 0x4, offset = 0, fixed_abs, tag = 'sflag constant byte address 0x0 - dummy sync flag']
  #allocation10 [shape = 'u32[]', space=smem, size = 0x4, offset = 0x44, fixed_abs, tag = 'smem constant byte address 0x44 - assertion arg 0']
  #allocation11 [shape = 'u32[]', space=smem, size = 0x4, offset = 0x48, fixed_abs, tag = 'smem constant byte address 0x48 - assertion arg 1']
  #allocation12 [shape = 's32[]', space=sflag, size = 0x4, offset = 0, fixed_abs, tag = 'sflag constant byte address 0x0 - dummy sync flag']
  #allocation13 [shape = 's32[]', space=sflag, size = 0x4, offset = 0, fixed_abs, tag = 'sflag constant byte address 0x0 - dummy sync flag']
  #allocation14 [shape = 's32[]', space=sflag, size = 0x4, offset = 0, fixed_abs, tag = 'sflag constant byte address 0x0 - dummy sync flag']
  #allocation15 [shape = 's32[]', space=sflag, size = 0x4, offset = 0, fixed_abs, tag = 'sflag constant byte address 0x0 - dummy sync flag']
  #allocation16 [shape = 's32[]', space=sflag, size = 0x4, offset = 0, fixed_abs, tag = 'sflag constant byte address 0x0 - dummy sync flag']
  #allocation17 [shape = 's32[]', space=sflag, size = 0x4, offset = 0, fixed_abs, tag = 'sflag constant byte address 0x0 - dummy sync flag']
  %s0 = inlined_call_operand.vmem [shape: f32[2,128,128], index: 0, kind: input, shape index: {}]
  %s1 = inlined_call_operand.vmem [shape: f32[2,8,128], index: 1, kind: input, shape index: {}]
  %s2 = inlined_call_operand.vmem [shape: bf16[2,128,128], index: 2, kind: input, shape index: {}]
  %s3 = inlined_call_operand.vmem [shape: bf16[2,8,8], index: 3, kind: input, shape index: {}]
  %s4 = inlined_call_operand.vmem [shape: bf16[3,128,128], index: 4, kind: input, shape index: {}]
  %s5 = inlined_call_operand.vmem [shape: bf16[3,128,128], index: 5, kind: input, shape index: {}]
  %s6 = inlined_call_operand.vmem [shape: f32[3,1,128], index: 6, kind: input, shape index: {}]
  %s7 = inlined_call_operand.vmem [shape: f32[3,3], index: 7, kind: input, shape index: {}]
  %s8 = inlined_call_operand.vmem [shape: f32[3,3], index: 8, kind: input, shape index: {}]
  %s9 = inlined_call_operand.vmem [shape: f32[2,8,128], index: 9, kind: input, shape index: {}]
  %s10 = inlined_call_operand.vmem [shape: f32[2,8,1], index: 10, kind: input, shape index: {}]
  %s11 = inlined_call_operand.hbm [shape: f32[8,8,128], index: 11, kind: output, shape index: {}]
  %s12 = sld [smem:[#allocation0]]
  $region89: #{subcross_gmn_forward.1} parent=0
    _
  %s14 = ssub.s32 1, %s12
  %s15 = scalar_select 0, %s14, %s12
  $region1: #{subcross_gmn_forward.1} parent=0
    #allocation4 [shape = 'u8[2048]{0}', space=smem, size = 0x800, scoped, tag = 'input window, operand 7, single buffered']
    #allocation5 [shape = 's32[2]{0}', space=sflag, size = 0x8, scoped, tag = 'scoped memory for subcross_gmn_forward.1']
    #allocation6 [shape = 'u8[2048]{0}', space=smem, size = 0x800, scoped, tag = 'input window, operand 8, single buffered']
    #allocation7 [shape = 's32[1]{0}', space=sflag, size = 0x4, scoped, tag = 'scoped memory for subcross_gmn_forward.1']
    %16 = vsyncpa [#allocation5], 0
    %17 = vsyncpa [#allocation7], 0
    loop: start=0, step=1, limit=3
    $region2: #{subcross_gmn_forward.1} parent=1 // loop_pre_header
      _
    $region3: #{subcross_gmn_forward.1} parent=1 // loop_header
      %s19 = sphi 0, %s23
      %p20 = scmp.ge.s32.totalorder %s19, 3
      %s28 = sphi 0, %s30
      %s31 = sphi 0, %s28
      %s41 = sphi 0, %s31
      %s47 = sphi 0, %s49
      %s50 = sphi 0, %s47
      %s60 = sphi 0, %s50
      %s66 = sphi 0, %s68
      %s69 = sphi 0, %s66
      %s79 = sphi 0, %s69
      %s85 = sphi 0, %s87
      %s88 = sphi 0, %s85
      %s98 = sphi 0, %s88
      %s102 = sphi 0, %s102
      %s104 = sphi 0, %s102
      %s112 = sphi 0, %s104
      %s116 = sphi 0, %s116
      %s118 = sphi 0, %s116
      %s126 = sphi 0, %s118
      %s130 = sphi 0, %s130
      %s132 = sphi 0, %s130
      %s140 = sphi 0, %s132
      %s144 = sphi 0, %s144
      %s146 = sphi 0, %s144
      %s154 = sphi 0, %s146
      %s158 = sphi 0, %s158
      %s160 = sphi 0, %s158
      %s168 = sphi 0, %s160
      %s174 = sphi 0, %s176
      %s177 = sphi 0, %s174
      %s187 = sphi 0, %s177
      %s193 = sphi 0, %s195
      %s196 = sphi 0, %s193
      %s206 = sphi 0, %s196
    $region4: #{subcross_gmn_forward.1} parent=1 // loop_header_branch
      %22 = sbr.rel (%p20) target = $region8
    $region5: #{subcross_gmn_forward.1} parent=1 // loop_body
      %s24 = ssub.s32 %s19, 1
      %s25 = sadd.s32 %s19, 1
      %s26 = ssub.s32 %s19, %s25
      %p27 = scmp.eq.s32.totalorder %s26, 0
      %s29 = sadd.s32 %s28, 1
      %s30 = scalar_select %p27, %s28, %s29
      %p32 = pneg %p27
      %p33 = scmp.eq.s32.totalorder %s19, 1
      %p34 = por %p32, %p33
      %p35 = scmp.ne.s32.totalorder %s28, %s31
      %p36 = scmp.eq.s32.totalorder %s19, 0
      %p37 = por %p35, %p36
      %p38 = scmp.ne.s32.totalorder %s28, %s31
      %p39 = scmp.eq.s32.totalorder %s24, 1
      %p40 = por %p38, %p39
      %p42 = scmp.ne.s32.totalorder %s31, %s41
      %p43 = scmp.eq.s32.totalorder %s24, 0
      %p44 = por %p42, %p43
      %s45 = ssub.s32 %s19, %s25
      %p46 = scmp.eq.s32.totalorder %s45, 0
      %s48 = sadd.s32 %s47, 1
      %s49 = scalar_select %p46, %s47, %s48
      %p51 = pneg %p46
      %p52 = scmp.eq.s32.totalorder %s19, 1
      %p53 = por %p51, %p52
      %p54 = scmp.ne.s32.totalorder %s47, %s50
      %p55 = scmp.eq.s32.totalorder %s19, 0
      %p56 = por %p54, %p55
      %p57 = scmp.ne.s32.totalorder %s47, %s50
      %p58 = scmp.eq.s32.totalorder %s24, 1
      %p59 = por %p57, %p58
      %p61 = scmp.ne.s32.totalorder %s50, %s60
      %p62 = scmp.eq.s32.totalorder %s24, 0
      %p63 = por %p61, %p62
      %s64 = ssub.s32 %s19, %s25
      %p65 = scmp.eq.s32.totalorder %s64, 0
      %s67 = sadd.s32 %s66, 1
      %s68 = scalar_select %p65, %s66, %s67
      %p70 = pneg %p65
      %p71 = scmp.eq.s32.totalorder %s19, 1
      %p72 = por %p70, %p71
      %p73 = scmp.ne.s32.totalorder %s66, %s69
      %p74 = scmp.eq.s32.totalorder %s19, 0
      %p75 = por %p73, %p74
      %p76 = scmp.ne.s32.totalorder %s66, %s69
      %p77 = scmp.eq.s32.totalorder %s24, 1
      %p78 = por %p76, %p77
      %p80 = scmp.ne.s32.totalorder %s69, %s79
      %p81 = scmp.eq.s32.totalorder %s24, 0
      %p82 = por %p80, %p81
      %s83 = ssub.s32 %s19, %s25
      %p84 = scmp.eq.s32.totalorder %s83, 0
      %s86 = sadd.s32 %s85, 1
      %s87 = scalar_select %p84, %s85, %s86
      %p89 = pneg %p84
      %p90 = scmp.eq.s32.totalorder %s19, 1
      %p91 = por %p89, %p90
      %p92 = scmp.ne.s32.totalorder %s85, %s88
      %p93 = scmp.eq.s32.totalorder %s19, 0
      %p94 = por %p92, %p93
      %p95 = scmp.ne.s32.totalorder %s85, %s88
      %p96 = scmp.eq.s32.totalorder %s24, 1
      %p97 = por %p95, %p96
      %p99 = scmp.ne.s32.totalorder %s88, %s98
      %p100 = scmp.eq.s32.totalorder %s24, 0
      %p101 = por %p99, %p100
      %s103 = sadd.s32 %s102, 1
      %p105 = scmp.eq.s32.totalorder %s19, 1
      %p106 = scmp.ne.s32.totalorder %s102, %s104
      %p107 = scmp.eq.s32.totalorder %s19, 0
      %p108 = por %p106, %p107
      %p109 = scmp.ne.s32.totalorder %s102, %s104
      %p110 = scmp.eq.s32.totalorder %s24, 1
      %p111 = por %p109, %p110
      %p113 = scmp.ne.s32.totalorder %s104, %s112
      %p114 = scmp.eq.s32.totalorder %s24, 0
      %p115 = por %p113, %p114
      %s117 = sadd.s32 %s116, 1
      %p119 = scmp.eq.s32.totalorder %s19, 1
      %p120 = scmp.ne.s32.totalorder %s116, %s118
      %p121 = scmp.eq.s32.totalorder %s19, 0
      %p122 = por %p120, %p121
      %p123 = scmp.ne.s32.totalorder %s116, %s118
      %p124 = scmp.eq.s32.totalorder %s24, 1
      %p125 = por %p123, %p124
      %p127 = scmp.ne.s32.totalorder %s118, %s126
      %p128 = scmp.eq.s32.totalorder %s24, 0
      %p129 = por %p127, %p128
      %s131 = sadd.s32 %s130, 1
      %p133 = scmp.eq.s32.totalorder %s19, 1
      %p134 = scmp.ne.s32.totalorder %s130, %s132
      %p135 = scmp.eq.s32.totalorder %s19, 0
      %p136 = por %p134, %p135
      %p137 = scmp.ne.s32.totalorder %s130, %s132
      %p138 = scmp.eq.s32.totalorder %s24, 1
      %p139 = por %p137, %p138
      %p141 = scmp.ne.s32.totalorder %s132, %s140
      %p142 = scmp.eq.s32.totalorder %s24, 0
      %p143 = por %p141, %p142
      %s145 = sadd.s32 %s144, 1
      %p147 = scmp.eq.s32.totalorder %s19, 1
      %p148 = scmp.ne.s32.totalorder %s144, %s146
      %p149 = scmp.eq.s32.totalorder %s19, 0
      %p150 = por %p148, %p149
      %p151 = scmp.ne.s32.totalorder %s144, %s146
      %p152 = scmp.eq.s32.totalorder %s24, 1
      %p153 = por %p151, %p152
      %p155 = scmp.ne.s32.totalorder %s146, %s154
      %p156 = scmp.eq.s32.totalorder %s24, 0
      %p157 = por %p155, %p156
      %s159 = sadd.s32 %s158, 1
      %p161 = scmp.eq.s32.totalorder %s19, 1
      %p162 = scmp.ne.s32.totalorder %s158, %s160
      %p163 = scmp.eq.s32.totalorder %s19, 0
      %p164 = por %p162, %p163
      %p165 = scmp.ne.s32.totalorder %s158, %s160
      %p166 = scmp.eq.s32.totalorder %s24, 1
      %p167 = por %p165, %p166
      %p169 = scmp.ne.s32.totalorder %s160, %s168
      %p170 = scmp.eq.s32.totalorder %s24, 0
      %p171 = por %p169, %p170
      %s172 = ssub.s32 %s19, %s25
      %p173 = scmp.eq.s32.totalorder %s172, 0
      %s175 = sadd.s32 %s174, 1
      %s176 = scalar_select %p173, %s174, %s175
      %p178 = pneg %p173
      %p179 = scmp.eq.s32.totalorder %s19, 1
      %p180 = por %p178, %p179
      %p181 = scmp.ne.s32.totalorder %s174, %s177
      %p182 = scmp.eq.s32.totalorder %s19, 0
      %p183 = por %p181, %p182
      %p184 = scmp.ne.s32.totalorder %s174, %s177
      %p185 = scmp.eq.s32.totalorder %s24, 1
      %p186 = por %p184, %p185
      %p188 = scmp.ne.s32.totalorder %s177, %s187
      %p189 = scmp.eq.s32.totalorder %s24, 0
      %p190 = por %p188, %p189
      %s191 = ssub.s32 %s19, %s25
      %p192 = scmp.eq.s32.totalorder %s191, 0
      %s194 = sadd.s32 %s193, 1
      %s195 = scalar_select %p192, %s193, %s194
      %p197 = pneg %p192
      %p198 = scmp.eq.s32.totalorder %s19, 1
      %p199 = por %p197, %p198
      %p200 = scmp.ne.s32.totalorder %s193, %s196
      %p201 = scmp.eq.s32.totalorder %s19, 0
      %p202 = por %p200, %p201
      %p203 = scmp.ne.s32.totalorder %s193, %s196
      %p204 = scmp.eq.s32.totalorder %s24, 1
      %p205 = por %p203, %p204
      %p207 = scmp.ne.s32.totalorder %s196, %s206
      %p208 = scmp.eq.s32.totalorder %s24, 0
      %p209 = por %p207, %p208
      %p210 = scmp.le.s32.totalorder 1, %s19
      // Predicated region
      $region9: #{subcross_gmn_forward.1} parent=5 // pred_check
        %p211 = pneg %p210
      $region10: #{subcross_gmn_forward.1} parent=5 // pred_check_branch
        %213 = sbr.rel (%p211) target = $region12
      $region11: #{subcross_gmn_forward.1} parent=5 // pred_region
        %s214 = ssub.s32 %s19, 1
        // Predicated region
        $region13: #{subcross_gmn_forward.1} parent=11 // pred_check
          %p215 = pneg %p115
        $region14: #{subcross_gmn_forward.1} parent=11 // pred_check_branch
          %217 = sbr.rel (%p215) target = $region16
        $region15: #{subcross_gmn_forward.1} parent=11 // pred_region
          _
        $region16: #{subcross_gmn_forward.1} parent=11 // pred_fallthru
          _
        // Predicated region
        $region17: #{subcross_gmn_forward.1} parent=11 // pred_check
          %p218 = pneg %p129
        $region18: #{subcross_gmn_forward.1} parent=11 // pred_check_branch
          %220 = sbr.rel (%p218) target = $region20
        $region19: #{subcross_gmn_forward.1} parent=11 // pred_region
          _
        $region20: #{subcross_gmn_forward.1} parent=11 // pred_fallthru
          _
        // Predicated region
        $region21: #{subcross_gmn_forward.1} parent=11 // pred_check
          %p221 = pneg %p143
        $region22: #{subcross_gmn_forward.1} parent=11 // pred_check_branch
          %223 = sbr.rel (%p221) target = $region24
        $region23: #{subcross_gmn_forward.1} parent=11 // pred_region
          _
        $region24: #{subcross_gmn_forward.1} parent=11 // pred_fallthru
          _
        // Predicated region
        $region25: #{subcross_gmn_forward.1} parent=11 // pred_check
          %p224 = pneg %p157
        $region26: #{subcross_gmn_forward.1} parent=11 // pred_check_branch
          %226 = sbr.rel (%p224) target = $region28
        $region27: #{subcross_gmn_forward.1} parent=11 // pred_region
          %s228 = ssub.s32 64, 64
          %229 = vsyncadd [#allocation5], %s228
          %s231 = sshll.u32 %s7, 4
          %s232 = int_to_ptr.vmem [resolvable:$true] %s231
          %234 = dma.vmem_to_smem %s232, 64, [#allocation4], [#allocation5]
        $region28: #{subcross_gmn_forward.1} parent=11 // pred_fallthru
          _
        // Predicated region
        $region29: #{subcross_gmn_forward.1} parent=11 // pred_check
          %p235 = pneg %p171
        $region30: #{subcross_gmn_forward.1} parent=11 // pred_check_branch
          %237 = sbr.rel (%p235) target = $region32
        $region31: #{subcross_gmn_forward.1} parent=11 // pred_region
          %s239 = ssub.s32 64, 64
          %240 = vsyncadd [#allocation7], %s239
          %s242 = sshll.u32 %s8, 4
          %s243 = int_to_ptr.vmem [resolvable:$true] %s242
          %245 = dma.vmem_to_smem %s243, 64, [#allocation6], [#allocation7]
        $region32: #{subcross_gmn_forward.1} parent=11 // pred_fallthru
          _
      $region12: #{subcross_gmn_forward.1} parent=5 // pred_fallthru
        _
      %p246 = scmp.lt.s32.totalorder %s19, 2
      // Predicated region
      $region33: #{subcross_gmn_forward.1} parent=5 // pred_check
        %p247 = pneg %p246
      $region34: #{subcross_gmn_forward.1} parent=5 // pred_check_branch
        %249 = sbr.rel (%p247) target = $region36
      $region35: #{subcross_gmn_forward.1} parent=5 // pred_region
        // Predicated region
        $region37: #{subcross_gmn_forward.1} parent=35 // pred_check
          %p250 = pneg %p37
        $region38: #{subcross_gmn_forward.1} parent=35 // pred_check_branch
          %252 = sbr.rel (%p250) target = $region40
        $region39: #{subcross_gmn_forward.1} parent=35 // pred_region
          %p253 = scmp.lt.s32.totalorder %s19, 1
          %s254 = scalar_select %p253, %s19, 1
          %s255 = smul.addr %s254, 16
          %s256 = smul.addr %s255, 8
          %s257 = scalar_lea.vmem %s0, %s256
        $region40: #{subcross_gmn_forward.1} parent=35 // pred_fallthru
          _
        // Predicated region
        $region41: #{subcross_gmn_forward.1} parent=35 // pred_check
          %p258 = pneg %p56
        $region42: #{subcross_gmn_forward.1} parent=35 // pred_check_branch
          %260 = sbr.rel (%p258) target = $region44
        $region43: #{subcross_gmn_forward.1} parent=35 // pred_region
          %p261 = scmp.lt.s32.totalorder %s19, 1
          %s262 = scalar_select %p261, %s19, 1
          %s263 = smul.addr %s262, 8
          %s264 = scalar_lea.vmem %s1, %s263
        $region44: #{subcross_gmn_forward.1} parent=35 // pred_fallthru
          _
        // Predicated region
        $region45: #{subcross_gmn_forward.1} parent=35 // pred_check
          %p265 = pneg %p75
        $region46: #{subcross_gmn_forward.1} parent=35 // pred_check_branch
          %267 = sbr.rel (%p265) target = $region48
        $region47: #{subcross_gmn_forward.1} parent=35 // pred_region
          %p268 = scmp.lt.s32.totalorder %s19, 1
          %s269 = scalar_select %p268, %s19, 1
          %s270 = smul.addr %s269, 16
          %s271 = smul.addr %s270, 4
          %s272 = scalar_lea.vmem %s2, %s271
        $region48: #{subcross_gmn_forward.1} parent=35 // pred_fallthru
          _
        // Predicated region
        $region49: #{subcross_gmn_forward.1} parent=35 // pred_check
          %p273 = pneg %p94
        $region50: #{subcross_gmn_forward.1} parent=35 // pred_check_branch
          %275 = sbr.rel (%p273) target = $region52
        $region51: #{subcross_gmn_forward.1} parent=35 // pred_region
          %p276 = scmp.lt.s32.totalorder %s19, 1
          %s277 = scalar_select %p276, %s19, 1
          %s278 = smul.addr %s277, 4
          %s279 = scalar_lea.vmem %s3, %s278
        $region52: #{subcross_gmn_forward.1} parent=35 // pred_fallthru
          _
        // Predicated region
        $region53: #{subcross_gmn_forward.1} parent=35 // pred_check
          %p280 = pneg %p183
        $region54: #{subcross_gmn_forward.1} parent=35 // pred_check_branch
          %282 = sbr.rel (%p280) target = $region56
        $region55: #{subcross_gmn_forward.1} parent=35 // pred_region
          %p283 = scmp.lt.s32.totalorder %s19, 1
          %s284 = scalar_select %p283, %s19, 1
          %s285 = smul.addr %s284, 8
          %s286 = scalar_lea.vmem %s9, %s285
        $region56: #{subcross_gmn_forward.1} parent=35 // pred_fallthru
          _
        // Predicated region
        $region57: #{subcross_gmn_forward.1} parent=35 // pred_check
          %p287 = pneg %p202
        $region58: #{subcross_gmn_forward.1} parent=35 // pred_check_branch
          %289 = sbr.rel (%p287) target = $region60
        $region59: #{subcross_gmn_forward.1} parent=35 // pred_region
          %p290 = scmp.lt.s32.totalorder %s19, 1
          %s291 = scalar_select %p290, %s19, 1
          %s292 = smul.addr %s291, 8
          %s293 = scalar_lea.vmem %s10, %s292
        $region60: #{subcross_gmn_forward.1} parent=35 // pred_fallthru
          _
      $region36: #{subcross_gmn_forward.1} parent=5 // pred_fallthru
        _
      %p294 = scmp.le.s32.totalorder 1, %s19
      // Predicated region
      $region61: #{subcross_gmn_forward.1} parent=5 // pred_check
        %p295 = pneg %p294
      $region62: #{subcross_gmn_forward.1} parent=5 // pred_check_branch
        %297 = sbr.rel (%p295) target = $region64
      $region63: #{subcross_gmn_forward.1} parent=5 // pred_region
        %s298 = ssub.s32 %s19, 1
        // Predicated region
        $region65: #{subcross_gmn_forward.1} parent=63 // pred_check
          %p299 = pneg %p157
        $region66: #{subcross_gmn_forward.1} parent=63 // pred_check_branch
          %301 = sbr.rel (%p299) target = $region68
        $region67: #{subcross_gmn_forward.1} parent=63 // pred_region
          %302 = dma.done [#allocation5], 64
        $region68: #{subcross_gmn_forward.1} parent=63 // pred_fallthru
          _
        // Predicated region
        $region69: #{subcross_gmn_forward.1} parent=63 // pred_check
          %p303 = pneg %p171
        $region70: #{subcross_gmn_forward.1} parent=63 // pred_check_branch
          %305 = sbr.rel (%p303) target = $region72
        $region71: #{subcross_gmn_forward.1} parent=63 // pred_region
          %306 = dma.done [#allocation7], 64
        $region72: #{subcross_gmn_forward.1} parent=63 // pred_fallthru
          _
        %307 = sfence
        %p308 = scmp.lt.s32.totalorder %s24, 1
        %s309 = scalar_select %p308, %s24, 1
        %s310 = smul.addr %s309, 16
        %s311 = smul.addr %s310, 8
        %s312 = scalar_lea.vmem %s0, %s311
        %p313 = pneg %p44
        %p314 = pneg %p40
        %p315 = scmp.lt.s32.totalorder %s24, 1
        %s316 = scalar_select %p315, %s24, 1
        %s317 = smul.addr %s316, 8
        %s318 = scalar_lea.vmem %s1, %s317
        %p319 = pneg %p63
        %p320 = pneg %p59
        %p321 = scmp.lt.s32.totalorder %s24, 1
        %s322 = scalar_select %p321, %s24, 1
        %s323 = smul.addr %s322, 16
        %s324 = smul.addr %s323, 4
        %s325 = scalar_lea.vmem %s2, %s324
        %p326 = pneg %p82
        %p327 = pneg %p78
        %p328 = scmp.lt.s32.totalorder %s24, 1
        %s329 = scalar_select %p328, %s24, 1
        %s330 = smul.addr %s329, 4
        %s331 = scalar_lea.vmem %s3, %s330
        %p332 = pneg %p101
        %p333 = pneg %p97
        %p334 = pneg %p115
        %p335 = pneg %p111
        %p336 = pneg %p129
        %p337 = pneg %p125
        %p338 = pneg %p143
        %p339 = pneg %p139
        %p340 = pneg %p157
        %p341 = pneg %p153
        %p342 = pneg %p171
        %p343 = pneg %p167
        %p344 = scmp.lt.s32.totalorder %s24, 1
        %s345 = scalar_select %p344, %s24, 1
        %s346 = smul.addr %s345, 8
        %s347 = scalar_lea.vmem %s9, %s346
        %p348 = pneg %p190
        %p349 = pneg %p186
        %p350 = scmp.lt.s32.totalorder %s24, 1
        %s351 = scalar_select %p350, %s24, 1
        %s352 = smul.addr %s351, 8
        %s353 = scalar_lea.vmem %s10, %s352
        %p354 = pneg %p209
        %p355 = pneg %p205
        %p356 = scmp.lt.s32.totalorder %s24, 1
        %s357 = scalar_select %p356, %s24, 1
        %s358 = smul.addr %s357, 16
        %s359 = smul.addr %s358, 8
        %s360 = scalar_lea.vmem %s0, %s359
        %p361 = scmp.lt.s32.totalorder %s24, 1
        %s362 = scalar_select %p361, %s24, 1
        %s363 = smul.addr %s362, 8
        %s364 = scalar_lea.vmem %s1, %s363
        %p365 = scmp.lt.s32.totalorder %s24, 1
        %s366 = scalar_select %p365, %s24, 1
        %s367 = smul.addr %s366, 16
        %s368 = smul.addr %s367, 4
        %s369 = scalar_lea.vmem %s2, %s368
        %p370 = scmp.lt.s32.totalorder %s24, 1
        %s371 = scalar_select %p370, %s24, 1
        %s372 = smul.addr %s371, 4
        %s373 = scalar_lea.vmem %s3, %s372
        %p374 = scmp.lt.s32.totalorder %s24, 1
        %s375 = scalar_select %p374, %s24, 1
        %s376 = smul.addr %s375, 8
        %s377 = scalar_lea.vmem %s9, %s376
        %p378 = scmp.lt.s32.totalorder %s24, 1
        %s379 = scalar_select %p378, %s24, 1
        %s380 = smul.addr %s379, 8
        %s381 = scalar_lea.vmem %s10, %s380
        %v383 = vld [vmem:[%s377] sm:$0xff]
        %vm384 = vcmp.gt.f32.partialorder %v383, 0.0
        %v385 = vld [vmem:[%s381] sm:$0xff]
        %v386 = vld [vmem:[%s360] sm:$0xff]
        %v387 = vld [vmem:[%s360 + $0x8] sm:$0xff]
        %v388 = vld [vmem:[%s360 + $0x10] sm:$0xff]
        %v389 = vld [vmem:[%s360 + $0x18] sm:$0xff]
        %v390 = vld [vmem:[%s360 + $0x20] sm:$0xff]
        %v391 = vld [vmem:[%s360 + $0x28] sm:$0xff]
        %v392 = vld [vmem:[%s360 + $0x30] sm:$0xff]
        %v393 = vld [vmem:[%s360 + $0x38] sm:$0xff]
        %v394 = vld [vmem:[%s360 + $0x40] sm:$0xff]
        %v395 = vld [vmem:[%s360 + $0x48] sm:$0xff]
        %v396 = vld [vmem:[%s360 + $0x50] sm:$0xff]
        %v397 = vld [vmem:[%s360 + $0x58] sm:$0xff]
        %v398 = vld [vmem:[%s360 + $0x60] sm:$0xff]
        %v399 = vld [vmem:[%s360 + $0x68] sm:$0xff]
        %v400 = vld [vmem:[%s360 + $0x70] sm:$0xff]
        %v401 = vld [vmem:[%s360 + $0x78] sm:$0xff]
        %v402 = vld [vmem:[%s364] sm:$0xff]
        %v403 = vld [vmem:[%s4] sm:$0xf]
        %v404 = vld [vmem:[%s4 + $0x4] sm:$0xf]
        %v405 = vld [vmem:[%s4 + $0x8] sm:$0xf]
        %v406 = vld [vmem:[%s4 + $0xc] sm:$0xf]
        %v407 = vld [vmem:[%s4 + $0x10] sm:$0xf]
        %v408 = vld [vmem:[%s4 + $0x14] sm:$0xf]
        %v409 = vld [vmem:[%s4 + $0x18] sm:$0xf]
        %v410 = vld [vmem:[%s4 + $0x1c] sm:$0xf]
        %v411 = vld [vmem:[%s4 + $0x20] sm:$0xf]
        %v412 = vld [vmem:[%s4 + $0x24] sm:$0xf]
        %v413 = vld [vmem:[%s4 + $0x28] sm:$0xf]
        %v414 = vld [vmem:[%s4 + $0x2c] sm:$0xf]
        %v415 = vld [vmem:[%s4 + $0x30] sm:$0xf]
        %v416 = vld [vmem:[%s4 + $0x34] sm:$0xf]
        %v417 = vld [vmem:[%s4 + $0x38] sm:$0xf]
        %v418 = vld [vmem:[%s4 + $0x3c] sm:$0xf]
        %v419 = vld [vmem:[%s5] sm:$0xf]
        %v420 = vld [vmem:[%s5 + $0x4] sm:$0xf]
        %v421 = vld [vmem:[%s5 + $0x8] sm:$0xf]
        %v422 = vld [vmem:[%s5 + $0xc] sm:$0xf]
        %v423 = vld [vmem:[%s5 + $0x10] sm:$0xf]
        %v424 = vld [vmem:[%s5 + $0x14] sm:$0xf]
        %v425 = vld [vmem:[%s5 + $0x18] sm:$0xf]
        %v426 = vld [vmem:[%s5 + $0x1c] sm:$0xf]
        %v427 = vld [vmem:[%s5 + $0x20] sm:$0xf]
        %v428 = vld [vmem:[%s5 + $0x24] sm:$0xf]
        %v429 = vld [vmem:[%s5 + $0x28] sm:$0xf]
        %v430 = vld [vmem:[%s5 + $0x2c] sm:$0xf]
        %v431 = vld [vmem:[%s5 + $0x30] sm:$0xf]
        %v432 = vld [vmem:[%s5 + $0x34] sm:$0xf]
        %v433 = vld [vmem:[%s5 + $0x38] sm:$0xf]
        %v434 = vld [vmem:[%s5 + $0x3c] sm:$0xf]
        %v435 = vld [vmem:[%s6] sm:$0x1]
        %v436 = vpack.c.bf16 %v387, %v386
        %v437 = vpack.c.bf16 %v389, %v388
        %v438 = vpack.c.bf16 %v391, %v390
        %v439 = vpack.c.bf16 %v393, %v392
        %v440 = vpack.c.bf16 %v395, %v394
        %v441 = vpack.c.bf16 %v397, %v396
        %v442 = vpack.c.bf16 %v399, %v398
        %v443 = vpack.c.bf16 %v401, %v400
        %v444 = vpack.c.bf16 %v402, %v402
        %v445 = vld [vmem:[%s369] sm:$0xf]
        %v446 = vld [vmem:[%s369 + $0x4] sm:$0xf]
        %v447 = vld [vmem:[%s369 + $0x8] sm:$0xf]
        %v448 = vld [vmem:[%s369 + $0xc] sm:$0xf]
        %v449 = vld [vmem:[%s369 + $0x10] sm:$0xf]
        %v450 = vld [vmem:[%s369 + $0x14] sm:$0xf]
        %v451 = vld [vmem:[%s369 + $0x18] sm:$0xf]
        %v452 = vld [vmem:[%s369 + $0x1c] sm:$0xf]
        %v453 = vld [vmem:[%s369 + $0x20] sm:$0xf]
        %v454 = vld [vmem:[%s369 + $0x24] sm:$0xf]
        %v455 = vld [vmem:[%s369 + $0x28] sm:$0xf]
        %v456 = vld [vmem:[%s369 + $0x2c] sm:$0xf]
        %v457 = vld [vmem:[%s369 + $0x30] sm:$0xf]
        %v458 = vld [vmem:[%s369 + $0x34] sm:$0xf]
        %v459 = vld [vmem:[%s369 + $0x38] sm:$0xf]
        %v460 = vld [vmem:[%s369 + $0x3c] sm:$0xf]
        %v477 = vunpack.c.l.b16 %v445
        %v478 = vunpack.c.l.b16 %v446
        %v479 = vunpack.c.l.b16 %v447
        %v480 = vunpack.c.l.b16 %v448
        %v481 = vunpack.c.l.b16 %v449
        %v482 = vunpack.c.l.b16 %v450
        %v483 = vunpack.c.l.b16 %v451
        %v484 = vunpack.c.l.b16 %v452
        %v485 = vunpack.c.l.b16 %v453
        %v486 = vunpack.c.l.b16 %v454
        %v487 = vunpack.c.l.b16 %v455
        %v488 = vunpack.c.l.b16 %v456
        %v489 = vunpack.c.l.b16 %v457
        %v490 = vunpack.c.l.b16 %v458
        %v491 = vunpack.c.l.b16 %v459
        %v492 = vunpack.c.l.b16 %v460
        %v493 = vpack.c.b16 %v478, %v477
        %v494 = vpack.c.b16 %v480, %v479
        %v495 = vpack.c.b16 %v482, %v481
        %v496 = vpack.c.b16 %v484, %v483
        %v497 = vpack.c.b16 %v486, %v485
        %v498 = vpack.c.b16 %v488, %v487
        %v499 = vpack.c.b16 %v490, %v489
        %v500 = vpack.c.b16 %v492, %v491
        %509 = vmatprep.subr.bf16.mxu0 0
        %510 = vmatpush1.bf16.msra.mxu0 %v436
        %511 = vmatprep.subr.bf16.mxu0 0
        %512 = vmatpush1.bf16.msra.mxu0 %v437
        %513 = vmatprep.subr.bf16.mxu0 0
        %514 = vmatpush1.bf16.msra.mxu0 %v438
        %515 = vmatprep.subr.bf16.mxu0 0
        %516 = vmatpush1.bf16.msra.mxu0 %v439
        %517 = vmatprep.subr.bf16.mxu0 0
        %518 = vmatpush1.bf16.msra.mxu0 %v440
        %519 = vmatprep.subr.bf16.mxu0 0
        %520 = vmatpush1.bf16.msra.mxu0 %v441
        %521 = vmatprep.subr.bf16.mxu0 0
        %522 = vmatpush1.bf16.msra.mxu0 %v442
        %523 = vmatprep.subr.bf16.mxu0 0
        %524 = vmatpush1.bf16.msra.mxu0 %v443
        %525 = vmatprep.subr.bf16.mxu0 0
        %526 = vmatpush1.bf16.msra.mxu0 0
        %527 = vmatprep.subr.bf16.mxu0 0
        %528 = vmatpush1.bf16.msra.mxu0 0
        %529 = vmatprep.subr.bf16.mxu0 0
        %530 = vmatpush1.bf16.msra.mxu0 0
        %531 = vmatprep.subr.bf16.mxu0 0
        %532 = vmatpush1.bf16.msra.mxu0 0
        %533 = vmatprep.subr.bf16.mxu0 0
        %534 = vmatpush1.bf16.msra.mxu0 0
        %535 = vmatprep.subr.bf16.mxu0 0
        %536 = vmatpush1.bf16.msra.mxu0 0
        %537 = vmatprep.subr.bf16.mxu0 0
        %538 = vmatpush1.bf16.msra.mxu0 0
        %539 = vmatprep.subr.bf16.mxu0 0
        %540 = vmatpush1.bf16.msra.mxu0 0
        %541 = vmatprep.mubr.bf16.mxu0 0
        %542 = vmatmul.mubr.bf16.gmra.mrb[0].mxu0 %v493
        %v543 = vpop.f32.mrb[0].mxu0
        %v544 = vadd.f32 0.0, %v543
        %v545 = vpop.f32.mrb[0].mxu0
        %v546 = vpop.f32.mrb[0].mxu0
        %v547 = vadd.f32 0.0, %v546
        %v548 = vpop.f32.mrb[0].mxu0
        %549 = vmatprep.mubr.bf16.mxu0 0
        %550 = vmatmul.mubr.bf16.gmra.mrb[0].mxu0 %v494
        %v551 = vpop.f32.mrb[0].mxu0
        %v552 = vadd.f32 0.0, %v551
        %v553 = vpop.f32.mrb[0].mxu0
        %v554 = vpop.f32.mrb[0].mxu0
        %v555 = vadd.f32 0.0, %v554
        %v556 = vpop.f32.mrb[0].mxu0
        %557 = vmatprep.mubr.bf16.mxu0 0
        %558 = vmatmul.mubr.bf16.gmra.mrb[0].mxu0 %v495
        %v559 = vpop.f32.mrb[0].mxu0
        %v560 = vadd.f32 0.0, %v559
        %v561 = vpop.f32.mrb[0].mxu0
        %v562 = vpop.f32.mrb[0].mxu0
        %v563 = vadd.f32 0.0, %v562
        %v564 = vpop.f32.mrb[0].mxu0
        %565 = vmatprep.mubr.bf16.mxu0 0
        %566 = vmatmul.mubr.bf16.gmra.mrb[0].mxu0 %v496
        %v567 = vpop.f32.mrb[0].mxu0
        %v568 = vadd.f32 0.0, %v567
        %v569 = vpop.f32.mrb[0].mxu0
        %v570 = vpop.f32.mrb[0].mxu0
        %v571 = vadd.f32 0.0, %v570
        %v572 = vpop.f32.mrb[0].mxu0
        %573 = vmatprep.mubr.bf16.mxu0 0
        %574 = vmatmul.mubr.bf16.gmra.mrb[0].mxu0 %v497
        %v575 = vpop.f32.mrb[0].mxu0
        %v576 = vadd.f32 0.0, %v575
        %v577 = vpop.f32.mrb[0].mxu0
        %v578 = vpop.f32.mrb[0].mxu0
        %v579 = vadd.f32 0.0, %v578
        %v580 = vpop.f32.mrb[0].mxu0
        %581 = vmatprep.mubr.bf16.mxu0 0
        %582 = vmatmul.mubr.bf16.gmra.mrb[0].mxu0 %v498
        %v583 = vpop.f32.mrb[0].mxu0
        %v584 = vadd.f32 0.0, %v583
        %v585 = vpop.f32.mrb[0].mxu0
        %v586 = vpop.f32.mrb[0].mxu0
        %v587 = vadd.f32 0.0, %v586
        %v588 = vpop.f32.mrb[0].mxu0
        %589 = vmatprep.mubr.bf16.mxu0 0
        %590 = vmatmul.mubr.bf16.gmra.mrb[0].mxu0 %v499
        %v591 = vpop.f32.mrb[0].mxu0
        %v592 = vadd.f32 0.0, %v591
        %v593 = vpop.f32.mrb[0].mxu0
        %v594 = vpop.f32.mrb[0].mxu0
        %v595 = vadd.f32 0.0, %v594
        %v596 = vpop.f32.mrb[0].mxu0
        %597 = vmatprep.mubr.bf16.mxu0 0
        %598 = vmatmul.mubr.bf16.gmra.mrb[0].mxu0 %v500
        %v599 = vpop.f32.mrb[0].mxu0
        %v600 = vadd.f32 0.0, %v599
        %v601 = vpop.f32.mrb[0].mxu0
        %v602 = vpop.f32.mrb[0].mxu0
        %v603 = vadd.f32 0.0, %v602
        %v604 = vpop.f32.mrb[0].mxu0
        %605 = vdwg.mxu0
        %v606 = vld [vmem:[%s373] sm:$0xf]
        %vm607 = vcmask 64512
        %v609 = vsel %vm607, %v606, 0
        %vm611 = vcmask 1043456
        %v613 = vsel %vm611, %v444, 0
        %615 = vmatprep.subr.bf16.mxu0 0
        %616 = vmatpush1.bf16.msra.mxu0 %v613
        %617 = vmatprep.subr.bf16.mxu0 0
        %618 = vmatpush1.bf16.msra.mxu0 0
        %619 = vmatprep.subr.bf16.mxu0 0
        %620 = vmatpush1.bf16.msra.mxu0 0
        %621 = vmatprep.subr.bf16.mxu0 0
        %622 = vmatpush1.bf16.msra.mxu0 0
        %623 = vmatprep.subr.bf16.mxu0 0
        %624 = vmatpush1.bf16.msra.mxu0 0
        %625 = vmatprep.subr.bf16.mxu0 0
        %626 = vmatpush1.bf16.msra.mxu0 0
        %627 = vmatprep.subr.bf16.mxu0 0
        %628 = vmatpush1.bf16.msra.mxu0 0
        %629 = vmatprep.subr.bf16.mxu0 0
        %630 = vmatpush1.bf16.msra.mxu0 0
        %631 = vmatprep.subr.bf16.mxu0 0
        %632 = vmatpush1.bf16.msra.mxu0 0
        %633 = vmatprep.subr.bf16.mxu0 0
        %634 = vmatpush1.bf16.msra.mxu0 0
        %635 = vmatprep.subr.bf16.mxu0 0
        %636 = vmatpush1.bf16.msra.mxu0 0
        %637 = vmatprep.subr.bf16.mxu0 0
        %638 = vmatpush1.bf16.msra.mxu0 0
        %639 = vmatprep.subr.bf16.mxu0 0
        %640 = vmatpush1.bf16.msra.mxu0 0
        %641 = vmatprep.subr.bf16.mxu0 0
        %642 = vmatpush1.bf16.msra.mxu0 0
        %643 = vmatprep.subr.bf16.mxu0 0
        %644 = vmatpush1.bf16.msra.mxu0 0
        %645 = vmatprep.subr.bf16.mxu0 0
        %646 = vmatpush1.bf16.msra.mxu0 0
        %647 = vmatprep.mubr.bf16.mxu0 0
        %648 = vmatmul.mubr.bf16.gmra.mrb[0].mxu0 %v609
        %v649 = vpop.f32.mrb[0].mxu0
        %v650 = vadd.f32 0.0, %v649
        %v651 = vpop.f32.mrb[0].mxu0
        %v652 = vpop.f32.mrb[0].mxu0
        %v653 = vpop.f32.mrb[0].mxu0
        %654 = vdwg.mxu0
        %v655 = vpack.c.bf16 %v547, %v544
        %v656 = vpack.c.bf16 %v555, %v552
        %v657 = vpack.c.bf16 %v563, %v560
        %v658 = vpack.c.bf16 %v571, %v568
        %v659 = vpack.c.bf16 %v579, %v576
        %v660 = vpack.c.bf16 %v587, %v584
        %v661 = vpack.c.bf16 %v595, %v592
        %v662 = vpack.c.bf16 %v603, %v600
        %v679 = vunpack.c.l.b16 %v419
        %v680 = vunpack.c.l.b16 %v420
        %v681 = vunpack.c.l.b16 %v421
        %v682 = vunpack.c.l.b16 %v422
        %v683 = vunpack.c.l.b16 %v423
        %v684 = vunpack.c.l.b16 %v424
        %v685 = vunpack.c.l.b16 %v425
        %v686 = vunpack.c.l.b16 %v426
        %v687 = vunpack.c.l.b16 %v427
        %v688 = vunpack.c.l.b16 %v428
        %v689 = vunpack.c.l.b16 %v429
        %v690 = vunpack.c.l.b16 %v430
        %v691 = vunpack.c.l.b16 %v431
        %v692 = vunpack.c.l.b16 %v432
        %v693 = vunpack.c.l.b16 %v433
        %v694 = vunpack.c.l.b16 %v434
        %v695 = vpack.c.b16 %v680, %v679
        %v696 = vpack.c.b16 %v682, %v681
        %v697 = vpack.c.b16 %v684, %v683
        %v698 = vpack.c.b16 %v686, %v685
        %v699 = vpack.c.b16 %v688, %v687
        %v700 = vpack.c.b16 %v690, %v689
        %v701 = vpack.c.b16 %v692, %v691
        %v702 = vpack.c.b16 %v694, %v693
        %711 = vmatprep.subr.bf16.mxu0 0
        %712 = vmatpush1.bf16.msra.mxu0 %v695
        %713 = vmatprep.subr.bf16.mxu0 0
        %714 = vmatpush1.bf16.msra.mxu0 %v696
        %715 = vmatprep.subr.bf16.mxu0 0
        %716 = vmatpush1.bf16.msra.mxu0 %v697
        %717 = vmatprep.subr.bf16.mxu0 0
        %718 = vmatpush1.bf16.msra.mxu0 %v698
        %719 = vmatprep.subr.bf16.mxu0 0
        %720 = vmatpush1.bf16.msra.mxu0 %v699
        %721 = vmatprep.subr.bf16.mxu0 0
        %722 = vmatpush1.bf16.msra.mxu0 %v700
        %723 = vmatprep.subr.bf16.mxu0 0
        %724 = vmatpush1.bf16.msra.mxu0 %v701
        %725 = vmatprep.subr.bf16.mxu0 0
        %726 = vmatpush1.bf16.msra.mxu0 %v702
        %727 = vmatprep.subr.bf16.mxu0 0
        %728 = vmatpush1.bf16.msra.mxu0 0
        %729 = vmatprep.subr.bf16.mxu0 0
        %730 = vmatpush1.bf16.msra.mxu0 0
        %731 = vmatprep.subr.bf16.mxu0 0
        %732 = vmatpush1.bf16.msra.mxu0 0
        %733 = vmatprep.subr.bf16.mxu0 0
        %734 = vmatpush1.bf16.msra.mxu0 0
        %735 = vmatprep.subr.bf16.mxu0 0
        %736 = vmatpush1.bf16.msra.mxu0 0
        %737 = vmatprep.subr.bf16.mxu0 0
        %738 = vmatpush1.bf16.msra.mxu0 0
        %739 = vmatprep.subr.bf16.mxu0 0
        %740 = vmatpush1.bf16.msra.mxu0 0
        %741 = vmatprep.subr.bf16.mxu0 0
        %742 = vmatpush1.bf16.msra.mxu0 0
        %743 = vmatprep.mubr.bf16.mxu0 0
        %744 = vmatmul.mubr.bf16.gmra.mrb[0].mxu0 %v436
        %v745 = vpop.f32.mrb[0].mxu0
        %v746 = vadd.f32 0.0, %v745
        %v747 = vpop.f32.mrb[0].mxu0
        %v748 = vpop.f32.mrb[0].mxu0
        %v749 = vadd.f32 0.0, %v748
        %v750 = vpop.f32.mrb[0].mxu0
        %751 = vmatprep.mubr.bf16.mxu0 0
        %752 = vmatmul.mubr.bf16.gmra.mrb[0].mxu0 %v437
        %v753 = vpop.f32.mrb[0].mxu0
        %v754 = vadd.f32 0.0, %v753
        %v755 = vpop.f32.mrb[0].mxu0
        %v756 = vpop.f32.mrb[0].mxu0
        %v757 = vadd.f32 0.0, %v756
        %v758 = vpop.f32.mrb[0].mxu0
        %759 = vmatprep.mubr.bf16.mxu0 0
        %760 = vmatmul.mubr.bf16.gmra.mrb[0].mxu0 %v438
        %v761 = vpop.f32.mrb[0].mxu0
        %v762 = vadd.f32 0.0, %v761
        %v763 = vpop.f32.mrb[0].mxu0
        %v764 = vpop.f32.mrb[0].mxu0
        %v765 = vadd.f32 0.0, %v764
        %v766 = vpop.f32.mrb[0].mxu0
        %767 = vmatprep.mubr.bf16.mxu0 0
        %768 = vmatmul.mubr.bf16.gmra.mrb[0].mxu0 %v439
        %v769 = vpop.f32.mrb[0].mxu0
        %v770 = vadd.f32 0.0, %v769
        %v771 = vpop.f32.mrb[0].mxu0
        %v772 = vpop.f32.mrb[0].mxu0
        %v773 = vadd.f32 0.0, %v772
        %v774 = vpop.f32.mrb[0].mxu0
        %775 = vmatprep.mubr.bf16.mxu0 0
        %776 = vmatmul.mubr.bf16.gmra.mrb[0].mxu0 %v440
        %v777 = vpop.f32.mrb[0].mxu0
        %v778 = vadd.f32 0.0, %v777
        %v779 = vpop.f32.mrb[0].mxu0
        %v780 = vpop.f32.mrb[0].mxu0
        %v781 = vadd.f32 0.0, %v780
        %v782 = vpop.f32.mrb[0].mxu0
        %783 = vmatprep.mubr.bf16.mxu0 0
        %784 = vmatmul.mubr.bf16.gmra.mrb[0].mxu0 %v441
        %v785 = vpop.f32.mrb[0].mxu0
        %v786 = vadd.f32 0.0, %v785
        %v787 = vpop.f32.mrb[0].mxu0
        %v788 = vpop.f32.mrb[0].mxu0
        %v789 = vadd.f32 0.0, %v788
        %v790 = vpop.f32.mrb[0].mxu0
        %791 = vmatprep.mubr.bf16.mxu0 0
        %792 = vmatmul.mubr.bf16.gmra.mrb[0].mxu0 %v442
        %v793 = vpop.f32.mrb[0].mxu0
        %v794 = vadd.f32 0.0, %v793
        %v795 = vpop.f32.mrb[0].mxu0
        %v796 = vpop.f32.mrb[0].mxu0
        %v797 = vadd.f32 0.0, %v796
        %v798 = vpop.f32.mrb[0].mxu0
        %799 = vmatprep.mubr.bf16.mxu0 0
        %800 = vmatmul.mubr.bf16.gmra.mrb[0].mxu0 %v443
        %v801 = vpop.f32.mrb[0].mxu0
        %v802 = vadd.f32 0.0, %v801
        %v803 = vpop.f32.mrb[0].mxu0
        %v804 = vpop.f32.mrb[0].mxu0
        %v805 = vadd.f32 0.0, %v804
        %v806 = vpop.f32.mrb[0].mxu0
        %807 = vdwg.mxu0
        %v824 = vunpack.c.l.b16 %v403
        %v825 = vunpack.c.l.b16 %v404
        %v826 = vunpack.c.l.b16 %v405
        %v827 = vunpack.c.l.b16 %v406
        %v828 = vunpack.c.l.b16 %v407
        %v829 = vunpack.c.l.b16 %v408
        %v830 = vunpack.c.l.b16 %v409
        %v831 = vunpack.c.l.b16 %v410
        %v832 = vunpack.c.l.b16 %v411
        %v833 = vunpack.c.l.b16 %v412
        %v834 = vunpack.c.l.b16 %v413
        %v835 = vunpack.c.l.b16 %v414
        %v836 = vunpack.c.l.b16 %v415
        %v837 = vunpack.c.l.b16 %v416
        %v838 = vunpack.c.l.b16 %v417
        %v839 = vunpack.c.l.b16 %v418
        %v840 = vpack.c.b16 %v825, %v824
        %v841 = vpack.c.b16 %v827, %v826
        %v842 = vpack.c.b16 %v829, %v828
        %v843 = vpack.c.b16 %v831, %v830
        %v844 = vpack.c.b16 %v833, %v832
        %v845 = vpack.c.b16 %v835, %v834
        %v846 = vpack.c.b16 %v837, %v836
        %v847 = vpack.c.b16 %v839, %v838
        %856 = vmatprep.subr.bf16.mxu0 0
        %857 = vmatpush1.bf16.msra.mxu0 %v840
        %858 = vmatprep.subr.bf16.mxu0 0
        %859 = vmatpush1.bf16.msra.mxu0 %v841
        %860 = vmatprep.subr.bf16.mxu0 0
        %861 = vmatpush1.bf16.msra.mxu0 %v842
        %862 = vmatprep.subr.bf16.mxu0 0
        %863 = vmatpush1.bf16.msra.mxu0 %v843
        %864 = vmatprep.subr.bf16.mxu0 0
        %865 = vmatpush1.bf16.msra.mxu0 %v844
        %866 = vmatprep.subr.bf16.mxu0 0
        %867 = vmatpush1.bf16.msra.mxu0 %v845
        %868 = vmatprep.subr.bf16.mxu0 0
        %869 = vmatpush1.bf16.msra.mxu0 %v846
        %870 = vmatprep.subr.bf16.mxu0 0
        %871 = vmatpush1.bf16.msra.mxu0 %v847
        %872 = vmatprep.subr.bf16.mxu0 0
        %873 = vmatpush1.bf16.msra.mxu0 0
        %874 = vmatprep.subr.bf16.mxu0 0
        %875 = vmatpush1.bf16.msra.mxu0 0
        %876 = vmatprep.subr.bf16.mxu0 0
        %877 = vmatpush1.bf16.msra.mxu0 0
        %878 = vmatprep.subr.bf16.mxu0 0
        %879 = vmatpush1.bf16.msra.mxu0 0
        %880 = vmatprep.subr.bf16.mxu0 0
        %881 = vmatpush1.bf16.msra.mxu0 0
        %882 = vmatprep.subr.bf16.mxu0 0
        %883 = vmatpush1.bf16.msra.mxu0 0
        %884 = vmatprep.subr.bf16.mxu0 0
        %885 = vmatpush1.bf16.msra.mxu0 0
        %886 = vmatprep.subr.bf16.mxu0 0
        %887 = vmatpush1.bf16.msra.mxu0 0
        %888 = vmatprep.mubr.bf16.mxu0 0
        %889 = vmatmul.mubr.bf16.gmra.mrb[0].mxu0 %v655
        %v890 = vpop.f32.mrb[0].mxu0
        %v891 = vadd.f32 %v746, %v890
        %v892 = vpop.f32.mrb[0].mxu0
        %v893 = vpop.f32.mrb[0].mxu0
        %v894 = vadd.f32 %v749, %v893
        %v895 = vpop.f32.mrb[0].mxu0
        %896 = vmatprep.mubr.bf16.mxu0 0
        %897 = vmatmul.mubr.bf16.gmra.mrb[0].mxu0 %v656
        %v898 = vpop.f32.mrb[0].mxu0
        %v899 = vadd.f32 %v754, %v898
        %v900 = vpop.f32.mrb[0].mxu0
        %v901 = vpop.f32.mrb[0].mxu0
        %v902 = vadd.f32 %v757, %v901
        %v903 = vpop.f32.mrb[0].mxu0
        %904 = vmatprep.mubr.bf16.mxu0 0
        %905 = vmatmul.mubr.bf16.gmra.mrb[0].mxu0 %v657
        %v906 = vpop.f32.mrb[0].mxu0
        %v907 = vadd.f32 %v762, %v906
        %v908 = vpop.f32.mrb[0].mxu0
        %v909 = vpop.f32.mrb[0].mxu0
        %v910 = vadd.f32 %v765, %v909
        %v911 = vpop.f32.mrb[0].mxu0
        %912 = vmatprep.mubr.bf16.mxu0 0
        %913 = vmatmul.mubr.bf16.gmra.mrb[0].mxu0 %v658
        %v914 = vpop.f32.mrb[0].mxu0
        %v915 = vadd.f32 %v770, %v914
        %v916 = vpop.f32.mrb[0].mxu0
        %v917 = vpop.f32.mrb[0].mxu0
        %v918 = vadd.f32 %v773, %v917
        %v919 = vpop.f32.mrb[0].mxu0
        %920 = vmatprep.mubr.bf16.mxu0 0
        %921 = vmatmul.mubr.bf16.gmra.mrb[0].mxu0 %v659
        %v922 = vpop.f32.mrb[0].mxu0
        %v923 = vadd.f32 %v778, %v922
        %v924 = vpop.f32.mrb[0].mxu0
        %v925 = vpop.f32.mrb[0].mxu0
        %v926 = vadd.f32 %v781, %v925
        %v927 = vpop.f32.mrb[0].mxu0
        %928 = vmatprep.mubr.bf16.mxu0 0
        %929 = vmatmul.mubr.bf16.gmra.mrb[0].mxu0 %v660
        %v930 = vpop.f32.mrb[0].mxu0
        %v931 = vadd.f32 %v786, %v930
        %v932 = vpop.f32.mrb[0].mxu0
        %v933 = vpop.f32.mrb[0].mxu0
        %v934 = vadd.f32 %v789, %v933
        %v935 = vpop.f32.mrb[0].mxu0
        %936 = vmatprep.mubr.bf16.mxu0 0
        %937 = vmatmul.mubr.bf16.gmra.mrb[0].mxu0 %v661
        %v938 = vpop.f32.mrb[0].mxu0
        %v939 = vadd.f32 %v794, %v938
        %v940 = vpop.f32.mrb[0].mxu0
        %v941 = vpop.f32.mrb[0].mxu0
        %v942 = vadd.f32 %v797, %v941
        %v943 = vpop.f32.mrb[0].mxu0
        %944 = vmatprep.mubr.bf16.mxu0 0
        %945 = vmatmul.mubr.bf16.gmra.mrb[0].mxu0 %v662
        %v946 = vpop.f32.mrb[0].mxu0
        %v947 = vadd.f32 %v802, %v946
        %v948 = vpop.f32.mrb[0].mxu0
        %v949 = vpop.f32.mrb[0].mxu0
        %v950 = vadd.f32 %v805, %v949
        %v951 = vpop.f32.mrb[0].mxu0
        %952 = vdwg.mxu0
        %v954 = vlaneseq
        %v955 = vshrl.u32 %v954, 7
        %v956 = vsub.s32 0, %v955
        %v957 = vrot.slane %v435, %v956
        %v959 = vadd.f32 %v891, %v957
        %v960 = vadd.f32 %v894, %v957
        %v961 = vadd.f32 %v899, %v957
        %v962 = vadd.f32 %v902, %v957
        %v963 = vadd.f32 %v907, %v957
        %v964 = vadd.f32 %v910, %v957
        %v965 = vadd.f32 %v915, %v957
        %v966 = vadd.f32 %v918, %v957
        %v967 = vadd.f32 %v923, %v957
        %v968 = vadd.f32 %v926, %v957
        %v969 = vadd.f32 %v931, %v957
        %v970 = vadd.f32 %v934, %v957
        %v971 = vadd.f32 %v939, %v957
        %v972 = vadd.f32 %v942, %v957
        %v973 = vadd.f32 %v947, %v957
        %v974 = vadd.f32 %v950, %v957
        %vm975 = vcmp.gt.f32.partialorder %v959, 0.0
        %vm976 = vcmp.gt.f32.partialorder %v960, 0.0
        %vm977 = vcmp.gt.f32.partialorder %v961, 0.0
        %vm978 = vcmp.gt.f32.partialorder %v962, 0.0
        %vm979 = vcmp.gt.f32.partialorder %v963, 0.0
        %vm980 = vcmp.gt.f32.partialorder %v964, 0.0
        %vm981 = vcmp.gt.f32.partialorder %v965, 0.0
        %vm982 = vcmp.gt.f32.partialorder %v966, 0.0
        %vm983 = vcmp.gt.f32.partialorder %v967, 0.0
        %vm984 = vcmp.gt.f32.partialorder %v968, 0.0
        %vm985 = vcmp.gt.f32.partialorder %v969, 0.0
        %vm986 = vcmp.gt.f32.partialorder %v970, 0.0
        %vm987 = vcmp.gt.f32.partialorder %v971, 0.0
        %vm988 = vcmp.gt.f32.partialorder %v972, 0.0
        %vm989 = vcmp.gt.f32.partialorder %v973, 0.0
        %vm990 = vcmp.gt.f32.partialorder %v974, 0.0
        %v991 = vmul.f32 %v959, 1.442695
        %v992 = vpow.pop %v991
        %v993 = vmul.f32 %v960, 1.442695
        %v994 = vpow.pop %v993
        %v995 = vmul.f32 %v961, 1.442695
        %v996 = vpow.pop %v995
        %v997 = vmul.f32 %v962, 1.442695
        %v998 = vpow.pop %v997
        %v999 = vmul.f32 %v963, 1.442695
        %v1000 = vpow.pop %v999
        %v1001 = vmul.f32 %v964, 1.442695
        %v1002 = vpow.pop %v1001
        %v1003 = vmul.f32 %v965, 1.442695
        %v1004 = vpow.pop %v1003
        %v1005 = vmul.f32 %v966, 1.442695
        %v1006 = vpow.pop %v1005
        %v1007 = vmul.f32 %v967, 1.442695
        %v1008 = vpow.pop %v1007
        %v1009 = vmul.f32 %v968, 1.442695
        %v1010 = vpow.pop %v1009
        %v1011 = vmul.f32 %v969, 1.442695
        %v1012 = vpow.pop %v1011
        %v1013 = vmul.f32 %v970, 1.442695
        %v1014 = vpow.pop %v1013
        %v1015 = vmul.f32 %v971, 1.442695
        %v1016 = vpow.pop %v1015
        %v1017 = vmul.f32 %v972, 1.442695
        %v1018 = vpow.pop %v1017
        %v1019 = vmul.f32 %v973, 1.442695
        %v1020 = vpow.pop %v1019
        %v1021 = vmul.f32 %v974, 1.442695
        %v1022 = vpow.pop %v1021
        %v1023 = vsub.f32 %v992, 1.0
        %v1024 = vsub.f32 %v994, 1.0
        %v1025 = vsub.f32 %v996, 1.0
        %v1026 = vsub.f32 %v998, 1.0
        %v1027 = vsub.f32 %v1000, 1.0
        %v1028 = vsub.f32 %v1002, 1.0
        %v1029 = vsub.f32 %v1004, 1.0
        %v1030 = vsub.f32 %v1006, 1.0
        %v1031 = vsub.f32 %v1008, 1.0
        %v1032 = vsub.f32 %v1010, 1.0
        %v1033 = vsub.f32 %v1012, 1.0
        %v1034 = vsub.f32 %v1014, 1.0
        %v1035 = vsub.f32 %v1016, 1.0
        %v1036 = vsub.f32 %v1018, 1.0
        %v1037 = vsub.f32 %v1020, 1.0
        %v1038 = vsub.f32 %v1022, 1.0
        %v1039 = vsel %vm975, %v959, %v1023
        %v1040 = vsel %vm976, %v960, %v1024
        %v1041 = vsel %vm977, %v961, %v1025
        %v1042 = vsel %vm978, %v962, %v1026
        %v1043 = vsel %vm979, %v963, %v1027
        %v1044 = vsel %vm980, %v964, %v1028
        %v1045 = vsel %vm981, %v965, %v1029
        %v1046 = vsel %vm982, %v966, %v1030
        %v1047 = vsel %vm983, %v967, %v1031
        %v1048 = vsel %vm984, %v968, %v1032
        %v1049 = vsel %vm985, %v969, %v1033
        %v1050 = vsel %vm986, %v970, %v1034
        %v1051 = vsel %vm987, %v971, %v1035
        %v1052 = vsel %vm988, %v972, %v1036
        %v1053 = vsel %vm989, %v973, %v1037
        %v1054 = vsel %vm990, %v974, %v1038
        %v1055 = vpack.c.bf16 %v650, %v650
        %1056 = vmatprep.subr.bf16.mxu0 0
        %1057 = vmatpush1.bf16.msra.mxu0 %v695
        %1058 = vmatprep.subr.bf16.mxu0 0
        %1059 = vmatpush1.bf16.msra.mxu0 %v696
        %1060 = vmatprep.subr.bf16.mxu0 0
        %1061 = vmatpush1.bf16.msra.mxu0 %v697
        %1062 = vmatprep.subr.bf16.mxu0 0
        %1063 = vmatpush1.bf16.msra.mxu0 %v698
        %1064 = vmatprep.subr.bf16.mxu0 0
        %1065 = vmatpush1.bf16.msra.mxu0 %v699
        %1066 = vmatprep.subr.bf16.mxu0 0
        %1067 = vmatpush1.bf16.msra.mxu0 %v700
        %1068 = vmatprep.subr.bf16.mxu0 0
        %1069 = vmatpush1.bf16.msra.mxu0 %v701
        %1070 = vmatprep.subr.bf16.mxu0 0
        %1071 = vmatpush1.bf16.msra.mxu0 %v702
        %1072 = vmatprep.subr.bf16.mxu0 0
        %1073 = vmatpush1.bf16.msra.mxu0 0
        %1074 = vmatprep.subr.bf16.mxu0 0
        %1075 = vmatpush1.bf16.msra.mxu0 0
        %1076 = vmatprep.subr.bf16.mxu0 0
        %1077 = vmatpush1.bf16.msra.mxu0 0
        %1078 = vmatprep.subr.bf16.mxu0 0
        %1079 = vmatpush1.bf16.msra.mxu0 0
        %1080 = vmatprep.subr.bf16.mxu0 0
        %1081 = vmatpush1.bf16.msra.mxu0 0
        %1082 = vmatprep.subr.bf16.mxu0 0
        %1083 = vmatpush1.bf16.msra.mxu0 0
        %1084 = vmatprep.subr.bf16.mxu0 0
        %1085 = vmatpush1.bf16.msra.mxu0 0
        %1086 = vmatprep.subr.bf16.mxu0 0
        %1087 = vmatpush1.bf16.msra.mxu0 0
        %1088 = vmatprep.mubr.bf16.mxu0 0
        %1089 = vmatmul.mubr.bf16.gmra.mrb[0].mxu0 %v444
        %v1090 = vpop.f32.mrb[0].mxu0
        %v1091 = vadd.f32 0.0, %v1090
        %v1092 = vpop.f32.mrb[0].mxu0
        %v1093 = vpop.f32.mrb[0].mxu0
        %v1094 = vpop.f32.mrb[0].mxu0
        %1095 = vdwg.mxu0
        %1096 = vmatprep.subr.bf16.mxu0 0
        %1097 = vmatpush1.bf16.msra.mxu0 %v840
        %1098 = vmatprep.subr.bf16.mxu0 0
        %1099 = vmatpush1.bf16.msra.mxu0 %v841
        %1100 = vmatprep.subr.bf16.mxu0 0
        %1101 = vmatpush1.bf16.msra.mxu0 %v842
        %1102 = vmatprep.subr.bf16.mxu0 0
        %1103 = vmatpush1.bf16.msra.mxu0 %v843
        %1104 = vmatprep.subr.bf16.mxu0 0
        %1105 = vmatpush1.bf16.msra.mxu0 %v844
        %1106 = vmatprep.subr.bf16.mxu0 0
        %1107 = vmatpush1.bf16.msra.mxu0 %v845
        %1108 = vmatprep.subr.bf16.mxu0 0
        %1109 = vmatpush1.bf16.msra.mxu0 %v846
        %1110 = vmatprep.subr.bf16.mxu0 0
        %1111 = vmatpush1.bf16.msra.mxu0 %v847
        %1112 = vmatprep.subr.bf16.mxu0 0
        %1113 = vmatpush1.bf16.msra.mxu0 0
        %1114 = vmatprep.subr.bf16.mxu0 0
        %1115 = vmatpush1.bf16.msra.mxu0 0
        %1116 = vmatprep.subr.bf16.mxu0 0
        %1117 = vmatpush1.bf16.msra.mxu0 0
        %1118 = vmatprep.subr.bf16.mxu0 0
        %1119 = vmatpush1.bf16.msra.mxu0 0
        %1120 = vmatprep.subr.bf16.mxu0 0
        %1121 = vmatpush1.bf16.msra.mxu0 0
        %1122 = vmatprep.subr.bf16.mxu0 0
        %1123 = vmatpush1.bf16.msra.mxu0 0
        %1124 = vmatprep.subr.bf16.mxu0 0
        %1125 = vmatpush1.bf16.msra.mxu0 0
        %1126 = vmatprep.subr.bf16.mxu0 0
        %1127 = vmatpush1.bf16.msra.mxu0 0
        %1128 = vmatprep.mubr.bf16.mxu0 0
        %1129 = vmatmul.mubr.bf16.gmra.mrb[0].mxu0 %v1055
        %v1130 = vpop.f32.mrb[0].mxu0
        %v1131 = vadd.f32 %v1091, %v1130
        %v1132 = vpop.f32.mrb[0].mxu0
        %v1133 = vpop.f32.mrb[0].mxu0
        %v1134 = vpop.f32.mrb[0].mxu0
        %1135 = vdwg.mxu0
        %v1136 = vadd.f32 %v1131, %v957
        %vm1137 = vcmp.gt.f32.partialorder %v1136, 0.0
        %v1138 = vmul.f32 %v1136, 1.442695
        %v1139 = vpow.pop %v1138
        %v1140 = vsub.f32 %v1139, 1.0
        %v1141 = vsel %vm1137, %v1136, %v1140
        %v1142 = vmul.f32 %v1141, 0.17677669
        %v1143 = vpack.c.bf16 %v1142, %v1142
        %v1144 = vpack.c.bf16 %v1040, %v1039
        %v1145 = vpack.c.bf16 %v1042, %v1041
        %v1146 = vpack.c.bf16 %v1044, %v1043
        %v1147 = vpack.c.bf16 %v1046, %v1045
        %v1148 = vpack.c.bf16 %v1048, %v1047
        %v1149 = vpack.c.bf16 %v1050, %v1049
        %v1150 = vpack.c.bf16 %v1052, %v1051
        %v1151 = vpack.c.bf16 %v1054, %v1053
        %1152 = vmatprep.subr.bf16.mxu0 0
        %1153 = vmatpush1.bf16.xpose.msra.mxu0 %v1144
        %1154 = vmatprep.subr.bf16.mxu0 0
        %1155 = vmatpush1.bf16.xpose.msra.mxu0 %v1145
        %1156 = vmatprep.subr.bf16.mxu0 0
        %1157 = vmatpush1.bf16.xpose.msra.mxu0 %v1146
        %1158 = vmatprep.subr.bf16.mxu0 0
        %1159 = vmatpush1.bf16.xpose.msra.mxu0 %v1147
        %1160 = vmatprep.subr.bf16.mxu0 0
        %1161 = vmatpush1.bf16.xpose.msra.mxu0 %v1148
        %1162 = vmatprep.subr.bf16.mxu0 0
        %1163 = vmatpush1.bf16.xpose.msra.mxu0 %v1149
        %1164 = vmatprep.subr.bf16.mxu0 0
        %1165 = vmatpush1.bf16.xpose.msra.mxu0 %v1150
        %1166 = vmatprep.subr.bf16.mxu0 0
        %1167 = vmatpush1.bf16.xpose.msra.mxu0 %v1151
        %1168 = vmatprep.subr.bf16.mxu0 0
        %1169 = vmatpush1.bf16.xpose.msra.mxu0 0
        %1170 = vmatprep.subr.bf16.mxu0 0
        %1171 = vmatpush1.bf16.xpose.msra.mxu0 0
        %1172 = vmatprep.subr.bf16.mxu0 0
        %1173 = vmatpush1.bf16.xpose.msra.mxu0 0
        %1174 = vmatprep.subr.bf16.mxu0 0
        %1175 = vmatpush1.bf16.xpose.msra.mxu0 0
        %1176 = vmatprep.subr.bf16.mxu0 0
        %1177 = vmatpush1.bf16.xpose.msra.mxu0 0
        %1178 = vmatprep.subr.bf16.mxu0 0
        %1179 = vmatpush1.bf16.xpose.msra.mxu0 0
        %1180 = vmatprep.subr.bf16.mxu0 0
        %1181 = vmatpush1.bf16.xpose.msra.mxu0 0
        %1182 = vmatprep.subr.bf16.mxu0 0
        %1183 = vmatpush1.bf16.xpose.msra.mxu0 0
        %1184 = vmatprep.mubr.bf16.mxu0 0
        %1185 = vmatmul.mubr.bf16.gmra.mrb[0].mxu0 %v1143
        %v1186 = vpop.f32.mrb[0].mxu0
        %v1187 = vadd.f32 0.0, %v1186
        %v1188 = vpop.f32.mrb[0].mxu0
        %v1189 = vpop.f32.mrb[0].mxu0
        %v1190 = vpop.f32.mrb[0].mxu0
        %1191 = vdwg.mxu0
        %v1192 = vsel %vm384, %v1187, -1e+09
        %1193 = vmax.xlane.f32.xlu0 %v1192
        %v1194 = vpop.xlane.xlu0 %1193
        %v1195 = vsub.f32 %v1192, %v1194
        %v1196 = vmul.f32 %v1195, 1.442695
        %v1197 = vpow.pop %v1196
        %1198 = vadd.xlane.f32.xlu0 %v1197
        %v1199 = vpop.xlane.xlu0 %1198
        %v1200 = vrcp.pop %v1199
        %v1201 = vmul.f32 %v1199, %v1200
        %v1202 = vsub.f32 2.0, %v1201
        %v1203 = vmul.f32 %v1200, %v1202
        %v1204 = vmul.f32 %v1203, %v385
        %1206 = vset.pattern.permute.xlu0 0
        %1207 = vperm.xlu0 %1206, %v1204
        %v1208 = vpop.permute.xlu0 %1207
        %v1210 = vmul.f32 %v1197, %v1208
        %1211 = vst [vmem:[#allocation2] sm:$0xff] %v1210
        %s1212 = smul.u32 %s24, 4
        %s1213 = smul.u32 %s1212, 8
        %s1214 = smul.addr %s1213, 16
        %s1215 = scalar_lea.hbm %s11, %s1214
        // Predicated region
        $region73: #{subcross_gmn_forward.1} parent=63 // pred_check
          _
        $region74: #{subcross_gmn_forward.1} parent=63 // pred_check_branch
          %1217 = sbr.rel target = $region76
        $region75: #{subcross_gmn_forward.1} parent=63 // pred_region
          %1218 = sst [smem:[#allocation10]] [#allocation9]
          %1219 = sst [smem:[#allocation11]] [#allocation8]
        $region76: #{subcross_gmn_forward.1} parent=63 // pred_fallthru
          _
        %1221 = shalt.err (0)
        %s1223 = sshll.u32 [#allocation2], 4
        %s1224 = int_to_ptr.vmem [resolvable:$true] %s1223
        %1226 = dma.vmem_to_hbm [thread:$0]  %s1224, 128, %s1215, [#allocation3]
        %v1227 = vpack.c.bf16 %v1210, %v1210
        %v1228 = vpack.c.bf16 %v1141, %v1141
        %1229 = vxpose.xlu0.c.b16.start [1/8] %v1227, 128
        %1230 = vxpose.xlu0.c.b16.cont [2/8] 0, 128
        %1231 = vxpose.xlu0.c.b16.cont [3/8] 0, 128
        %1232 = vxpose.xlu0.c.b16.cont [4/8] 0, 128
        %1233 = vxpose.xlu0.c.b16.cont [5/8] 0, 128
        %1234 = vxpose.xlu0.c.b16.cont [6/8] 0, 128
        %1235 = vxpose.xlu0.c.b16.cont [7/8] 0, 128
        %1236 = vxpose.xlu0.c.b16.end [8/8] 0, 128
        %v1237 = vpop.trf.xlu0
        %v1238 = vpop.trf.xlu0
        %v1239 = vpop.trf.xlu0
        %v1240 = vpop.trf.xlu0
        %v1241 = vpop.trf.xlu0
        %v1242 = vpop.trf.xlu0
        %v1243 = vpop.trf.xlu0
        %v1244 = vpop.trf.xlu0
        %v1246 = vsel %vm607, %v1237, 0
        %v1249 = vsel %vm607, %v1238, 0
        %v1252 = vsel %vm607, %v1239, 0
        %v1255 = vsel %vm607, %v1240, 0
        %v1258 = vsel %vm607, %v1241, 0
        %v1261 = vsel %vm607, %v1242, 0
        %v1264 = vsel %vm607, %v1243, 0
        %v1267 = vsel %vm607, %v1244, 0
        %v1270 = vsel %vm611, %v1228, 0
        %1272 = vmatprep.subr.bf16.mxu0 0
        %1273 = vmatpush1.bf16.msra.mxu0 %v1270
        %1274 = vmatprep.subr.bf16.mxu0 0
        %1275 = vmatpush1.bf16.msra.mxu0 0
        %1276 = vmatprep.subr.bf16.mxu0 0
        %1277 = vmatpush1.bf16.msra.mxu0 0
        %1278 = vmatprep.subr.bf16.mxu0 0
        %1279 = vmatpush1.bf16.msra.mxu0 0
        %1280 = vmatprep.subr.bf16.mxu0 0
        %1281 = vmatpush1.bf16.msra.mxu0 0
        %1282 = vmatprep.subr.bf16.mxu0 0
        %1283 = vmatpush1.bf16.msra.mxu0 0
        %1284 = vmatprep.subr.bf16.mxu0 0
        %1285 = vmatpush1.bf16.msra.mxu0 0
        %1286 = vmatprep.subr.bf16.mxu0 0
        %1287 = vmatpush1.bf16.msra.mxu0 0
        %1288 = vmatprep.subr.bf16.mxu0 0
        %1289 = vmatpush1.bf16.msra.mxu0 0
        %1290 = vmatprep.subr.bf16.mxu0 0
        %1291 = vmatpush1.bf16.msra.mxu0 0
        %1292 = vmatprep.subr.bf16.mxu0 0
        %1293 = vmatpush1.bf16.msra.mxu0 0
        %1294 = vmatprep.subr.bf16.mxu0 0
        %1295 = vmatpush1.bf16.msra.mxu0 0
        %1296 = vmatprep.subr.bf16.mxu0 0
        %1297 = vmatpush1.bf16.msra.mxu0 0
        %1298 = vmatprep.subr.bf16.mxu0 0
        %1299 = vmatpush1.bf16.msra.mxu0 0
        %1300 = vmatprep.subr.bf16.mxu0 0
        %1301 = vmatpush1.bf16.msra.mxu0 0
        %1302 = vmatprep.subr.bf16.mxu0 0
        %1303 = vmatpush1.bf16.msra.mxu0 0
        %1304 = vmatprep.mubr.bf16.mxu0 0
        %1305 = vmatmul.mubr.bf16.gmra.mrb[0].mxu0 %v1246
        %v1306 = vpop.f32.mrb[0].mxu0
        %v1307 = vadd.f32 0.0, %v1306
        %v1308 = vpop.f32.mrb[0].mxu0
        %v1309 = vpop.f32.mrb[0].mxu0
        %v1310 = vadd.f32 0.0, %v1309
        %v1311 = vpop.f32.mrb[0].mxu0
        %1312 = vmatprep.mubr.bf16.mxu0 0
        %1313 = vmatmul.mubr.bf16.gmra.mrb[0].mxu0 %v1249
        %v1314 = vpop.f32.mrb[0].mxu0
        %v1315 = vadd.f32 0.0, %v1314
        %v1316 = vpop.f32.mrb[0].mxu0
        %v1317 = vpop.f32.mrb[0].mxu0
        %v1318 = vadd.f32 0.0, %v1317
        %v1319 = vpop.f32.mrb[0].mxu0
        %1320 = vmatprep.mubr.bf16.mxu0 0
        %1321 = vmatmul.mubr.bf16.gmra.mrb[0].mxu0 %v1252
        %v1322 = vpop.f32.mrb[0].mxu0
        %v1323 = vadd.f32 0.0, %v1322
        %v1324 = vpop.f32.mrb[0].mxu0
        %v1325 = vpop.f32.mrb[0].mxu0
        %v1326 = vadd.f32 0.0, %v1325
        %v1327 = vpop.f32.mrb[0].mxu0
        %1328 = vmatprep.mubr.bf16.mxu0 0
        %1329 = vmatmul.mubr.bf16.gmra.mrb[0].mxu0 %v1255
        %v1330 = vpop.f32.mrb[0].mxu0
        %v1331 = vadd.f32 0.0, %v1330
        %v1332 = vpop.f32.mrb[0].mxu0
        %v1333 = vpop.f32.mrb[0].mxu0
        %v1334 = vadd.f32 0.0, %v1333
        %v1335 = vpop.f32.mrb[0].mxu0
        %1336 = vmatprep.mubr.bf16.mxu0 0
        %1337 = vmatmul.mubr.bf16.gmra.mrb[0].mxu0 %v1258
        %v1338 = vpop.f32.mrb[0].mxu0
        %v1339 = vadd.f32 0.0, %v1338
        %v1340 = vpop.f32.mrb[0].mxu0
        %v1341 = vpop.f32.mrb[0].mxu0
        %v1342 = vadd.f32 0.0, %v1341
        %v1343 = vpop.f32.mrb[0].mxu0
        %1344 = vmatprep.mubr.bf16.mxu0 0
        %1345 = vmatmul.mubr.bf16.gmra.mrb[0].mxu0 %v1261
        %v1346 = vpop.f32.mrb[0].mxu0
        %v1347 = vadd.f32 0.0, %v1346
        %v1348 = vpop.f32.mrb[0].mxu0
        %v1349 = vpop.f32.mrb[0].mxu0
        %v1350 = vadd.f32 0.0, %v1349
        %v1351 = vpop.f32.mrb[0].mxu0
        %1352 = vmatprep.mubr.bf16.mxu0 0
        %1353 = vmatmul.mubr.bf16.gmra.mrb[0].mxu0 %v1264
        %v1354 = vpop.f32.mrb[0].mxu0
        %v1355 = vadd.f32 0.0, %v1354
        %v1356 = vpop.f32.mrb[0].mxu0
        %v1357 = vpop.f32.mrb[0].mxu0
        %v1358 = vadd.f32 0.0, %v1357
        %v1359 = vpop.f32.mrb[0].mxu0
        %1360 = vmatprep.mubr.bf16.mxu0 0
        %1361 = vmatmul.mubr.bf16.gmra.mrb[0].mxu0 %v1267
        %v1362 = vpop.f32.mrb[0].mxu0
        %v1363 = vadd.f32 0.0, %v1362
        %v1364 = vpop.f32.mrb[0].mxu0
        %v1365 = vpop.f32.mrb[0].mxu0
        %v1366 = vadd.f32 0.0, %v1365
        %v1367 = vpop.f32.mrb[0].mxu0
        %1368 = vdwg.mxu0
        %1369 = vmatprep.subr.bf16.mxu0 0
        %1370 = vmatpush1.bf16.msra.mxu0 %v1144
        %1371 = vmatprep.subr.bf16.mxu0 0
        %1372 = vmatpush1.bf16.msra.mxu0 %v1145
        %1373 = vmatprep.subr.bf16.mxu0 0
        %1374 = vmatpush1.bf16.msra.mxu0 %v1146
        %1375 = vmatprep.subr.bf16.mxu0 0
        %1376 = vmatpush1.bf16.msra.mxu0 %v1147
        %1377 = vmatprep.subr.bf16.mxu0 0
        %1378 = vmatpush1.bf16.msra.mxu0 %v1148
        %1379 = vmatprep.subr.bf16.mxu0 0
        %1380 = vmatpush1.bf16.msra.mxu0 %v1149
        %1381 = vmatprep.subr.bf16.mxu0 0
        %1382 = vmatpush1.bf16.msra.mxu0 %v1150
        %1383 = vmatprep.subr.bf16.mxu0 0
        %1384 = vmatpush1.bf16.msra.mxu0 %v1151
        %1385 = vmatprep.subr.bf16.mxu0 0
        %1386 = vmatpush1.bf16.msra.mxu0 0
        %1387 = vmatprep.subr.bf16.mxu0 0
        %1388 = vmatpush1.bf16.msra.mxu0 0
        %1389 = vmatprep.subr.bf16.mxu0 0
        %1390 = vmatpush1.bf16.msra.mxu0 0
        %1391 = vmatprep.subr.bf16.mxu0 0
        %1392 = vmatpush1.bf16.msra.mxu0 0
        %1393 = vmatprep.subr.bf16.mxu0 0
        %1394 = vmatpush1.bf16.msra.mxu0 0
        %1395 = vmatprep.subr.bf16.mxu0 0
        %1396 = vmatpush1.bf16.msra.mxu0 0
        %1397 = vmatprep.subr.bf16.mxu0 0
        %1398 = vmatpush1.bf16.msra.mxu0 0
        %1399 = vmatprep.subr.bf16.mxu0 0
        %1400 = vmatpush1.bf16.msra.mxu0 0
        %1401 = vmatprep.mubr.bf16.mxu0 0
        %1402 = vmatmul.mubr.bf16.gmra.mrb[0].mxu0 %v1227
        %v1403 = vpop.f32.mrb[0].mxu0
        %v1404 = vadd.f32 0.0, %v1403
        %v1405 = vpop.f32.mrb[0].mxu0
        %v1406 = vpop.f32.mrb[0].mxu0
        %v1407 = vpop.f32.mrb[0].mxu0
        %1408 = vdwg.mxu0
        %s1409 = sld [smem:[#allocation4]]
        %v1410 = vld [vmem:[%s360] sm:$0xff]
        %v1411 = vld [vmem:[%s360 + $0x8] sm:$0xff]
        %v1412 = vld [vmem:[%s360 + $0x10] sm:$0xff]
        %v1413 = vld [vmem:[%s360 + $0x18] sm:$0xff]
        %v1414 = vld [vmem:[%s360 + $0x20] sm:$0xff]
        %v1415 = vld [vmem:[%s360 + $0x28] sm:$0xff]
        %v1416 = vld [vmem:[%s360 + $0x30] sm:$0xff]
        %v1417 = vld [vmem:[%s360 + $0x38] sm:$0xff]
        %v1418 = vld [vmem:[%s360 + $0x40] sm:$0xff]
        %v1419 = vld [vmem:[%s360 + $0x48] sm:$0xff]
        %v1420 = vld [vmem:[%s360 + $0x50] sm:$0xff]
        %v1421 = vld [vmem:[%s360 + $0x58] sm:$0xff]
        %v1422 = vld [vmem:[%s360 + $0x60] sm:$0xff]
        %v1423 = vld [vmem:[%s360 + $0x68] sm:$0xff]
        %v1424 = vld [vmem:[%s360 + $0x70] sm:$0xff]
        %v1425 = vld [vmem:[%s360 + $0x78] sm:$0xff]
        %v1426 = vstv %s1409
        %v1427 = vmul.f32 %v1426, %v1410
        %v1428 = vmul.f32 %v1426, %v1411
        %v1429 = vmul.f32 %v1426, %v1412
        %v1430 = vmul.f32 %v1426, %v1413
        %v1431 = vmul.f32 %v1426, %v1414
        %v1432 = vmul.f32 %v1426, %v1415
        %v1433 = vmul.f32 %v1426, %v1416
        %v1434 = vmul.f32 %v1426, %v1417
        %v1435 = vmul.f32 %v1426, %v1418
        %v1436 = vmul.f32 %v1426, %v1419
        %v1437 = vmul.f32 %v1426, %v1420
        %v1438 = vmul.f32 %v1426, %v1421
        %v1439 = vmul.f32 %v1426, %v1422
        %v1440 = vmul.f32 %v1426, %v1423
        %v1441 = vmul.f32 %v1426, %v1424
        %v1442 = vmul.f32 %v1426, %v1425
        %s1443 = sld [smem:[#allocation4 + $0x1]]
        %v1444 = vstv %s1443
        %v1445 = vmul.f32 %v1444, %v1039
        %v1446 = vmul.f32 %v1444, %v1040
        %v1447 = vmul.f32 %v1444, %v1041
        %v1448 = vmul.f32 %v1444, %v1042
        %v1449 = vmul.f32 %v1444, %v1043
        %v1450 = vmul.f32 %v1444, %v1044
        %v1451 = vmul.f32 %v1444, %v1045
        %v1452 = vmul.f32 %v1444, %v1046
        %v1453 = vmul.f32 %v1444, %v1047
        %v1454 = vmul.f32 %v1444, %v1048
        %v1455 = vmul.f32 %v1444, %v1049
        %v1456 = vmul.f32 %v1444, %v1050
        %v1457 = vmul.f32 %v1444, %v1051
        %v1458 = vmul.f32 %v1444, %v1052
        %v1459 = vmul.f32 %v1444, %v1053
        %v1460 = vmul.f32 %v1444, %v1054
        %v1461 = vadd.f32 %v1427, %v1445
        %v1462 = vadd.f32 %v1428, %v1446
        %v1463 = vadd.f32 %v1429, %v1447
        %v1464 = vadd.f32 %v1430, %v1448
        %v1465 = vadd.f32 %v1431, %v1449
        %v1466 = vadd.f32 %v1432, %v1450
        %v1467 = vadd.f32 %v1433, %v1451
        %v1468 = vadd.f32 %v1434, %v1452
        %v1469 = vadd.f32 %v1435, %v1453
        %v1470 = vadd.f32 %v1436, %v1454
        %v1471 = vadd.f32 %v1437, %v1455
        %v1472 = vadd.f32 %v1438, %v1456
        %v1473 = vadd.f32 %v1439, %v1457
        %v1474 = vadd.f32 %v1440, %v1458
        %v1475 = vadd.f32 %v1441, %v1459
        %v1476 = vadd.f32 %v1442, %v1460
        %s1477 = sld [smem:[#allocation4 + $0x2]]
        %v1478 = vstv %s1477
        %v1479 = vmul.f32 %v1478, %v1307
        %v1480 = vmul.f32 %v1478, %v1310
        %v1481 = vmul.f32 %v1478, %v1315
        %v1482 = vmul.f32 %v1478, %v1318
        %v1483 = vmul.f32 %v1478, %v1323
        %v1484 = vmul.f32 %v1478, %v1326
        %v1485 = vmul.f32 %v1478, %v1331
        %v1486 = vmul.f32 %v1478, %v1334
        %v1487 = vmul.f32 %v1478, %v1339
        %v1488 = vmul.f32 %v1478, %v1342
        %v1489 = vmul.f32 %v1478, %v1347
        %v1490 = vmul.f32 %v1478, %v1350
        %v1491 = vmul.f32 %v1478, %v1355
        %v1492 = vmul.f32 %v1478, %v1358
        %v1493 = vmul.f32 %v1478, %v1363
        %v1494 = vmul.f32 %v1478, %v1366
        %v1495 = vadd.f32 %v1461, %v1479
        %v1496 = vadd.f32 %v1462, %v1480
        %v1497 = vadd.f32 %v1463, %v1481
        %v1498 = vadd.f32 %v1464, %v1482
        %v1499 = vadd.f32 %v1465, %v1483
        %v1500 = vadd.f32 %v1466, %v1484
        %v1501 = vadd.f32 %v1467, %v1485
        %v1502 = vadd.f32 %v1468, %v1486
        %v1503 = vadd.f32 %v1469, %v1487
        %v1504 = vadd.f32 %v1470, %v1488
        %v1505 = vadd.f32 %v1471, %v1489
        %v1506 = vadd.f32 %v1472, %v1490
        %v1507 = vadd.f32 %v1473, %v1491
        %v1508 = vadd.f32 %v1474, %v1492
        %v1509 = vadd.f32 %v1475, %v1493
        %v1510 = vadd.f32 %v1476, %v1494
        %s1511 = sld [smem:[#allocation6]]
        %v1512 = vld [vmem:[%s364] sm:$0xff]
        %v1513 = vstv %s1511
        %v1514 = vmul.f32 %v1513, %v1512
        %s1515 = sld [smem:[#allocation6 + $0x1]]
        %v1516 = vstv %s1515
        %v1517 = vmul.f32 %v1516, %v1141
        %v1518 = vadd.f32 %v1514, %v1517
        %s1519 = sld [smem:[#allocation6 + $0x2]]
        %v1520 = vstv %s1519
        %v1521 = vmul.f32 %v1520, %v1404
        %v1522 = vadd.f32 %v1518, %v1521
        %s1523 = scalar_lea.vmem %s4, 64
        %v1524 = vld [vmem:[%s1523] sm:$0xf]
        %v1525 = vld [vmem:[%s1523 + $0x4] sm:$0xf]
        %v1526 = vld [vmem:[%s1523 + $0x8] sm:$0xf]
        %v1527 = vld [vmem:[%s1523 + $0xc] sm:$0xf]
        %v1528 = vld [vmem:[%s1523 + $0x10] sm:$0xf]
        %v1529 = vld [vmem:[%s1523 + $0x14] sm:$0xf]
        %v1530 = vld [vmem:[%s1523 + $0x18] sm:$0xf]
        %v1531 = vld [vmem:[%s1523 + $0x1c] sm:$0xf]
        %v1532 = vld [vmem:[%s1523 + $0x20] sm:$0xf]
        %v1533 = vld [vmem:[%s1523 + $0x24] sm:$0xf]
        %v1534 = vld [vmem:[%s1523 + $0x28] sm:$0xf]
        %v1535 = vld [vmem:[%s1523 + $0x2c] sm:$0xf]
        %v1536 = vld [vmem:[%s1523 + $0x30] sm:$0xf]
        %v1537 = vld [vmem:[%s1523 + $0x34] sm:$0xf]
        %v1538 = vld [vmem:[%s1523 + $0x38] sm:$0xf]
        %v1539 = vld [vmem:[%s1523 + $0x3c] sm:$0xf]
        %s1540 = scalar_lea.vmem %s5, 64
        %v1541 = vld [vmem:[%s1540] sm:$0xf]
        %v1542 = vld [vmem:[%s1540 + $0x4] sm:$0xf]
        %v1543 = vld [vmem:[%s1540 + $0x8] sm:$0xf]
        %v1544 = vld [vmem:[%s1540 + $0xc] sm:$0xf]
        %v1545 = vld [vmem:[%s1540 + $0x10] sm:$0xf]
        %v1546 = vld [vmem:[%s1540 + $0x14] sm:$0xf]
        %v1547 = vld [vmem:[%s1540 + $0x18] sm:$0xf]
        %v1548 = vld [vmem:[%s1540 + $0x1c] sm:$0xf]
        %v1549 = vld [vmem:[%s1540 + $0x20] sm:$0xf]
        %v1550 = vld [vmem:[%s1540 + $0x24] sm:$0xf]
        %v1551 = vld [vmem:[%s1540 + $0x28] sm:$0xf]
        %v1552 = vld [vmem:[%s1540 + $0x2c] sm:$0xf]
        %v1553 = vld [vmem:[%s1540 + $0x30] sm:$0xf]
        %v1554 = vld [vmem:[%s1540 + $0x34] sm:$0xf]
        %v1555 = vld [vmem:[%s1540 + $0x38] sm:$0xf]
        %v1556 = vld [vmem:[%s1540 + $0x3c] sm:$0xf]
        %s1557 = scalar_lea.vmem %s6, 1
        %v1558 = vld [vmem:[%s1557] sm:$0x1]
        %v1559 = vpack.c.bf16 %v1496, %v1495
        %v1560 = vpack.c.bf16 %v1498, %v1497
        %v1561 = vpack.c.bf16 %v1500, %v1499
        %v1562 = vpack.c.bf16 %v1502, %v1501
        %v1563 = vpack.c.bf16 %v1504, %v1503
        %v1564 = vpack.c.bf16 %v1506, %v1505
        %v1565 = vpack.c.bf16 %v1508, %v1507
        %v1566 = vpack.c.bf16 %v1510, %v1509
        %v1567 = vpack.c.bf16 %v1522, %v1522
        %v1568 = vld [vmem:[%s369] sm:$0xf]
        %v1569 = vld [vmem:[%s369 + $0x4] sm:$0xf]
        %v1570 = vld [vmem:[%s369 + $0x8] sm:$0xf]
        %v1571 = vld [vmem:[%s369 + $0xc] sm:$0xf]
        %v1572 = vld [vmem:[%s369 + $0x10] sm:$0xf]
        %v1573 = vld [vmem:[%s369 + $0x14] sm:$0xf]
        %v1574 = vld [vmem:[%s369 + $0x18] sm:$0xf]
        %v1575 = vld [vmem:[%s369 + $0x1c] sm:$0xf]
        %v1576 = vld [vmem:[%s369 + $0x20] sm:$0xf]
        %v1577 = vld [vmem:[%s369 + $0x24] sm:$0xf]
        %v1578 = vld [vmem:[%s369 + $0x28] sm:$0xf]
        %v1579 = vld [vmem:[%s369 + $0x2c] sm:$0xf]
        %v1580 = vld [vmem:[%s369 + $0x30] sm:$0xf]
        %v1581 = vld [vmem:[%s369 + $0x34] sm:$0xf]
        %v1582 = vld [vmem:[%s369 + $0x38] sm:$0xf]
        %v1583 = vld [vmem:[%s369 + $0x3c] sm:$0xf]
        %v1600 = vunpack.c.l.b16 %v1568
        %v1601 = vunpack.c.l.b16 %v1569
        %v1602 = vunpack.c.l.b16 %v1570
        %v1603 = vunpack.c.l.b16 %v1571
        %v1604 = vunpack.c.l.b16 %v1572
        %v1605 = vunpack.c.l.b16 %v1573
        %v1606 = vunpack.c.l.b16 %v1574
        %v1607 = vunpack.c.l.b16 %v1575
        %v1608 = vunpack.c.l.b16 %v1576
        %v1609 = vunpack.c.l.b16 %v1577
        %v1610 = vunpack.c.l.b16 %v1578
        %v1611 = vunpack.c.l.b16 %v1579
        %v1612 = vunpack.c.l.b16 %v1580
        %v1613 = vunpack.c.l.b16 %v1581
        %v1614 = vunpack.c.l.b16 %v1582
        %v1615 = vunpack.c.l.b16 %v1583
        %v1616 = vpack.c.b16 %v1601, %v1600
        %v1617 = vpack.c.b16 %v1603, %v1602
        %v1618 = vpack.c.b16 %v1605, %v1604
        %v1619 = vpack.c.b16 %v1607, %v1606
        %v1620 = vpack.c.b16 %v1609, %v1608
        %v1621 = vpack.c.b16 %v1611, %v1610
        %v1622 = vpack.c.b16 %v1613, %v1612
        %v1623 = vpack.c.b16 %v1615, %v1614
        %1632 = vmatprep.subr.bf16.mxu0 0
        %1633 = vmatpush1.bf16.msra.mxu0 %v1559
        %1634 = vmatprep.subr.bf16.mxu0 0
        %1635 = vmatpush1.bf16.msra.mxu0 %v1560
        %1636 = vmatprep.subr.bf16.mxu0 0
        %1637 = vmatpush1.bf16.msra.mxu0 %v1561
        %1638 = vmatprep.subr.bf16.mxu0 0
        %1639 = vmatpush1.bf16.msra.mxu0 %v1562
        %1640 = vmatprep.subr.bf16.mxu0 0
        %1641 = vmatpush1.bf16.msra.mxu0 %v1563
        %1642 = vmatprep.subr.bf16.mxu0 0
        %1643 = vmatpush1.bf16.msra.mxu0 %v1564
        %1644 = vmatprep.subr.bf16.mxu0 0
        %1645 = vmatpush1.bf16.msra.mxu0 %v1565
        %1646 = vmatprep.subr.bf16.mxu0 0
        %1647 = vmatpush1.bf16.msra.mxu0 %v1566
        %1648 = vmatprep.subr.bf16.mxu0 0
        %1649 = vmatpush1.bf16.msra.mxu0 0
        %1650 = vmatprep.subr.bf16.mxu0 0
        %1651 = vmatpush1.bf16.msra.mxu0 0
        %1652 = vmatprep.subr.bf16.mxu0 0
        %1653 = vmatpush1.bf16.msra.mxu0 0
        %1654 = vmatprep.subr.bf16.mxu0 0
        %1655 = vmatpush1.bf16.msra.mxu0 0
        %1656 = vmatprep.subr.bf16.mxu0 0
        %1657 = vmatpush1.bf16.msra.mxu0 0
        %1658 = vmatprep.subr.bf16.mxu0 0
        %1659 = vmatpush1.bf16.msra.mxu0 0
        %1660 = vmatprep.subr.bf16.mxu0 0
        %1661 = vmatpush1.bf16.msra.mxu0 0
        %1662 = vmatprep.subr.bf16.mxu0 0
        %1663 = vmatpush1.bf16.msra.mxu0 0
        %1664 = vmatprep.mubr.bf16.mxu0 0
        %1665 = vmatmul.mubr.bf16.gmra.mrb[0].mxu0 %v1616
        %v1666 = vpop.f32.mrb[0].mxu0
        %v1667 = vadd.f32 0.0, %v1666
        %v1668 = vpop.f32.mrb[0].mxu0
        %v1669 = vpop.f32.mrb[0].mxu0
        %v1670 = vadd.f32 0.0, %v1669
        %v1671 = vpop.f32.mrb[0].mxu0
        %1672 = vmatprep.mubr.bf16.mxu0 0
        %1673 = vmatmul.mubr.bf16.gmra.mrb[0].mxu0 %v1617
        %v1674 = vpop.f32.mrb[0].mxu0
        %v1675 = vadd.f32 0.0, %v1674
        %v1676 = vpop.f32.mrb[0].mxu0
        %v1677 = vpop.f32.mrb[0].mxu0
        %v1678 = vadd.f32 0.0, %v1677
        %v1679 = vpop.f32.mrb[0].mxu0
        %1680 = vmatprep.mubr.bf16.mxu0 0
        %1681 = vmatmul.mubr.bf16.gmra.mrb[0].mxu0 %v1618
        %v1682 = vpop.f32.mrb[0].mxu0
        %v1683 = vadd.f32 0.0, %v1682
        %v1684 = vpop.f32.mrb[0].mxu0
        %v1685 = vpop.f32.mrb[0].mxu0
        %v1686 = vadd.f32 0.0, %v1685
        %v1687 = vpop.f32.mrb[0].mxu0
        %1688 = vmatprep.mubr.bf16.mxu0 0
        %1689 = vmatmul.mubr.bf16.gmra.mrb[0].mxu0 %v1619
        %v1690 = vpop.f32.mrb[0].mxu0
        %v1691 = vadd.f32 0.0, %v1690
        %v1692 = vpop.f32.mrb[0].mxu0
        %v1693 = vpop.f32.mrb[0].mxu0
        %v1694 = vadd.f32 0.0, %v1693
        %v1695 = vpop.f32.mrb[0].mxu0
        %1696 = vmatprep.mubr.bf16.mxu0 0
        %1697 = vmatmul.mubr.bf16.gmra.mrb[0].mxu0 %v1620
        %v1698 = vpop.f32.mrb[0].mxu0
        %v1699 = vadd.f32 0.0, %v1698
        %v1700 = vpop.f32.mrb[0].mxu0
        %v1701 = vpop.f32.mrb[0].mxu0
        %v1702 = vadd.f32 0.0, %v1701
        %v1703 = vpop.f32.mrb[0].mxu0
        %1704 = vmatprep.mubr.bf16.mxu0 0
        %1705 = vmatmul.mubr.bf16.gmra.mrb[0].mxu0 %v1621
        %v1706 = vpop.f32.mrb[0].mxu0
        %v1707 = vadd.f32 0.0, %v1706
        %v1708 = vpop.f32.mrb[0].mxu0
        %v1709 = vpop.f32.mrb[0].mxu0
        %v1710 = vadd.f32 0.0, %v1709
        %v1711 = vpop.f32.mrb[0].mxu0
        %1712 = vmatprep.mubr.bf16.mxu0 0
        %1713 = vmatmul.mubr.bf16.gmra.mrb[0].mxu0 %v1622
        %v1714 = vpop.f32.mrb[0].mxu0
        %v1715 = vadd.f32 0.0, %v1714
        %v1716 = vpop.f32.mrb[0].mxu0
        %v1717 = vpop.f32.mrb[0].mxu0
        %v1718 = vadd.f32 0.0, %v1717
        %v1719 = vpop.f32.mrb[0].mxu0
        %1720 = vmatprep.mubr.bf16.mxu0 0
        %1721 = vmatmul.mubr.bf16.gmra.mrb[0].mxu0 %v1623
        %v1722 = vpop.f32.mrb[0].mxu0
        %v1723 = vadd.f32 0.0, %v1722
        %v1724 = vpop.f32.mrb[0].mxu0
        %v1725 = vpop.f32.mrb[0].mxu0
        %v1726 = vadd.f32 0.0, %v1725
        %v1727 = vpop.f32.mrb[0].mxu0
        %1728 = vdwg.mxu0
        %v1729 = vld [vmem:[%s373] sm:$0xf]
        %v1731 = vsel %vm607, %v1729, 0
        %v1734 = vsel %vm611, %v1567, 0
        %1736 = vmatprep.subr.bf16.mxu0 0
        %1737 = vmatpush1.bf16.msra.mxu0 %v1734
        %1738 = vmatprep.subr.bf16.mxu0 0
        %1739 = vmatpush1.bf16.msra.mxu0 0
        %1740 = vmatprep.subr.bf16.mxu0 0
        %1741 = vmatpush1.bf16.msra.mxu0 0
        %1742 = vmatprep.subr.bf16.mxu0 0
        %1743 = vmatpush1.bf16.msra.mxu0 0
        %1744 = vmatprep.subr.bf16.mxu0 0
        %1745 = vmatpush1.bf16.msra.mxu0 0
        %1746 = vmatprep.subr.bf16.mxu0 0
        %1747 = vmatpush1.bf16.msra.mxu0 0
        %1748 = vmatprep.subr.bf16.mxu0 0
        %1749 = vmatpush1.bf16.msra.mxu0 0
        %1750 = vmatprep.subr.bf16.mxu0 0
        %1751 = vmatpush1.bf16.msra.mxu0 0
        %1752 = vmatprep.subr.bf16.mxu0 0
        %1753 = vmatpush1.bf16.msra.mxu0 0
        %1754 = vmatprep.subr.bf16.mxu0 0
        %1755 = vmatpush1.bf16.msra.mxu0 0
        %1756 = vmatprep.subr.bf16.mxu0 0
        %1757 = vmatpush1.bf16.msra.mxu0 0
        %1758 = vmatprep.subr.bf16.mxu0 0
        %1759 = vmatpush1.bf16.msra.mxu0 0
        %1760 = vmatprep.subr.bf16.mxu0 0
        %1761 = vmatpush1.bf16.msra.mxu0 0
        %1762 = vmatprep.subr.bf16.mxu0 0
        %1763 = vmatpush1.bf16.msra.mxu0 0
        %1764 = vmatprep.subr.bf16.mxu0 0
        %1765 = vmatpush1.bf16.msra.mxu0 0
        %1766 = vmatprep.subr.bf16.mxu0 0
        %1767 = vmatpush1.bf16.msra.mxu0 0
        %1768 = vmatprep.mubr.bf16.mxu0 0
        %1769 = vmatmul.mubr.bf16.gmra.mrb[0].mxu0 %v1731
        %v1770 = vpop.f32.mrb[0].mxu0
        %v1771 = vadd.f32 0.0, %v1770
        %v1772 = vpop.f32.mrb[0].mxu0
        %v1773 = vpop.f32.mrb[0].mxu0
        %v1774 = vpop.f32.mrb[0].mxu0
        %1775 = vdwg.mxu0
        %v1776 = vpack.c.bf16 %v1670, %v1667
        %v1777 = vpack.c.bf16 %v1678, %v1675
        %v1778 = vpack.c.bf16 %v1686, %v1683
        %v1779 = vpack.c.bf16 %v1694, %v1691
        %v1780 = vpack.c.bf16 %v1702, %v1699
        %v1781 = vpack.c.bf16 %v1710, %v1707
        %v1782 = vpack.c.bf16 %v1718, %v1715
        %v1783 = vpack.c.bf16 %v1726, %v1723
        %v1800 = vunpack.c.l.b16 %v1541
        %v1801 = vunpack.c.l.b16 %v1542
        %v1802 = vunpack.c.l.b16 %v1543
        %v1803 = vunpack.c.l.b16 %v1544
        %v1804 = vunpack.c.l.b16 %v1545
        %v1805 = vunpack.c.l.b16 %v1546
        %v1806 = vunpack.c.l.b16 %v1547
        %v1807 = vunpack.c.l.b16 %v1548
        %v1808 = vunpack.c.l.b16 %v1549
        %v1809 = vunpack.c.l.b16 %v1550
        %v1810 = vunpack.c.l.b16 %v1551
        %v1811 = vunpack.c.l.b16 %v1552
        %v1812 = vunpack.c.l.b16 %v1553
        %v1813 = vunpack.c.l.b16 %v1554
        %v1814 = vunpack.c.l.b16 %v1555
        %v1815 = vunpack.c.l.b16 %v1556
        %v1816 = vpack.c.b16 %v1801, %v1800
        %v1817 = vpack.c.b16 %v1803, %v1802
        %v1818 = vpack.c.b16 %v1805, %v1804
        %v1819 = vpack.c.b16 %v1807, %v1806
        %v1820 = vpack.c.b16 %v1809, %v1808
        %v1821 = vpack.c.b16 %v1811, %v1810
        %v1822 = vpack.c.b16 %v1813, %v1812
        %v1823 = vpack.c.b16 %v1815, %v1814
        %1832 = vmatprep.subr.bf16.mxu0 0
        %1833 = vmatpush1.bf16.msra.mxu0 %v1816
        %1834 = vmatprep.subr.bf16.mxu0 0
        %1835 = vmatpush1.bf16.msra.mxu0 %v1817
        %1836 = vmatprep.subr.bf16.mxu0 0
        %1837 = vmatpush1.bf16.msra.mxu0 %v1818
        %1838 = vmatprep.subr.bf16.mxu0 0
        %1839 = vmatpush1.bf16.msra.mxu0 %v1819
        %1840 = vmatprep.subr.bf16.mxu0 0
        %1841 = vmatpush1.bf16.msra.mxu0 %v1820
        %1842 = vmatprep.subr.bf16.mxu0 0
        %1843 = vmatpush1.bf16.msra.mxu0 %v1821
        %1844 = vmatprep.subr.bf16.mxu0 0
        %1845 = vmatpush1.bf16.msra.mxu0 %v1822
        %1846 = vmatprep.subr.bf16.mxu0 0
        %1847 = vmatpush1.bf16.msra.mxu0 %v1823
        %1848 = vmatprep.subr.bf16.mxu0 0
        %1849 = vmatpush1.bf16.msra.mxu0 0
        %1850 = vmatprep.subr.bf16.mxu0 0
        %1851 = vmatpush1.bf16.msra.mxu0 0
        %1852 = vmatprep.subr.bf16.mxu0 0
        %1853 = vmatpush1.bf16.msra.mxu0 0
        %1854 = vmatprep.subr.bf16.mxu0 0
        %1855 = vmatpush1.bf16.msra.mxu0 0
        %1856 = vmatprep.subr.bf16.mxu0 0
        %1857 = vmatpush1.bf16.msra.mxu0 0
        %1858 = vmatprep.subr.bf16.mxu0 0
        %1859 = vmatpush1.bf16.msra.mxu0 0
        %1860 = vmatprep.subr.bf16.mxu0 0
        %1861 = vmatpush1.bf16.msra.mxu0 0
        %1862 = vmatprep.subr.bf16.mxu0 0
        %1863 = vmatpush1.bf16.msra.mxu0 0
        %1864 = vmatprep.mubr.bf16.mxu0 0
        %1865 = vmatmul.mubr.bf16.gmra.mrb[0].mxu0 %v1559
        %v1866 = vpop.f32.mrb[0].mxu0
        %v1867 = vadd.f32 0.0, %v1866
        %v1868 = vpop.f32.mrb[0].mxu0
        %v1869 = vpop.f32.mrb[0].mxu0
        %v1870 = vadd.f32 0.0, %v1869
        %v1871 = vpop.f32.mrb[0].mxu0
        %1872 = vmatprep.mubr.bf16.mxu0 0
        %1873 = vmatmul.mubr.bf16.gmra.mrb[0].mxu0 %v1560
        %v1874 = vpop.f32.mrb[0].mxu0
        %v1875 = vadd.f32 0.0, %v1874
        %v1876 = vpop.f32.mrb[0].mxu0
        %v1877 = vpop.f32.mrb[0].mxu0
        %v1878 = vadd.f32 0.0, %v1877
        %v1879 = vpop.f32.mrb[0].mxu0
        %1880 = vmatprep.mubr.bf16.mxu0 0
        %1881 = vmatmul.mubr.bf16.gmra.mrb[0].mxu0 %v1561
        %v1882 = vpop.f32.mrb[0].mxu0
        %v1883 = vadd.f32 0.0, %v1882
        %v1884 = vpop.f32.mrb[0].mxu0
        %v1885 = vpop.f32.mrb[0].mxu0
        %v1886 = vadd.f32 0.0, %v1885
        %v1887 = vpop.f32.mrb[0].mxu0
        %1888 = vmatprep.mubr.bf16.mxu0 0
        %1889 = vmatmul.mubr.bf16.gmra.mrb[0].mxu0 %v1562
        %v1890 = vpop.f32.mrb[0].mxu0
        %v1891 = vadd.f32 0.0, %v1890
        %v1892 = vpop.f32.mrb[0].mxu0
        %v1893 = vpop.f32.mrb[0].mxu0
        %v1894 = vadd.f32 0.0, %v1893
        %v1895 = vpop.f32.mrb[0].mxu0
        %1896 = vmatprep.mubr.bf16.mxu0 0
        %1897 = vmatmul.mubr.bf16.gmra.mrb[0].mxu0 %v1563
        %v1898 = vpop.f32.mrb[0].mxu0
        %v1899 = vadd.f32 0.0, %v1898
        %v1900 = vpop.f32.mrb[0].mxu0
        %v1901 = vpop.f32.mrb[0].mxu0
        %v1902 = vadd.f32 0.0, %v1901
        %v1903 = vpop.f32.mrb[0].mxu0
        %1904 = vmatprep.mubr.bf16.mxu0 0
        %1905 = vmatmul.mubr.bf16.gmra.mrb[0].mxu0 %v1564
        %v1906 = vpop.f32.mrb[0].mxu0
        %v1907 = vadd.f32 0.0, %v1906
        %v1908 = vpop.f32.mrb[0].mxu0
        %v1909 = vpop.f32.mrb[0].mxu0
        %v1910 = vadd.f32 0.0, %v1909
        %v1911 = vpop.f32.mrb[0].mxu0
        %1912 = vmatprep.mubr.bf16.mxu0 0
        %1913 = vmatmul.mubr.bf16.gmra.mrb[0].mxu0 %v1565
        %v1914 = vpop.f32.mrb[0].mxu0
        %v1915 = vadd.f32 0.0, %v1914
        %v1916 = vpop.f32.mrb[0].mxu0
        %v1917 = vpop.f32.mrb[0].mxu0
        %v1918 = vadd.f32 0.0, %v1917
        %v1919 = vpop.f32.mrb[0].mxu0
        %1920 = vmatprep.mubr.bf16.mxu0 0
        %1921 = vmatmul.mubr.bf16.gmra.mrb[0].mxu0 %v1566
        %v1922 = vpop.f32.mrb[0].mxu0
        %v1923 = vadd.f32 0.0, %v1922
        %v1924 = vpop.f32.mrb[0].mxu0
        %v1925 = vpop.f32.mrb[0].mxu0
        %v1926 = vadd.f32 0.0, %v1925
        %v1927 = vpop.f32.mrb[0].mxu0
        %1928 = vdwg.mxu0
        %v1945 = vunpack.c.l.b16 %v1524
        %v1946 = vunpack.c.l.b16 %v1525
        %v1947 = vunpack.c.l.b16 %v1526
        %v1948 = vunpack.c.l.b16 %v1527
        %v1949 = vunpack.c.l.b16 %v1528
        %v1950 = vunpack.c.l.b16 %v1529
        %v1951 = vunpack.c.l.b16 %v1530
        %v1952 = vunpack.c.l.b16 %v1531
        %v1953 = vunpack.c.l.b16 %v1532
        %v1954 = vunpack.c.l.b16 %v1533
        %v1955 = vunpack.c.l.b16 %v1534
        %v1956 = vunpack.c.l.b16 %v1535
        %v1957 = vunpack.c.l.b16 %v1536
        %v1958 = vunpack.c.l.b16 %v1537
        %v1959 = vunpack.c.l.b16 %v1538
        %v1960 = vunpack.c.l.b16 %v1539
        %v1961 = vpack.c.b16 %v1946, %v1945
        %v1962 = vpack.c.b16 %v1948, %v1947
        %v1963 = vpack.c.b16 %v1950, %v1949
        %v1964 = vpack.c.b16 %v1952, %v1951
        %v1965 = vpack.c.b16 %v1954, %v1953
        %v1966 = vpack.c.b16 %v1956, %v1955
        %v1967 = vpack.c.b16 %v1958, %v1957
        %v1968 = vpack.c.b16 %v1960, %v1959
        %1977 = vmatprep.subr.bf16.mxu0 0
        %1978 = vmatpush1.bf16.msra.mxu0 %v1961
        %1979 = vmatprep.subr.bf16.mxu0 0
        %1980 = vmatpush1.bf16.msra.mxu0 %v1962
        %1981 = vmatprep.subr.bf16.mxu0 0
        %1982 = vmatpush1.bf16.msra.mxu0 %v1963
        %1983 = vmatprep.subr.bf16.mxu0 0
        %1984 = vmatpush1.bf16.msra.mxu0 %v1964
        %1985 = vmatprep.subr.bf16.mxu0 0
        %1986 = vmatpush1.bf16.msra.mxu0 %v1965
        %1987 = vmatprep.subr.bf16.mxu0 0
        %1988 = vmatpush1.bf16.msra.mxu0 %v1966
        %1989 = vmatprep.subr.bf16.mxu0 0
        %1990 = vmatpush1.bf16.msra.mxu0 %v1967
        %1991 = vmatprep.subr.bf16.mxu0 0
        %1992 = vmatpush1.bf16.msra.mxu0 %v1968
        %1993 = vmatprep.subr.bf16.mxu0 0
        %1994 = vmatpush1.bf16.msra.mxu0 0
        %1995 = vmatprep.subr.bf16.mxu0 0
        %1996 = vmatpush1.bf16.msra.mxu0 0
        %1997 = vmatprep.subr.bf16.mxu0 0
        %1998 = vmatpush1.bf16.msra.mxu0 0
        %1999 = vmatprep.subr.bf16.mxu0 0
        %2000 = vmatpush1.bf16.msra.mxu0 0
        %2001 = vmatprep.subr.bf16.mxu0 0
        %2002 = vmatpush1.bf16.msra.mxu0 0
        %2003 = vmatprep.subr.bf16.mxu0 0
        %2004 = vmatpush1.bf16.msra.mxu0 0
        %2005 = vmatprep.subr.bf16.mxu0 0
        %2006 = vmatpush1.bf16.msra.mxu0 0
        %2007 = vmatprep.subr.bf16.mxu0 0
        %2008 = vmatpush1.bf16.msra.mxu0 0
        %2009 = vmatprep.mubr.bf16.mxu0 0
        %2010 = vmatmul.mubr.bf16.gmra.mrb[0].mxu0 %v1776
        %v2011 = vpop.f32.mrb[0].mxu0
        %v2012 = vadd.f32 %v1867, %v2011
        %v2013 = vpop.f32.mrb[0].mxu0
        %v2014 = vpop.f32.mrb[0].mxu0
        %v2015 = vadd.f32 %v1870, %v2014
        %v2016 = vpop.f32.mrb[0].mxu0
        %2017 = vmatprep.mubr.bf16.mxu0 0
        %2018 = vmatmul.mubr.bf16.gmra.mrb[0].mxu0 %v1777
        %v2019 = vpop.f32.mrb[0].mxu0
        %v2020 = vadd.f32 %v1875, %v2019
        %v2021 = vpop.f32.mrb[0].mxu0
        %v2022 = vpop.f32.mrb[0].mxu0
        %v2023 = vadd.f32 %v1878, %v2022
        %v2024 = vpop.f32.mrb[0].mxu0
        %2025 = vmatprep.mubr.bf16.mxu0 0
        %2026 = vmatmul.mubr.bf16.gmra.mrb[0].mxu0 %v1778
        %v2027 = vpop.f32.mrb[0].mxu0
        %v2028 = vadd.f32 %v1883, %v2027
        %v2029 = vpop.f32.mrb[0].mxu0
        %v2030 = vpop.f32.mrb[0].mxu0
        %v2031 = vadd.f32 %v1886, %v2030
        %v2032 = vpop.f32.mrb[0].mxu0
        %2033 = vmatprep.mubr.bf16.mxu0 0
        %2034 = vmatmul.mubr.bf16.gmra.mrb[0].mxu0 %v1779
        %v2035 = vpop.f32.mrb[0].mxu0
        %v2036 = vadd.f32 %v1891, %v2035
        %v2037 = vpop.f32.mrb[0].mxu0
        %v2038 = vpop.f32.mrb[0].mxu0
        %v2039 = vadd.f32 %v1894, %v2038
        %v2040 = vpop.f32.mrb[0].mxu0
        %2041 = vmatprep.mubr.bf16.mxu0 0
        %2042 = vmatmul.mubr.bf16.gmra.mrb[0].mxu0 %v1780
        %v2043 = vpop.f32.mrb[0].mxu0
        %v2044 = vadd.f32 %v1899, %v2043
        %v2045 = vpop.f32.mrb[0].mxu0
        %v2046 = vpop.f32.mrb[0].mxu0
        %v2047 = vadd.f32 %v1902, %v2046
        %v2048 = vpop.f32.mrb[0].mxu0
        %2049 = vmatprep.mubr.bf16.mxu0 0
        %2050 = vmatmul.mubr.bf16.gmra.mrb[0].mxu0 %v1781
        %v2051 = vpop.f32.mrb[0].mxu0
        %v2052 = vadd.f32 %v1907, %v2051
        %v2053 = vpop.f32.mrb[0].mxu0
        %v2054 = vpop.f32.mrb[0].mxu0
        %v2055 = vadd.f32 %v1910, %v2054
        %v2056 = vpop.f32.mrb[0].mxu0
        %2057 = vmatprep.mubr.bf16.mxu0 0
        %2058 = vmatmul.mubr.bf16.gmra.mrb[0].mxu0 %v1782
        %v2059 = vpop.f32.mrb[0].mxu0
        %v2060 = vadd.f32 %v1915, %v2059
        %v2061 = vpop.f32.mrb[0].mxu0
        %v2062 = vpop.f32.mrb[0].mxu0
        %v2063 = vadd.f32 %v1918, %v2062
        %v2064 = vpop.f32.mrb[0].mxu0
        %2065 = vmatprep.mubr.bf16.mxu0 0
        %2066 = vmatmul.mubr.bf16.gmra.mrb[0].mxu0 %v1783
        %v2067 = vpop.f32.mrb[0].mxu0
        %v2068 = vadd.f32 %v1923, %v2067
        %v2069 = vpop.f32.mrb[0].mxu0
        %v2070 = vpop.f32.mrb[0].mxu0
        %v2071 = vadd.f32 %v1926, %v2070
        %v2072 = vpop.f32.mrb[0].mxu0
        %2073 = vdwg.mxu0
        %v2075 = vlaneseq
        %v2076 = vshrl.u32 %v2075, 7
        %v2077 = vsub.s32 0, %v2076
        %v2078 = vrot.slane %v1558, %v2077
        %v2080 = vadd.f32 %v2012, %v2078
        %v2081 = vadd.f32 %v2015, %v2078
        %v2082 = vadd.f32 %v2020, %v2078
        %v2083 = vadd.f32 %v2023, %v2078
        %v2084 = vadd.f32 %v2028, %v2078
        %v2085 = vadd.f32 %v2031, %v2078
        %v2086 = vadd.f32 %v2036, %v2078
        %v2087 = vadd.f32 %v2039, %v2078
        %v2088 = vadd.f32 %v2044, %v2078
        %v2089 = vadd.f32 %v2047, %v2078
        %v2090 = vadd.f32 %v2052, %v2078
        %v2091 = vadd.f32 %v2055, %v2078
        %v2092 = vadd.f32 %v2060, %v2078
        %v2093 = vadd.f32 %v2063, %v2078
        %v2094 = vadd.f32 %v2068, %v2078
        %v2095 = vadd.f32 %v2071, %v2078
        %vm2096 = vcmp.gt.f32.partialorder %v2080, 0.0
        %vm2097 = vcmp.gt.f32.partialorder %v2081, 0.0
        %vm2098 = vcmp.gt.f32.partialorder %v2082, 0.0
        %vm2099 = vcmp.gt.f32.partialorder %v2083, 0.0
        %vm2100 = vcmp.gt.f32.partialorder %v2084, 0.0
        %vm2101 = vcmp.gt.f32.partialorder %v2085, 0.0
        %vm2102 = vcmp.gt.f32.partialorder %v2086, 0.0
        %vm2103 = vcmp.gt.f32.partialorder %v2087, 0.0
        %vm2104 = vcmp.gt.f32.partialorder %v2088, 0.0
        %vm2105 = vcmp.gt.f32.partialorder %v2089, 0.0
        %vm2106 = vcmp.gt.f32.partialorder %v2090, 0.0
        %vm2107 = vcmp.gt.f32.partialorder %v2091, 0.0
        %vm2108 = vcmp.gt.f32.partialorder %v2092, 0.0
        %vm2109 = vcmp.gt.f32.partialorder %v2093, 0.0
        %vm2110 = vcmp.gt.f32.partialorder %v2094, 0.0
        %vm2111 = vcmp.gt.f32.partialorder %v2095, 0.0
        %v2112 = vmul.f32 %v2080, 1.442695
        %v2113 = vpow.pop %v2112
        %v2114 = vmul.f32 %v2081, 1.442695
        %v2115 = vpow.pop %v2114
        %v2116 = vmul.f32 %v2082, 1.442695
        %v2117 = vpow.pop %v2116
        %v2118 = vmul.f32 %v2083, 1.442695
        %v2119 = vpow.pop %v2118
        %v2120 = vmul.f32 %v2084, 1.442695
        %v2121 = vpow.pop %v2120
        %v2122 = vmul.f32 %v2085, 1.442695
        %v2123 = vpow.pop %v2122
        %v2124 = vmul.f32 %v2086, 1.442695
        %v2125 = vpow.pop %v2124
        %v2126 = vmul.f32 %v2087, 1.442695
        %v2127 = vpow.pop %v2126
        %v2128 = vmul.f32 %v2088, 1.442695
        %v2129 = vpow.pop %v2128
        %v2130 = vmul.f32 %v2089, 1.442695
        %v2131 = vpow.pop %v2130
        %v2132 = vmul.f32 %v2090, 1.442695
        %v2133 = vpow.pop %v2132
        %v2134 = vmul.f32 %v2091, 1.442695
        %v2135 = vpow.pop %v2134
        %v2136 = vmul.f32 %v2092, 1.442695
        %v2137 = vpow.pop %v2136
        %v2138 = vmul.f32 %v2093, 1.442695
        %v2139 = vpow.pop %v2138
        %v2140 = vmul.f32 %v2094, 1.442695
        %v2141 = vpow.pop %v2140
        %v2142 = vmul.f32 %v2095, 1.442695
        %v2143 = vpow.pop %v2142
        %v2144 = vsub.f32 %v2113, 1.0
        %v2145 = vsub.f32 %v2115, 1.0
        %v2146 = vsub.f32 %v2117, 1.0
        %v2147 = vsub.f32 %v2119, 1.0
        %v2148 = vsub.f32 %v2121, 1.0
        %v2149 = vsub.f32 %v2123, 1.0
        %v2150 = vsub.f32 %v2125, 1.0
        %v2151 = vsub.f32 %v2127, 1.0
        %v2152 = vsub.f32 %v2129, 1.0
        %v2153 = vsub.f32 %v2131, 1.0
        %v2154 = vsub.f32 %v2133, 1.0
        %v2155 = vsub.f32 %v2135, 1.0
        %v2156 = vsub.f32 %v2137, 1.0
        %v2157 = vsub.f32 %v2139, 1.0
        %v2158 = vsub.f32 %v2141, 1.0
        %v2159 = vsub.f32 %v2143, 1.0
        %v2160 = vsel %vm2096, %v2080, %v2144
        %v2161 = vsel %vm2097, %v2081, %v2145
        %v2162 = vsel %vm2098, %v2082, %v2146
        %v2163 = vsel %vm2099, %v2083, %v2147
        %v2164 = vsel %vm2100, %v2084, %v2148
        %v2165 = vsel %vm2101, %v2085, %v2149
        %v2166 = vsel %vm2102, %v2086, %v2150
        %v2167 = vsel %vm2103, %v2087, %v2151
        %v2168 = vsel %vm2104, %v2088, %v2152
        %v2169 = vsel %vm2105, %v2089, %v2153
        %v2170 = vsel %vm2106, %v2090, %v2154
        %v2171 = vsel %vm2107, %v2091, %v2155
        %v2172 = vsel %vm2108, %v2092, %v2156
        %v2173 = vsel %vm2109, %v2093, %v2157
        %v2174 = vsel %vm2110, %v2094, %v2158
        %v2175 = vsel %vm2111, %v2095, %v2159
        %v2176 = vpack.c.bf16 %v1771, %v1771
        %2177 = vmatprep.subr.bf16.mxu0 0
        %2178 = vmatpush1.bf16.msra.mxu0 %v1816
        %2179 = vmatprep.subr.bf16.mxu0 0
        %2180 = vmatpush1.bf16.msra.mxu0 %v1817
        %2181 = vmatprep.subr.bf16.mxu0 0
        %2182 = vmatpush1.bf16.msra.mxu0 %v1818
        %2183 = vmatprep.subr.bf16.mxu0 0
        %2184 = vmatpush1.bf16.msra.mxu0 %v1819
        %2185 = vmatprep.subr.bf16.mxu0 0
        %2186 = vmatpush1.bf16.msra.mxu0 %v1820
        %2187 = vmatprep.subr.bf16.mxu0 0
        %2188 = vmatpush1.bf16.msra.mxu0 %v1821
        %2189 = vmatprep.subr.bf16.mxu0 0
        %2190 = vmatpush1.bf16.msra.mxu0 %v1822
        %2191 = vmatprep.subr.bf16.mxu0 0
        %2192 = vmatpush1.bf16.msra.mxu0 %v1823
        %2193 = vmatprep.subr.bf16.mxu0 0
        %2194 = vmatpush1.bf16.msra.mxu0 0
        %2195 = vmatprep.subr.bf16.mxu0 0
        %2196 = vmatpush1.bf16.msra.mxu0 0
        %2197 = vmatprep.subr.bf16.mxu0 0
        %2198 = vmatpush1.bf16.msra.mxu0 0
        %2199 = vmatprep.subr.bf16.mxu0 0
        %2200 = vmatpush1.bf16.msra.mxu0 0
        %2201 = vmatprep.subr.bf16.mxu0 0
        %2202 = vmatpush1.bf16.msra.mxu0 0
        %2203 = vmatprep.subr.bf16.mxu0 0
        %2204 = vmatpush1.bf16.msra.mxu0 0
        %2205 = vmatprep.subr.bf16.mxu0 0
        %2206 = vmatpush1.bf16.msra.mxu0 0
        %2207 = vmatprep.subr.bf16.mxu0 0
        %2208 = vmatpush1.bf16.msra.mxu0 0
        %2209 = vmatprep.mubr.bf16.mxu0 0
        %2210 = vmatmul.mubr.bf16.gmra.mrb[0].mxu0 %v1567
        %v2211 = vpop.f32.mrb[0].mxu0
        %v2212 = vadd.f32 0.0, %v2211
        %v2213 = vpop.f32.mrb[0].mxu0
        %v2214 = vpop.f32.mrb[0].mxu0
        %v2215 = vpop.f32.mrb[0].mxu0
        %2216 = vdwg.mxu0
        %2217 = vmatprep.subr.bf16.mxu0 0
        %2218 = vmatpush1.bf16.msra.mxu0 %v1961
        %2219 = vmatprep.subr.bf16.mxu0 0
        %2220 = vmatpush1.bf16.msra.mxu0 %v1962
        %2221 = vmatprep.subr.bf16.mxu0 0
        %2222 = vmatpush1.bf16.msra.mxu0 %v1963
        %2223 = vmatprep.subr.bf16.mxu0 0
        %2224 = vmatpush1.bf16.msra.mxu0 %v1964
        %2225 = vmatprep.subr.bf16.mxu0 0
        %2226 = vmatpush1.bf16.msra.mxu0 %v1965
        %2227 = vmatprep.subr.bf16.mxu0 0
        %2228 = vmatpush1.bf16.msra.mxu0 %v1966
        %2229 = vmatprep.subr.bf16.mxu0 0
        %2230 = vmatpush1.bf16.msra.mxu0 %v1967
        %2231 = vmatprep.subr.bf16.mxu0 0
        %2232 = vmatpush1.bf16.msra.mxu0 %v1968
        %2233 = vmatprep.subr.bf16.mxu0 0
        %2234 = vmatpush1.bf16.msra.mxu0 0
        %2235 = vmatprep.subr.bf16.mxu0 0
        %2236 = vmatpush1.bf16.msra.mxu0 0
        %2237 = vmatprep.subr.bf16.mxu0 0
        %2238 = vmatpush1.bf16.msra.mxu0 0
        %2239 = vmatprep.subr.bf16.mxu0 0
        %2240 = vmatpush1.bf16.msra.mxu0 0
        %2241 = vmatprep.subr.bf16.mxu0 0
        %2242 = vmatpush1.bf16.msra.mxu0 0
        %2243 = vmatprep.subr.bf16.mxu0 0
        %2244 = vmatpush1.bf16.msra.mxu0 0
        %2245 = vmatprep.subr.bf16.mxu0 0
        %2246 = vmatpush1.bf16.msra.mxu0 0
        %2247 = vmatprep.subr.bf16.mxu0 0
        %2248 = vmatpush1.bf16.msra.mxu0 0
        %2249 = vmatprep.mubr.bf16.mxu0 0
        %2250 = vmatmul.mubr.bf16.gmra.mrb[0].mxu0 %v2176
        %v2251 = vpop.f32.mrb[0].mxu0
        %v2252 = vadd.f32 %v2212, %v2251
        %v2253 = vpop.f32.mrb[0].mxu0
        %v2254 = vpop.f32.mrb[0].mxu0
        %v2255 = vpop.f32.mrb[0].mxu0
        %2256 = vdwg.mxu0
        %v2257 = vadd.f32 %v2252, %v2078
        %vm2258 = vcmp.gt.f32.partialorder %v2257, 0.0
        %v2259 = vmul.f32 %v2257, 1.442695
        %v2260 = vpow.pop %v2259
        %v2261 = vsub.f32 %v2260, 1.0
        %v2262 = vsel %vm2258, %v2257, %v2261
        %v2263 = vmul.f32 %v2262, 0.17677669
        %v2264 = vpack.c.bf16 %v2263, %v2263
        %v2265 = vpack.c.bf16 %v2161, %v2160
        %v2266 = vpack.c.bf16 %v2163, %v2162
        %v2267 = vpack.c.bf16 %v2165, %v2164
        %v2268 = vpack.c.bf16 %v2167, %v2166
        %v2269 = vpack.c.bf16 %v2169, %v2168
        %v2270 = vpack.c.bf16 %v2171, %v2170
        %v2271 = vpack.c.bf16 %v2173, %v2172
        %v2272 = vpack.c.bf16 %v2175, %v2174
        %2273 = vmatprep.subr.bf16.mxu0 0
        %2274 = vmatpush1.bf16.xpose.msra.mxu0 %v2265
        %2275 = vmatprep.subr.bf16.mxu0 0
        %2276 = vmatpush1.bf16.xpose.msra.mxu0 %v2266
        %2277 = vmatprep.subr.bf16.mxu0 0
        %2278 = vmatpush1.bf16.xpose.msra.mxu0 %v2267
        %2279 = vmatprep.subr.bf16.mxu0 0
        %2280 = vmatpush1.bf16.xpose.msra.mxu0 %v2268
        %2281 = vmatprep.subr.bf16.mxu0 0
        %2282 = vmatpush1.bf16.xpose.msra.mxu0 %v2269
        %2283 = vmatprep.subr.bf16.mxu0 0
        %2284 = vmatpush1.bf16.xpose.msra.mxu0 %v2270
        %2285 = vmatprep.subr.bf16.mxu0 0
        %2286 = vmatpush1.bf16.xpose.msra.mxu0 %v2271
        %2287 = vmatprep.subr.bf16.mxu0 0
        %2288 = vmatpush1.bf16.xpose.msra.mxu0 %v2272
        %2289 = vmatprep.subr.bf16.mxu0 0
        %2290 = vmatpush1.bf16.xpose.msra.mxu0 0
        %2291 = vmatprep.subr.bf16.mxu0 0
        %2292 = vmatpush1.bf16.xpose.msra.mxu0 0
        %2293 = vmatprep.subr.bf16.mxu0 0
        %2294 = vmatpush1.bf16.xpose.msra.mxu0 0
        %2295 = vmatprep.subr.bf16.mxu0 0
        %2296 = vmatpush1.bf16.xpose.msra.mxu0 0
        %2297 = vmatprep.subr.bf16.mxu0 0
        %2298 = vmatpush1.bf16.xpose.msra.mxu0 0
        %2299 = vmatprep.subr.bf16.mxu0 0
        %2300 = vmatpush1.bf16.xpose.msra.mxu0 0
        %2301 = vmatprep.subr.bf16.mxu0 0
        %2302 = vmatpush1.bf16.xpose.msra.mxu0 0
        %2303 = vmatprep.subr.bf16.mxu0 0
        %2304 = vmatpush1.bf16.xpose.msra.mxu0 0
        %2305 = vmatprep.mubr.bf16.mxu0 0
        %2306 = vmatmul.mubr.bf16.gmra.mrb[0].mxu0 %v2264
        %v2307 = vpop.f32.mrb[0].mxu0
        %v2308 = vadd.f32 0.0, %v2307
        %v2309 = vpop.f32.mrb[0].mxu0
        %v2310 = vpop.f32.mrb[0].mxu0
        %v2311 = vpop.f32.mrb[0].mxu0
        %2312 = vdwg.mxu0
        %v2313 = vsel %vm384, %v2308, -1e+09
        %2314 = vmax.xlane.f32.xlu0 %v2313
        %v2315 = vpop.xlane.xlu0 %2314
        %v2316 = vsub.f32 %v2313, %v2315
        %v2317 = vmul.f32 %v2316, 1.442695
        %v2318 = vpow.pop %v2317
        %2319 = vadd.xlane.f32.xlu0 %v2318
        %v2320 = vpop.xlane.xlu0 %2319
        %v2321 = vrcp.pop %v2320
        %v2322 = vmul.f32 %v2320, %v2321
        %v2323 = vsub.f32 2.0, %v2322
        %v2324 = vmul.f32 %v2321, %v2323
        %v2325 = vmul.f32 %v2324, %v385
        %2327 = vset.pattern.permute.xlu0 0
        %2328 = vperm.xlu0 %2327, %v2325
        %v2329 = vpop.permute.xlu0 %2328
        %v2331 = vmul.f32 %v2318, %v2329
        %s2332 = scalar_lea.vmem [#allocation2], 8
        %2333 = vst [vmem:[%s2332] sm:$0xff] %v2331
        %s2334 = sadd.s32 %s1212, 1
        %s2335 = smul.u32 %s2334, 8
        %s2336 = smul.addr %s2335, 16
        %s2337 = scalar_lea.hbm %s11, %s2336
        %s2338 = scalar_lea.sflag [#allocation3], 1
        // Predicated region
        $region77: #{subcross_gmn_forward.1} parent=63 // pred_check
          _
        $region78: #{subcross_gmn_forward.1} parent=63 // pred_check_branch
          %2340 = sbr.rel target = $region80
        $region79: #{subcross_gmn_forward.1} parent=63 // pred_region
          %2341 = sst [smem:[#allocation10]] [#allocation13]
          %2342 = sst [smem:[#allocation11]] [#allocation12]
        $region80: #{subcross_gmn_forward.1} parent=63 // pred_fallthru
          _
        %2344 = shalt.err (0)
        %s2346 = sshll.u32 %s2332, 4
        %s2347 = int_to_ptr.vmem [resolvable:$true] %s2346
        %2349 = dma.vmem_to_hbm [thread:$0]  %s2347, 128, %s2337, %s2338
        %v2350 = vpack.c.bf16 %v2331, %v2331
        %v2351 = vpack.c.bf16 %v2262, %v2262
        %2352 = vxpose.xlu0.c.b16.start [1/8] %v2350, 128
        %2353 = vxpose.xlu0.c.b16.cont [2/8] 0, 128
        %2354 = vxpose.xlu0.c.b16.cont [3/8] 0, 128
        %2355 = vxpose.xlu0.c.b16.cont [4/8] 0, 128
        %2356 = vxpose.xlu0.c.b16.cont [5/8] 0, 128
        %2357 = vxpose.xlu0.c.b16.cont [6/8] 0, 128
        %2358 = vxpose.xlu0.c.b16.cont [7/8] 0, 128
        %2359 = vxpose.xlu0.c.b16.end [8/8] 0, 128
        %v2360 = vpop.trf.xlu0
        %v2361 = vpop.trf.xlu0
        %v2362 = vpop.trf.xlu0
        %v2363 = vpop.trf.xlu0
        %v2364 = vpop.trf.xlu0
        %v2365 = vpop.trf.xlu0
        %v2366 = vpop.trf.xlu0
        %v2367 = vpop.trf.xlu0
        %v2369 = vsel %vm607, %v2360, 0
        %v2372 = vsel %vm607, %v2361, 0
        %v2375 = vsel %vm607, %v2362, 0
        %v2378 = vsel %vm607, %v2363, 0
        %v2381 = vsel %vm607, %v2364, 0
        %v2384 = vsel %vm607, %v2365, 0
        %v2387 = vsel %vm607, %v2366, 0
        %v2390 = vsel %vm607, %v2367, 0
        %v2393 = vsel %vm611, %v2351, 0
        %2395 = vmatprep.subr.bf16.mxu0 0
        %2396 = vmatpush1.bf16.msra.mxu0 %v2393
        %2397 = vmatprep.subr.bf16.mxu0 0
        %2398 = vmatpush1.bf16.msra.mxu0 0
        %2399 = vmatprep.subr.bf16.mxu0 0
        %2400 = vmatpush1.bf16.msra.mxu0 0
        %2401 = vmatprep.subr.bf16.mxu0 0
        %2402 = vmatpush1.bf16.msra.mxu0 0
        %2403 = vmatprep.subr.bf16.mxu0 0
        %2404 = vmatpush1.bf16.msra.mxu0 0
        %2405 = vmatprep.subr.bf16.mxu0 0
        %2406 = vmatpush1.bf16.msra.mxu0 0
        %2407 = vmatprep.subr.bf16.mxu0 0
        %2408 = vmatpush1.bf16.msra.mxu0 0
        %2409 = vmatprep.subr.bf16.mxu0 0
        %2410 = vmatpush1.bf16.msra.mxu0 0
        %2411 = vmatprep.subr.bf16.mxu0 0
        %2412 = vmatpush1.bf16.msra.mxu0 0
        %2413 = vmatprep.subr.bf16.mxu0 0
        %2414 = vmatpush1.bf16.msra.mxu0 0
        %2415 = vmatprep.subr.bf16.mxu0 0
        %2416 = vmatpush1.bf16.msra.mxu0 0
        %2417 = vmatprep.subr.bf16.mxu0 0
        %2418 = vmatpush1.bf16.msra.mxu0 0
        %2419 = vmatprep.subr.bf16.mxu0 0
        %2420 = vmatpush1.bf16.msra.mxu0 0
        %2421 = vmatprep.subr.bf16.mxu0 0
        %2422 = vmatpush1.bf16.msra.mxu0 0
        %2423 = vmatprep.subr.bf16.mxu0 0
        %2424 = vmatpush1.bf16.msra.mxu0 0
        %2425 = vmatprep.subr.bf16.mxu0 0
        %2426 = vmatpush1.bf16.msra.mxu0 0
        %2427 = vmatprep.mubr.bf16.mxu0 0
        %2428 = vmatmul.mubr.bf16.gmra.mrb[0].mxu0 %v2369
        %v2429 = vpop.f32.mrb[0].mxu0
        %v2430 = vadd.f32 0.0, %v2429
        %v2431 = vpop.f32.mrb[0].mxu0
        %v2432 = vpop.f32.mrb[0].mxu0
        %v2433 = vadd.f32 0.0, %v2432
        %v2434 = vpop.f32.mrb[0].mxu0
        %2435 = vmatprep.mubr.bf16.mxu0 0
        %2436 = vmatmul.mubr.bf16.gmra.mrb[0].mxu0 %v2372
        %v2437 = vpop.f32.mrb[0].mxu0
        %v2438 = vadd.f32 0.0, %v2437
        %v2439 = vpop.f32.mrb[0].mxu0
        %v2440 = vpop.f32.mrb[0].mxu0
        %v2441 = vadd.f32 0.0, %v2440
        %v2442 = vpop.f32.mrb[0].mxu0
        %2443 = vmatprep.mubr.bf16.mxu0 0
        %2444 = vmatmul.mubr.bf16.gmra.mrb[0].mxu0 %v2375
        %v2445 = vpop.f32.mrb[0].mxu0
        %v2446 = vadd.f32 0.0, %v2445
        %v2447 = vpop.f32.mrb[0].mxu0
        %v2448 = vpop.f32.mrb[0].mxu0
        %v2449 = vadd.f32 0.0, %v2448
        %v2450 = vpop.f32.mrb[0].mxu0
        %2451 = vmatprep.mubr.bf16.mxu0 0
        %2452 = vmatmul.mubr.bf16.gmra.mrb[0].mxu0 %v2378
        %v2453 = vpop.f32.mrb[0].mxu0
        %v2454 = vadd.f32 0.0, %v2453
        %v2455 = vpop.f32.mrb[0].mxu0
        %v2456 = vpop.f32.mrb[0].mxu0
        %v2457 = vadd.f32 0.0, %v2456
        %v2458 = vpop.f32.mrb[0].mxu0
        %2459 = vmatprep.mubr.bf16.mxu0 0
        %2460 = vmatmul.mubr.bf16.gmra.mrb[0].mxu0 %v2381
        %v2461 = vpop.f32.mrb[0].mxu0
        %v2462 = vadd.f32 0.0, %v2461
        %v2463 = vpop.f32.mrb[0].mxu0
        %v2464 = vpop.f32.mrb[0].mxu0
        %v2465 = vadd.f32 0.0, %v2464
        %v2466 = vpop.f32.mrb[0].mxu0
        %2467 = vmatprep.mubr.bf16.mxu0 0
        %2468 = vmatmul.mubr.bf16.gmra.mrb[0].mxu0 %v2384
        %v2469 = vpop.f32.mrb[0].mxu0
        %v2470 = vadd.f32 0.0, %v2469
        %v2471 = vpop.f32.mrb[0].mxu0
        %v2472 = vpop.f32.mrb[0].mxu0
        %v2473 = vadd.f32 0.0, %v2472
        %v2474 = vpop.f32.mrb[0].mxu0
        %2475 = vmatprep.mubr.bf16.mxu0 0
        %2476 = vmatmul.mubr.bf16.gmra.mrb[0].mxu0 %v2387
        %v2477 = vpop.f32.mrb[0].mxu0
        %v2478 = vadd.f32 0.0, %v2477
        %v2479 = vpop.f32.mrb[0].mxu0
        %v2480 = vpop.f32.mrb[0].mxu0
        %v2481 = vadd.f32 0.0, %v2480
        %v2482 = vpop.f32.mrb[0].mxu0
        %2483 = vmatprep.mubr.bf16.mxu0 0
        %2484 = vmatmul.mubr.bf16.gmra.mrb[0].mxu0 %v2390
        %v2485 = vpop.f32.mrb[0].mxu0
        %v2486 = vadd.f32 0.0, %v2485
        %v2487 = vpop.f32.mrb[0].mxu0
        %v2488 = vpop.f32.mrb[0].mxu0
        %v2489 = vadd.f32 0.0, %v2488
        %v2490 = vpop.f32.mrb[0].mxu0
        %2491 = vdwg.mxu0
        %2492 = vmatprep.subr.bf16.mxu0 0
        %2493 = vmatpush1.bf16.msra.mxu0 %v2265
        %2494 = vmatprep.subr.bf16.mxu0 0
        %2495 = vmatpush1.bf16.msra.mxu0 %v2266
        %2496 = vmatprep.subr.bf16.mxu0 0
        %2497 = vmatpush1.bf16.msra.mxu0 %v2267
        %2498 = vmatprep.subr.bf16.mxu0 0
        %2499 = vmatpush1.bf16.msra.mxu0 %v2268
        %2500 = vmatprep.subr.bf16.mxu0 0
        %2501 = vmatpush1.bf16.msra.mxu0 %v2269
        %2502 = vmatprep.subr.bf16.mxu0 0
        %2503 = vmatpush1.bf16.msra.mxu0 %v2270
        %2504 = vmatprep.subr.bf16.mxu0 0
        %2505 = vmatpush1.bf16.msra.mxu0 %v2271
        %2506 = vmatprep.subr.bf16.mxu0 0
        %2507 = vmatpush1.bf16.msra.mxu0 %v2272
        %2508 = vmatprep.subr.bf16.mxu0 0
        %2509 = vmatpush1.bf16.msra.mxu0 0
        %2510 = vmatprep.subr.bf16.mxu0 0
        %2511 = vmatpush1.bf16.msra.mxu0 0
        %2512 = vmatprep.subr.bf16.mxu0 0
        %2513 = vmatpush1.bf16.msra.mxu0 0
        %2514 = vmatprep.subr.bf16.mxu0 0
        %2515 = vmatpush1.bf16.msra.mxu0 0
        %2516 = vmatprep.subr.bf16.mxu0 0
        %2517 = vmatpush1.bf16.msra.mxu0 0
        %2518 = vmatprep.subr.bf16.mxu0 0
        %2519 = vmatpush1.bf16.msra.mxu0 0
        %2520 = vmatprep.subr.bf16.mxu0 0
        %2521 = vmatpush1.bf16.msra.mxu0 0
        %2522 = vmatprep.subr.bf16.mxu0 0
        %2523 = vmatpush1.bf16.msra.mxu0 0
        %2524 = vmatprep.mubr.bf16.mxu0 0
        %2525 = vmatmul.mubr.bf16.gmra.mrb[0].mxu0 %v2350
        %v2526 = vpop.f32.mrb[0].mxu0
        %v2527 = vadd.f32 0.0, %v2526
        %v2528 = vpop.f32.mrb[0].mxu0
        %v2529 = vpop.f32.mrb[0].mxu0
        %v2530 = vpop.f32.mrb[0].mxu0
        %2531 = vdwg.mxu0
        %s2532 = sld [smem:[#allocation4 + $0x80]]
        %v2533 = vld [vmem:[%s360] sm:$0xff]
        %v2534 = vld [vmem:[%s360 + $0x8] sm:$0xff]
        %v2535 = vld [vmem:[%s360 + $0x10] sm:$0xff]
        %v2536 = vld [vmem:[%s360 + $0x18] sm:$0xff]
        %v2537 = vld [vmem:[%s360 + $0x20] sm:$0xff]
        %v2538 = vld [vmem:[%s360 + $0x28] sm:$0xff]
        %v2539 = vld [vmem:[%s360 + $0x30] sm:$0xff]
        %v2540 = vld [vmem:[%s360 + $0x38] sm:$0xff]
        %v2541 = vld [vmem:[%s360 + $0x40] sm:$0xff]
        %v2542 = vld [vmem:[%s360 + $0x48] sm:$0xff]
        %v2543 = vld [vmem:[%s360 + $0x50] sm:$0xff]
        %v2544 = vld [vmem:[%s360 + $0x58] sm:$0xff]
        %v2545 = vld [vmem:[%s360 + $0x60] sm:$0xff]
        %v2546 = vld [vmem:[%s360 + $0x68] sm:$0xff]
        %v2547 = vld [vmem:[%s360 + $0x70] sm:$0xff]
        %v2548 = vld [vmem:[%s360 + $0x78] sm:$0xff]
        %v2549 = vstv %s2532
        %v2550 = vmul.f32 %v2549, %v2533
        %v2551 = vmul.f32 %v2549, %v2534
        %v2552 = vmul.f32 %v2549, %v2535
        %v2553 = vmul.f32 %v2549, %v2536
        %v2554 = vmul.f32 %v2549, %v2537
        %v2555 = vmul.f32 %v2549, %v2538
        %v2556 = vmul.f32 %v2549, %v2539
        %v2557 = vmul.f32 %v2549, %v2540
        %v2558 = vmul.f32 %v2549, %v2541
        %v2559 = vmul.f32 %v2549, %v2542
        %v2560 = vmul.f32 %v2549, %v2543
        %v2561 = vmul.f32 %v2549, %v2544
        %v2562 = vmul.f32 %v2549, %v2545
        %v2563 = vmul.f32 %v2549, %v2546
        %v2564 = vmul.f32 %v2549, %v2547
        %v2565 = vmul.f32 %v2549, %v2548
        %s2566 = sld [smem:[#allocation4 + $0x81]]
        %v2567 = vstv %s2566
        %v2568 = vmul.f32 %v2567, %v2160
        %v2569 = vmul.f32 %v2567, %v2161
        %v2570 = vmul.f32 %v2567, %v2162
        %v2571 = vmul.f32 %v2567, %v2163
        %v2572 = vmul.f32 %v2567, %v2164
        %v2573 = vmul.f32 %v2567, %v2165
        %v2574 = vmul.f32 %v2567, %v2166
        %v2575 = vmul.f32 %v2567, %v2167
        %v2576 = vmul.f32 %v2567, %v2168
        %v2577 = vmul.f32 %v2567, %v2169
        %v2578 = vmul.f32 %v2567, %v2170
        %v2579 = vmul.f32 %v2567, %v2171
        %v2580 = vmul.f32 %v2567, %v2172
        %v2581 = vmul.f32 %v2567, %v2173
        %v2582 = vmul.f32 %v2567, %v2174
        %v2583 = vmul.f32 %v2567, %v2175
        %v2584 = vadd.f32 %v2550, %v2568
        %v2585 = vadd.f32 %v2551, %v2569
        %v2586 = vadd.f32 %v2552, %v2570
        %v2587 = vadd.f32 %v2553, %v2571
        %v2588 = vadd.f32 %v2554, %v2572
        %v2589 = vadd.f32 %v2555, %v2573
        %v2590 = vadd.f32 %v2556, %v2574
        %v2591 = vadd.f32 %v2557, %v2575
        %v2592 = vadd.f32 %v2558, %v2576
        %v2593 = vadd.f32 %v2559, %v2577
        %v2594 = vadd.f32 %v2560, %v2578
        %v2595 = vadd.f32 %v2561, %v2579
        %v2596 = vadd.f32 %v2562, %v2580
        %v2597 = vadd.f32 %v2563, %v2581
        %v2598 = vadd.f32 %v2564, %v2582
        %v2599 = vadd.f32 %v2565, %v2583
        %s2600 = sld [smem:[#allocation4 + $0x82]]
        %v2601 = vstv %s2600
        %v2602 = vmul.f32 %v2601, %v2430
        %v2603 = vmul.f32 %v2601, %v2433
        %v2604 = vmul.f32 %v2601, %v2438
        %v2605 = vmul.f32 %v2601, %v2441
        %v2606 = vmul.f32 %v2601, %v2446
        %v2607 = vmul.f32 %v2601, %v2449
        %v2608 = vmul.f32 %v2601, %v2454
        %v2609 = vmul.f32 %v2601, %v2457
        %v2610 = vmul.f32 %v2601, %v2462
        %v2611 = vmul.f32 %v2601, %v2465
        %v2612 = vmul.f32 %v2601, %v2470
        %v2613 = vmul.f32 %v2601, %v2473
        %v2614 = vmul.f32 %v2601, %v2478
        %v2615 = vmul.f32 %v2601, %v2481
        %v2616 = vmul.f32 %v2601, %v2486
        %v2617 = vmul.f32 %v2601, %v2489
        %v2618 = vadd.f32 %v2584, %v2602
        %v2619 = vadd.f32 %v2585, %v2603
        %v2620 = vadd.f32 %v2586, %v2604
        %v2621 = vadd.f32 %v2587, %v2605
        %v2622 = vadd.f32 %v2588, %v2606
        %v2623 = vadd.f32 %v2589, %v2607
        %v2624 = vadd.f32 %v2590, %v2608
        %v2625 = vadd.f32 %v2591, %v2609
        %v2626 = vadd.f32 %v2592, %v2610
        %v2627 = vadd.f32 %v2593, %v2611
        %v2628 = vadd.f32 %v2594, %v2612
        %v2629 = vadd.f32 %v2595, %v2613
        %v2630 = vadd.f32 %v2596, %v2614
        %v2631 = vadd.f32 %v2597, %v2615
        %v2632 = vadd.f32 %v2598, %v2616
        %v2633 = vadd.f32 %v2599, %v2617
        %s2634 = sld [smem:[#allocation6 + $0x80]]
        %v2635 = vld [vmem:[%s364] sm:$0xff]
        %v2636 = vstv %s2634
        %v2637 = vmul.f32 %v2636, %v2635
        %s2638 = sld [smem:[#allocation6 + $0x81]]
        %v2639 = vstv %s2638
        %v2640 = vmul.f32 %v2639, %v2262
        %v2641 = vadd.f32 %v2637, %v2640
        %s2642 = sld [smem:[#allocation6 + $0x82]]
        %v2643 = vstv %s2642
        %v2644 = vmul.f32 %v2643, %v2527
        %v2645 = vadd.f32 %v2641, %v2644
        %s2646 = scalar_lea.vmem %s4, 128
        %v2647 = vld [vmem:[%s2646] sm:$0xf]
        %v2648 = vld [vmem:[%s2646 + $0x4] sm:$0xf]
        %v2649 = vld [vmem:[%s2646 + $0x8] sm:$0xf]
        %v2650 = vld [vmem:[%s2646 + $0xc] sm:$0xf]
        %v2651 = vld [vmem:[%s2646 + $0x10] sm:$0xf]
        %v2652 = vld [vmem:[%s2646 + $0x14] sm:$0xf]
        %v2653 = vld [vmem:[%s2646 + $0x18] sm:$0xf]
        %v2654 = vld [vmem:[%s2646 + $0x1c] sm:$0xf]
        %v2655 = vld [vmem:[%s2646 + $0x20] sm:$0xf]
        %v2656 = vld [vmem:[%s2646 + $0x24] sm:$0xf]
        %v2657 = vld [vmem:[%s2646 + $0x28] sm:$0xf]
        %v2658 = vld [vmem:[%s2646 + $0x2c] sm:$0xf]
        %v2659 = vld [vmem:[%s2646 + $0x30] sm:$0xf]
        %v2660 = vld [vmem:[%s2646 + $0x34] sm:$0xf]
        %v2661 = vld [vmem:[%s2646 + $0x38] sm:$0xf]
        %v2662 = vld [vmem:[%s2646 + $0x3c] sm:$0xf]
        %s2663 = scalar_lea.vmem %s5, 128
        %v2664 = vld [vmem:[%s2663] sm:$0xf]
        %v2665 = vld [vmem:[%s2663 + $0x4] sm:$0xf]
        %v2666 = vld [vmem:[%s2663 + $0x8] sm:$0xf]
        %v2667 = vld [vmem:[%s2663 + $0xc] sm:$0xf]
        %v2668 = vld [vmem:[%s2663 + $0x10] sm:$0xf]
        %v2669 = vld [vmem:[%s2663 + $0x14] sm:$0xf]
        %v2670 = vld [vmem:[%s2663 + $0x18] sm:$0xf]
        %v2671 = vld [vmem:[%s2663 + $0x1c] sm:$0xf]
        %v2672 = vld [vmem:[%s2663 + $0x20] sm:$0xf]
        %v2673 = vld [vmem:[%s2663 + $0x24] sm:$0xf]
        %v2674 = vld [vmem:[%s2663 + $0x28] sm:$0xf]
        %v2675 = vld [vmem:[%s2663 + $0x2c] sm:$0xf]
        %v2676 = vld [vmem:[%s2663 + $0x30] sm:$0xf]
        %v2677 = vld [vmem:[%s2663 + $0x34] sm:$0xf]
        %v2678 = vld [vmem:[%s2663 + $0x38] sm:$0xf]
        %v2679 = vld [vmem:[%s2663 + $0x3c] sm:$0xf]
        %s2680 = scalar_lea.vmem %s6, 2
        %v2681 = vld [vmem:[%s2680] sm:$0x1]
        %v2682 = vpack.c.bf16 %v2619, %v2618
        %v2683 = vpack.c.bf16 %v2621, %v2620
        %v2684 = vpack.c.bf16 %v2623, %v2622
        %v2685 = vpack.c.bf16 %v2625, %v2624
        %v2686 = vpack.c.bf16 %v2627, %v2626
        %v2687 = vpack.c.bf16 %v2629, %v2628
        %v2688 = vpack.c.bf16 %v2631, %v2630
        %v2689 = vpack.c.bf16 %v2633, %v2632
        %v2690 = vpack.c.bf16 %v2645, %v2645
        %v2691 = vld [vmem:[%s369] sm:$0xf]
        %v2692 = vld [vmem:[%s369 + $0x4] sm:$0xf]
        %v2693 = vld [vmem:[%s369 + $0x8] sm:$0xf]
        %v2694 = vld [vmem:[%s369 + $0xc] sm:$0xf]
        %v2695 = vld [vmem:[%s369 + $0x10] sm:$0xf]
        %v2696 = vld [vmem:[%s369 + $0x14] sm:$0xf]
        %v2697 = vld [vmem:[%s369 + $0x18] sm:$0xf]
        %v2698 = vld [vmem:[%s369 + $0x1c] sm:$0xf]
        %v2699 = vld [vmem:[%s369 + $0x20] sm:$0xf]
        %v2700 = vld [vmem:[%s369 + $0x24] sm:$0xf]
        %v2701 = vld [vmem:[%s369 + $0x28] sm:$0xf]
        %v2702 = vld [vmem:[%s369 + $0x2c] sm:$0xf]
        %v2703 = vld [vmem:[%s369 + $0x30] sm:$0xf]
        %v2704 = vld [vmem:[%s369 + $0x34] sm:$0xf]
        %v2705 = vld [vmem:[%s369 + $0x38] sm:$0xf]
        %v2706 = vld [vmem:[%s369 + $0x3c] sm:$0xf]
        %v2723 = vunpack.c.l.b16 %v2691
        %v2724 = vunpack.c.l.b16 %v2692
        %v2725 = vunpack.c.l.b16 %v2693
        %v2726 = vunpack.c.l.b16 %v2694
        %v2727 = vunpack.c.l.b16 %v2695
        %v2728 = vunpack.c.l.b16 %v2696
        %v2729 = vunpack.c.l.b16 %v2697
        %v2730 = vunpack.c.l.b16 %v2698
        %v2731 = vunpack.c.l.b16 %v2699
        %v2732 = vunpack.c.l.b16 %v2700
        %v2733 = vunpack.c.l.b16 %v2701
        %v2734 = vunpack.c.l.b16 %v2702
        %v2735 = vunpack.c.l.b16 %v2703
        %v2736 = vunpack.c.l.b16 %v2704
        %v2737 = vunpack.c.l.b16 %v2705
        %v2738 = vunpack.c.l.b16 %v2706
        %v2739 = vpack.c.b16 %v2724, %v2723
        %v2740 = vpack.c.b16 %v2726, %v2725
        %v2741 = vpack.c.b16 %v2728, %v2727
        %v2742 = vpack.c.b16 %v2730, %v2729
        %v2743 = vpack.c.b16 %v2732, %v2731
        %v2744 = vpack.c.b16 %v2734, %v2733
        %v2745 = vpack.c.b16 %v2736, %v2735
        %v2746 = vpack.c.b16 %v2738, %v2737
        %2755 = vmatprep.subr.bf16.mxu0 0
        %2756 = vmatpush1.bf16.msra.mxu0 %v2682
        %2757 = vmatprep.subr.bf16.mxu0 0
        %2758 = vmatpush1.bf16.msra.mxu0 %v2683
        %2759 = vmatprep.subr.bf16.mxu0 0
        %2760 = vmatpush1.bf16.msra.mxu0 %v2684
        %2761 = vmatprep.subr.bf16.mxu0 0
        %2762 = vmatpush1.bf16.msra.mxu0 %v2685
        %2763 = vmatprep.subr.bf16.mxu0 0
        %2764 = vmatpush1.bf16.msra.mxu0 %v2686
        %2765 = vmatprep.subr.bf16.mxu0 0
        %2766 = vmatpush1.bf16.msra.mxu0 %v2687
        %2767 = vmatprep.subr.bf16.mxu0 0
        %2768 = vmatpush1.bf16.msra.mxu0 %v2688
        %2769 = vmatprep.subr.bf16.mxu0 0
        %2770 = vmatpush1.bf16.msra.mxu0 %v2689
        %2771 = vmatprep.subr.bf16.mxu0 0
        %2772 = vmatpush1.bf16.msra.mxu0 0
        %2773 = vmatprep.subr.bf16.mxu0 0
        %2774 = vmatpush1.bf16.msra.mxu0 0
        %2775 = vmatprep.subr.bf16.mxu0 0
        %2776 = vmatpush1.bf16.msra.mxu0 0
        %2777 = vmatprep.subr.bf16.mxu0 0
        %2778 = vmatpush1.bf16.msra.mxu0 0
        %2779 = vmatprep.subr.bf16.mxu0 0
        %2780 = vmatpush1.bf16.msra.mxu0 0
        %2781 = vmatprep.subr.bf16.mxu0 0
        %2782 = vmatpush1.bf16.msra.mxu0 0
        %2783 = vmatprep.subr.bf16.mxu0 0
        %2784 = vmatpush1.bf16.msra.mxu0 0
        %2785 = vmatprep.subr.bf16.mxu0 0
        %2786 = vmatpush1.bf16.msra.mxu0 0
        %2787 = vmatprep.mubr.bf16.mxu0 0
        %2788 = vmatmul.mubr.bf16.gmra.mrb[0].mxu0 %v2739
        %v2789 = vpop.f32.mrb[0].mxu0
        %v2790 = vadd.f32 0.0, %v2789
        %v2791 = vpop.f32.mrb[0].mxu0
        %v2792 = vpop.f32.mrb[0].mxu0
        %v2793 = vadd.f32 0.0, %v2792
        %v2794 = vpop.f32.mrb[0].mxu0
        %2795 = vmatprep.mubr.bf16.mxu0 0
        %2796 = vmatmul.mubr.bf16.gmra.mrb[0].mxu0 %v2740
        %v2797 = vpop.f32.mrb[0].mxu0
        %v2798 = vadd.f32 0.0, %v2797
        %v2799 = vpop.f32.mrb[0].mxu0
        %v2800 = vpop.f32.mrb[0].mxu0
        %v2801 = vadd.f32 0.0, %v2800
        %v2802 = vpop.f32.mrb[0].mxu0
        %2803 = vmatprep.mubr.bf16.mxu0 0
        %2804 = vmatmul.mubr.bf16.gmra.mrb[0].mxu0 %v2741
        %v2805 = vpop.f32.mrb[0].mxu0
        %v2806 = vadd.f32 0.0, %v2805
        %v2807 = vpop.f32.mrb[0].mxu0
        %v2808 = vpop.f32.mrb[0].mxu0
        %v2809 = vadd.f32 0.0, %v2808
        %v2810 = vpop.f32.mrb[0].mxu0
        %2811 = vmatprep.mubr.bf16.mxu0 0
        %2812 = vmatmul.mubr.bf16.gmra.mrb[0].mxu0 %v2742
        %v2813 = vpop.f32.mrb[0].mxu0
        %v2814 = vadd.f32 0.0, %v2813
        %v2815 = vpop.f32.mrb[0].mxu0
        %v2816 = vpop.f32.mrb[0].mxu0
        %v2817 = vadd.f32 0.0, %v2816
        %v2818 = vpop.f32.mrb[0].mxu0
        %2819 = vmatprep.mubr.bf16.mxu0 0
        %2820 = vmatmul.mubr.bf16.gmra.mrb[0].mxu0 %v2743
        %v2821 = vpop.f32.mrb[0].mxu0
        %v2822 = vadd.f32 0.0, %v2821
        %v2823 = vpop.f32.mrb[0].mxu0
        %v2824 = vpop.f32.mrb[0].mxu0
        %v2825 = vadd.f32 0.0, %v2824
        %v2826 = vpop.f32.mrb[0].mxu0
        %2827 = vmatprep.mubr.bf16.mxu0 0
        %2828 = vmatmul.mubr.bf16.gmra.mrb[0].mxu0 %v2744
        %v2829 = vpop.f32.mrb[0].mxu0
        %v2830 = vadd.f32 0.0, %v2829
        %v2831 = vpop.f32.mrb[0].mxu0
        %v2832 = vpop.f32.mrb[0].mxu0
        %v2833 = vadd.f32 0.0, %v2832
        %v2834 = vpop.f32.mrb[0].mxu0
        %2835 = vmatprep.mubr.bf16.mxu0 0
        %2836 = vmatmul.mubr.bf16.gmra.mrb[0].mxu0 %v2745
        %v2837 = vpop.f32.mrb[0].mxu0
        %v2838 = vadd.f32 0.0, %v2837
        %v2839 = vpop.f32.mrb[0].mxu0
        %v2840 = vpop.f32.mrb[0].mxu0
        %v2841 = vadd.f32 0.0, %v2840
        %v2842 = vpop.f32.mrb[0].mxu0
        %2843 = vmatprep.mubr.bf16.mxu0 0
        %2844 = vmatmul.mubr.bf16.gmra.mrb[0].mxu0 %v2746
        %v2845 = vpop.f32.mrb[0].mxu0
        %v2846 = vadd.f32 0.0, %v2845
        %v2847 = vpop.f32.mrb[0].mxu0
        %v2848 = vpop.f32.mrb[0].mxu0
        %v2849 = vadd.f32 0.0, %v2848
        %v2850 = vpop.f32.mrb[0].mxu0
        %2851 = vdwg.mxu0
        %v2852 = vld [vmem:[%s373] sm:$0xf]
        %v2854 = vsel %vm607, %v2852, 0
        %v2857 = vsel %vm611, %v2690, 0
        %2859 = vmatprep.subr.bf16.mxu0 0
        %2860 = vmatpush1.bf16.msra.mxu0 %v2857
        %2861 = vmatprep.subr.bf16.mxu0 0
        %2862 = vmatpush1.bf16.msra.mxu0 0
        %2863 = vmatprep.subr.bf16.mxu0 0
        %2864 = vmatpush1.bf16.msra.mxu0 0
        %2865 = vmatprep.subr.bf16.mxu0 0
        %2866 = vmatpush1.bf16.msra.mxu0 0
        %2867 = vmatprep.subr.bf16.mxu0 0
        %2868 = vmatpush1.bf16.msra.mxu0 0
        %2869 = vmatprep.subr.bf16.mxu0 0
        %2870 = vmatpush1.bf16.msra.mxu0 0
        %2871 = vmatprep.subr.bf16.mxu0 0
        %2872 = vmatpush1.bf16.msra.mxu0 0
        %2873 = vmatprep.subr.bf16.mxu0 0
        %2874 = vmatpush1.bf16.msra.mxu0 0
        %2875 = vmatprep.subr.bf16.mxu0 0
        %2876 = vmatpush1.bf16.msra.mxu0 0
        %2877 = vmatprep.subr.bf16.mxu0 0
        %2878 = vmatpush1.bf16.msra.mxu0 0
        %2879 = vmatprep.subr.bf16.mxu0 0
        %2880 = vmatpush1.bf16.msra.mxu0 0
        %2881 = vmatprep.subr.bf16.mxu0 0
        %2882 = vmatpush1.bf16.msra.mxu0 0
        %2883 = vmatprep.subr.bf16.mxu0 0
        %2884 = vmatpush1.bf16.msra.mxu0 0
        %2885 = vmatprep.subr.bf16.mxu0 0
        %2886 = vmatpush1.bf16.msra.mxu0 0
        %2887 = vmatprep.subr.bf16.mxu0 0
        %2888 = vmatpush1.bf16.msra.mxu0 0
        %2889 = vmatprep.subr.bf16.mxu0 0
        %2890 = vmatpush1.bf16.msra.mxu0 0
        %2891 = vmatprep.mubr.bf16.mxu0 0
        %2892 = vmatmul.mubr.bf16.gmra.mrb[0].mxu0 %v2854
        %v2893 = vpop.f32.mrb[0].mxu0
        %v2894 = vadd.f32 0.0, %v2893
        %v2895 = vpop.f32.mrb[0].mxu0
        %v2896 = vpop.f32.mrb[0].mxu0
        %v2897 = vpop.f32.mrb[0].mxu0
        %2898 = vdwg.mxu0
        %v2899 = vpack.c.bf16 %v2793, %v2790
        %v2900 = vpack.c.bf16 %v2801, %v2798
        %v2901 = vpack.c.bf16 %v2809, %v2806
        %v2902 = vpack.c.bf16 %v2817, %v2814
        %v2903 = vpack.c.bf16 %v2825, %v2822
        %v2904 = vpack.c.bf16 %v2833, %v2830
        %v2905 = vpack.c.bf16 %v2841, %v2838
        %v2906 = vpack.c.bf16 %v2849, %v2846
        %v2923 = vunpack.c.l.b16 %v2664
        %v2924 = vunpack.c.l.b16 %v2665
        %v2925 = vunpack.c.l.b16 %v2666
        %v2926 = vunpack.c.l.b16 %v2667
        %v2927 = vunpack.c.l.b16 %v2668
        %v2928 = vunpack.c.l.b16 %v2669
        %v2929 = vunpack.c.l.b16 %v2670
        %v2930 = vunpack.c.l.b16 %v2671
        %v2931 = vunpack.c.l.b16 %v2672
        %v2932 = vunpack.c.l.b16 %v2673
        %v2933 = vunpack.c.l.b16 %v2674
        %v2934 = vunpack.c.l.b16 %v2675
        %v2935 = vunpack.c.l.b16 %v2676
        %v2936 = vunpack.c.l.b16 %v2677
        %v2937 = vunpack.c.l.b16 %v2678
        %v2938 = vunpack.c.l.b16 %v2679
        %v2939 = vpack.c.b16 %v2924, %v2923
        %v2940 = vpack.c.b16 %v2926, %v2925
        %v2941 = vpack.c.b16 %v2928, %v2927
        %v2942 = vpack.c.b16 %v2930, %v2929
        %v2943 = vpack.c.b16 %v2932, %v2931
        %v2944 = vpack.c.b16 %v2934, %v2933
        %v2945 = vpack.c.b16 %v2936, %v2935
        %v2946 = vpack.c.b16 %v2938, %v2937
        %2955 = vmatprep.subr.bf16.mxu0 0
        %2956 = vmatpush1.bf16.msra.mxu0 %v2939
        %2957 = vmatprep.subr.bf16.mxu0 0
        %2958 = vmatpush1.bf16.msra.mxu0 %v2940
        %2959 = vmatprep.subr.bf16.mxu0 0
        %2960 = vmatpush1.bf16.msra.mxu0 %v2941
        %2961 = vmatprep.subr.bf16.mxu0 0
        %2962 = vmatpush1.bf16.msra.mxu0 %v2942
        %2963 = vmatprep.subr.bf16.mxu0 0
        %2964 = vmatpush1.bf16.msra.mxu0 %v2943
        %2965 = vmatprep.subr.bf16.mxu0 0
        %2966 = vmatpush1.bf16.msra.mxu0 %v2944
        %2967 = vmatprep.subr.bf16.mxu0 0
        %2968 = vmatpush1.bf16.msra.mxu0 %v2945
        %2969 = vmatprep.subr.bf16.mxu0 0
        %2970 = vmatpush1.bf16.msra.mxu0 %v2946
        %2971 = vmatprep.subr.bf16.mxu0 0
        %2972 = vmatpush1.bf16.msra.mxu0 0
        %2973 = vmatprep.subr.bf16.mxu0 0
        %2974 = vmatpush1.bf16.msra.mxu0 0
        %2975 = vmatprep.subr.bf16.mxu0 0
        %2976 = vmatpush1.bf16.msra.mxu0 0
        %2977 = vmatprep.subr.bf16.mxu0 0
        %2978 = vmatpush1.bf16.msra.mxu0 0
        %2979 = vmatprep.subr.bf16.mxu0 0
        %2980 = vmatpush1.bf16.msra.mxu0 0
        %2981 = vmatprep.subr.bf16.mxu0 0
        %2982 = vmatpush1.bf16.msra.mxu0 0
        %2983 = vmatprep.subr.bf16.mxu0 0
        %2984 = vmatpush1.bf16.msra.mxu0 0
        %2985 = vmatprep.subr.bf16.mxu0 0
        %2986 = vmatpush1.bf16.msra.mxu0 0
        %2987 = vmatprep.mubr.bf16.mxu0 0
        %2988 = vmatmul.mubr.bf16.gmra.mrb[0].mxu0 %v2682
        %v2989 = vpop.f32.mrb[0].mxu0
        %v2990 = vadd.f32 0.0, %v2989
        %v2991 = vpop.f32.mrb[0].mxu0
        %v2992 = vpop.f32.mrb[0].mxu0
        %v2993 = vadd.f32 0.0, %v2992
        %v2994 = vpop.f32.mrb[0].mxu0
        %2995 = vmatprep.mubr.bf16.mxu0 0
        %2996 = vmatmul.mubr.bf16.gmra.mrb[0].mxu0 %v2683
        %v2997 = vpop.f32.mrb[0].mxu0
        %v2998 = vadd.f32 0.0, %v2997
        %v2999 = vpop.f32.mrb[0].mxu0
        %v3000 = vpop.f32.mrb[0].mxu0
        %v3001 = vadd.f32 0.0, %v3000
        %v3002 = vpop.f32.mrb[0].mxu0
        %3003 = vmatprep.mubr.bf16.mxu0 0
        %3004 = vmatmul.mubr.bf16.gmra.mrb[0].mxu0 %v2684
        %v3005 = vpop.f32.mrb[0].mxu0
        %v3006 = vadd.f32 0.0, %v3005
        %v3007 = vpop.f32.mrb[0].mxu0
        %v3008 = vpop.f32.mrb[0].mxu0
        %v3009 = vadd.f32 0.0, %v3008
        %v3010 = vpop.f32.mrb[0].mxu0
        %3011 = vmatprep.mubr.bf16.mxu0 0
        %3012 = vmatmul.mubr.bf16.gmra.mrb[0].mxu0 %v2685
        %v3013 = vpop.f32.mrb[0].mxu0
        %v3014 = vadd.f32 0.0, %v3013
        %v3015 = vpop.f32.mrb[0].mxu0
        %v3016 = vpop.f32.mrb[0].mxu0
        %v3017 = vadd.f32 0.0, %v3016
        %v3018 = vpop.f32.mrb[0].mxu0
        %3019 = vmatprep.mubr.bf16.mxu0 0
        %3020 = vmatmul.mubr.bf16.gmra.mrb[0].mxu0 %v2686
        %v3021 = vpop.f32.mrb[0].mxu0
        %v3022 = vadd.f32 0.0, %v3021
        %v3023 = vpop.f32.mrb[0].mxu0
        %v3024 = vpop.f32.mrb[0].mxu0
        %v3025 = vadd.f32 0.0, %v3024
        %v3026 = vpop.f32.mrb[0].mxu0
        %3027 = vmatprep.mubr.bf16.mxu0 0
        %3028 = vmatmul.mubr.bf16.gmra.mrb[0].mxu0 %v2687
        %v3029 = vpop.f32.mrb[0].mxu0
        %v3030 = vadd.f32 0.0, %v3029
        %v3031 = vpop.f32.mrb[0].mxu0
        %v3032 = vpop.f32.mrb[0].mxu0
        %v3033 = vadd.f32 0.0, %v3032
        %v3034 = vpop.f32.mrb[0].mxu0
        %3035 = vmatprep.mubr.bf16.mxu0 0
        %3036 = vmatmul.mubr.bf16.gmra.mrb[0].mxu0 %v2688
        %v3037 = vpop.f32.mrb[0].mxu0
        %v3038 = vadd.f32 0.0, %v3037
        %v3039 = vpop.f32.mrb[0].mxu0
        %v3040 = vpop.f32.mrb[0].mxu0
        %v3041 = vadd.f32 0.0, %v3040
        %v3042 = vpop.f32.mrb[0].mxu0
        %3043 = vmatprep.mubr.bf16.mxu0 0
        %3044 = vmatmul.mubr.bf16.gmra.mrb[0].mxu0 %v2689
        %v3045 = vpop.f32.mrb[0].mxu0
        %v3046 = vadd.f32 0.0, %v3045
        %v3047 = vpop.f32.mrb[0].mxu0
        %v3048 = vpop.f32.mrb[0].mxu0
        %v3049 = vadd.f32 0.0, %v3048
        %v3050 = vpop.f32.mrb[0].mxu0
        %3051 = vdwg.mxu0
        %v3068 = vunpack.c.l.b16 %v2647
        %v3069 = vunpack.c.l.b16 %v2648
        %v3070 = vunpack.c.l.b16 %v2649
        %v3071 = vunpack.c.l.b16 %v2650
        %v3072 = vunpack.c.l.b16 %v2651
        %v3073 = vunpack.c.l.b16 %v2652
        %v3074 = vunpack.c.l.b16 %v2653
        %v3075 = vunpack.c.l.b16 %v2654
        %v3076 = vunpack.c.l.b16 %v2655
        %v3077 = vunpack.c.l.b16 %v2656
        %v3078 = vunpack.c.l.b16 %v2657
        %v3079 = vunpack.c.l.b16 %v2658
        %v3080 = vunpack.c.l.b16 %v2659
        %v3081 = vunpack.c.l.b16 %v2660
        %v3082 = vunpack.c.l.b16 %v2661
        %v3083 = vunpack.c.l.b16 %v2662
        %v3084 = vpack.c.b16 %v3069, %v3068
        %v3085 = vpack.c.b16 %v3071, %v3070
        %v3086 = vpack.c.b16 %v3073, %v3072
        %v3087 = vpack.c.b16 %v3075, %v3074
        %v3088 = vpack.c.b16 %v3077, %v3076
        %v3089 = vpack.c.b16 %v3079, %v3078
        %v3090 = vpack.c.b16 %v3081, %v3080
        %v3091 = vpack.c.b16 %v3083, %v3082
        %3100 = vmatprep.subr.bf16.mxu0 0
        %3101 = vmatpush1.bf16.msra.mxu0 %v3084
        %3102 = vmatprep.subr.bf16.mxu0 0
        %3103 = vmatpush1.bf16.msra.mxu0 %v3085
        %3104 = vmatprep.subr.bf16.mxu0 0
        %3105 = vmatpush1.bf16.msra.mxu0 %v3086
        %3106 = vmatprep.subr.bf16.mxu0 0
        %3107 = vmatpush1.bf16.msra.mxu0 %v3087
        %3108 = vmatprep.subr.bf16.mxu0 0
        %3109 = vmatpush1.bf16.msra.mxu0 %v3088
        %3110 = vmatprep.subr.bf16.mxu0 0
        %3111 = vmatpush1.bf16.msra.mxu0 %v3089
        %3112 = vmatprep.subr.bf16.mxu0 0
        %3113 = vmatpush1.bf16.msra.mxu0 %v3090
        %3114 = vmatprep.subr.bf16.mxu0 0
        %3115 = vmatpush1.bf16.msra.mxu0 %v3091
        %3116 = vmatprep.subr.bf16.mxu0 0
        %3117 = vmatpush1.bf16.msra.mxu0 0
        %3118 = vmatprep.subr.bf16.mxu0 0
        %3119 = vmatpush1.bf16.msra.mxu0 0
        %3120 = vmatprep.subr.bf16.mxu0 0
        %3121 = vmatpush1.bf16.msra.mxu0 0
        %3122 = vmatprep.subr.bf16.mxu0 0
        %3123 = vmatpush1.bf16.msra.mxu0 0
        %3124 = vmatprep.subr.bf16.mxu0 0
        %3125 = vmatpush1.bf16.msra.mxu0 0
        %3126 = vmatprep.subr.bf16.mxu0 0
        %3127 = vmatpush1.bf16.msra.mxu0 0
        %3128 = vmatprep.subr.bf16.mxu0 0
        %3129 = vmatpush1.bf16.msra.mxu0 0
        %3130 = vmatprep.subr.bf16.mxu0 0
        %3131 = vmatpush1.bf16.msra.mxu0 0
        %3132 = vmatprep.mubr.bf16.mxu0 0
        %3133 = vmatmul.mubr.bf16.gmra.mrb[0].mxu0 %v2899
        %v3134 = vpop.f32.mrb[0].mxu0
        %v3135 = vadd.f32 %v2990, %v3134
        %v3136 = vpop.f32.mrb[0].mxu0
        %v3137 = vpop.f32.mrb[0].mxu0
        %v3138 = vadd.f32 %v2993, %v3137
        %v3139 = vpop.f32.mrb[0].mxu0
        %3140 = vmatprep.mubr.bf16.mxu0 0
        %3141 = vmatmul.mubr.bf16.gmra.mrb[0].mxu0 %v2900
        %v3142 = vpop.f32.mrb[0].mxu0
        %v3143 = vadd.f32 %v2998, %v3142
        %v3144 = vpop.f32.mrb[0].mxu0
        %v3145 = vpop.f32.mrb[0].mxu0
        %v3146 = vadd.f32 %v3001, %v3145
        %v3147 = vpop.f32.mrb[0].mxu0
        %3148 = vmatprep.mubr.bf16.mxu0 0
        %3149 = vmatmul.mubr.bf16.gmra.mrb[0].mxu0 %v2901
        %v3150 = vpop.f32.mrb[0].mxu0
        %v3151 = vadd.f32 %v3006, %v3150
        %v3152 = vpop.f32.mrb[0].mxu0
        %v3153 = vpop.f32.mrb[0].mxu0
        %v3154 = vadd.f32 %v3009, %v3153
        %v3155 = vpop.f32.mrb[0].mxu0
        %3156 = vmatprep.mubr.bf16.mxu0 0
        %3157 = vmatmul.mubr.bf16.gmra.mrb[0].mxu0 %v2902
        %v3158 = vpop.f32.mrb[0].mxu0
        %v3159 = vadd.f32 %v3014, %v3158
        %v3160 = vpop.f32.mrb[0].mxu0
        %v3161 = vpop.f32.mrb[0].mxu0
        %v3162 = vadd.f32 %v3017, %v3161
        %v3163 = vpop.f32.mrb[0].mxu0
        %3164 = vmatprep.mubr.bf16.mxu0 0
        %3165 = vmatmul.mubr.bf16.gmra.mrb[0].mxu0 %v2903
        %v3166 = vpop.f32.mrb[0].mxu0
        %v3167 = vadd.f32 %v3022, %v3166
        %v3168 = vpop.f32.mrb[0].mxu0
        %v3169 = vpop.f32.mrb[0].mxu0
        %v3170 = vadd.f32 %v3025, %v3169
        %v3171 = vpop.f32.mrb[0].mxu0
        %3172 = vmatprep.mubr.bf16.mxu0 0
        %3173 = vmatmul.mubr.bf16.gmra.mrb[0].mxu0 %v2904
        %v3174 = vpop.f32.mrb[0].mxu0
        %v3175 = vadd.f32 %v3030, %v3174
        %v3176 = vpop.f32.mrb[0].mxu0
        %v3177 = vpop.f32.mrb[0].mxu0
        %v3178 = vadd.f32 %v3033, %v3177
        %v3179 = vpop.f32.mrb[0].mxu0
        %3180 = vmatprep.mubr.bf16.mxu0 0
        %3181 = vmatmul.mubr.bf16.gmra.mrb[0].mxu0 %v2905
        %v3182 = vpop.f32.mrb[0].mxu0
        %v3183 = vadd.f32 %v3038, %v3182
        %v3184 = vpop.f32.mrb[0].mxu0
        %v3185 = vpop.f32.mrb[0].mxu0
        %v3186 = vadd.f32 %v3041, %v3185
        %v3187 = vpop.f32.mrb[0].mxu0
        %3188 = vmatprep.mubr.bf16.mxu0 0
        %3189 = vmatmul.mubr.bf16.gmra.mrb[0].mxu0 %v2906
        %v3190 = vpop.f32.mrb[0].mxu0
        %v3191 = vadd.f32 %v3046, %v3190
        %v3192 = vpop.f32.mrb[0].mxu0
        %v3193 = vpop.f32.mrb[0].mxu0
        %v3194 = vadd.f32 %v3049, %v3193
        %v3195 = vpop.f32.mrb[0].mxu0
        %3196 = vdwg.mxu0
        %v3198 = vlaneseq
        %v3199 = vshrl.u32 %v3198, 7
        %v3200 = vsub.s32 0, %v3199
        %v3201 = vrot.slane %v2681, %v3200
        %v3203 = vadd.f32 %v3135, %v3201
        %v3204 = vadd.f32 %v3138, %v3201
        %v3205 = vadd.f32 %v3143, %v3201
        %v3206 = vadd.f32 %v3146, %v3201
        %v3207 = vadd.f32 %v3151, %v3201
        %v3208 = vadd.f32 %v3154, %v3201
        %v3209 = vadd.f32 %v3159, %v3201
        %v3210 = vadd.f32 %v3162, %v3201
        %v3211 = vadd.f32 %v3167, %v3201
        %v3212 = vadd.f32 %v3170, %v3201
        %v3213 = vadd.f32 %v3175, %v3201
        %v3214 = vadd.f32 %v3178, %v3201
        %v3215 = vadd.f32 %v3183, %v3201
        %v3216 = vadd.f32 %v3186, %v3201
        %v3217 = vadd.f32 %v3191, %v3201
        %v3218 = vadd.f32 %v3194, %v3201
        %vm3219 = vcmp.gt.f32.partialorder %v3203, 0.0
        %vm3220 = vcmp.gt.f32.partialorder %v3204, 0.0
        %vm3221 = vcmp.gt.f32.partialorder %v3205, 0.0
        %vm3222 = vcmp.gt.f32.partialorder %v3206, 0.0
        %vm3223 = vcmp.gt.f32.partialorder %v3207, 0.0
        %vm3224 = vcmp.gt.f32.partialorder %v3208, 0.0
        %vm3225 = vcmp.gt.f32.partialorder %v3209, 0.0
        %vm3226 = vcmp.gt.f32.partialorder %v3210, 0.0
        %vm3227 = vcmp.gt.f32.partialorder %v3211, 0.0
        %vm3228 = vcmp.gt.f32.partialorder %v3212, 0.0
        %vm3229 = vcmp.gt.f32.partialorder %v3213, 0.0
        %vm3230 = vcmp.gt.f32.partialorder %v3214, 0.0
        %vm3231 = vcmp.gt.f32.partialorder %v3215, 0.0
        %vm3232 = vcmp.gt.f32.partialorder %v3216, 0.0
        %vm3233 = vcmp.gt.f32.partialorder %v3217, 0.0
        %vm3234 = vcmp.gt.f32.partialorder %v3218, 0.0
        %v3235 = vmul.f32 %v3203, 1.442695
        %v3236 = vpow.pop %v3235
        %v3237 = vmul.f32 %v3204, 1.442695
        %v3238 = vpow.pop %v3237
        %v3239 = vmul.f32 %v3205, 1.442695
        %v3240 = vpow.pop %v3239
        %v3241 = vmul.f32 %v3206, 1.442695
        %v3242 = vpow.pop %v3241
        %v3243 = vmul.f32 %v3207, 1.442695
        %v3244 = vpow.pop %v3243
        %v3245 = vmul.f32 %v3208, 1.442695
        %v3246 = vpow.pop %v3245
        %v3247 = vmul.f32 %v3209, 1.442695
        %v3248 = vpow.pop %v3247
        %v3249 = vmul.f32 %v3210, 1.442695
        %v3250 = vpow.pop %v3249
        %v3251 = vmul.f32 %v3211, 1.442695
        %v3252 = vpow.pop %v3251
        %v3253 = vmul.f32 %v3212, 1.442695
        %v3254 = vpow.pop %v3253
        %v3255 = vmul.f32 %v3213, 1.442695
        %v3256 = vpow.pop %v3255
        %v3257 = vmul.f32 %v3214, 1.442695
        %v3258 = vpow.pop %v3257
        %v3259 = vmul.f32 %v3215, 1.442695
        %v3260 = vpow.pop %v3259
        %v3261 = vmul.f32 %v3216, 1.442695
        %v3262 = vpow.pop %v3261
        %v3263 = vmul.f32 %v3217, 1.442695
        %v3264 = vpow.pop %v3263
        %v3265 = vmul.f32 %v3218, 1.442695
        %v3266 = vpow.pop %v3265
        %v3267 = vsub.f32 %v3236, 1.0
        %v3268 = vsub.f32 %v3238, 1.0
        %v3269 = vsub.f32 %v3240, 1.0
        %v3270 = vsub.f32 %v3242, 1.0
        %v3271 = vsub.f32 %v3244, 1.0
        %v3272 = vsub.f32 %v3246, 1.0
        %v3273 = vsub.f32 %v3248, 1.0
        %v3274 = vsub.f32 %v3250, 1.0
        %v3275 = vsub.f32 %v3252, 1.0
        %v3276 = vsub.f32 %v3254, 1.0
        %v3277 = vsub.f32 %v3256, 1.0
        %v3278 = vsub.f32 %v3258, 1.0
        %v3279 = vsub.f32 %v3260, 1.0
        %v3280 = vsub.f32 %v3262, 1.0
        %v3281 = vsub.f32 %v3264, 1.0
        %v3282 = vsub.f32 %v3266, 1.0
        %v3283 = vsel %vm3219, %v3203, %v3267
        %v3284 = vsel %vm3220, %v3204, %v3268
        %v3285 = vsel %vm3221, %v3205, %v3269
        %v3286 = vsel %vm3222, %v3206, %v3270
        %v3287 = vsel %vm3223, %v3207, %v3271
        %v3288 = vsel %vm3224, %v3208, %v3272
        %v3289 = vsel %vm3225, %v3209, %v3273
        %v3290 = vsel %vm3226, %v3210, %v3274
        %v3291 = vsel %vm3227, %v3211, %v3275
        %v3292 = vsel %vm3228, %v3212, %v3276
        %v3293 = vsel %vm3229, %v3213, %v3277
        %v3294 = vsel %vm3230, %v3214, %v3278
        %v3295 = vsel %vm3231, %v3215, %v3279
        %v3296 = vsel %vm3232, %v3216, %v3280
        %v3297 = vsel %vm3233, %v3217, %v3281
        %v3298 = vsel %vm3234, %v3218, %v3282
        %v3299 = vpack.c.bf16 %v2894, %v2894
        %3300 = vmatprep.subr.bf16.mxu0 0
        %3301 = vmatpush1.bf16.msra.mxu0 %v2939
        %3302 = vmatprep.subr.bf16.mxu0 0
        %3303 = vmatpush1.bf16.msra.mxu0 %v2940
        %3304 = vmatprep.subr.bf16.mxu0 0
        %3305 = vmatpush1.bf16.msra.mxu0 %v2941
        %3306 = vmatprep.subr.bf16.mxu0 0
        %3307 = vmatpush1.bf16.msra.mxu0 %v2942
        %3308 = vmatprep.subr.bf16.mxu0 0
        %3309 = vmatpush1.bf16.msra.mxu0 %v2943
        %3310 = vmatprep.subr.bf16.mxu0 0
        %3311 = vmatpush1.bf16.msra.mxu0 %v2944
        %3312 = vmatprep.subr.bf16.mxu0 0
        %3313 = vmatpush1.bf16.msra.mxu0 %v2945
        %3314 = vmatprep.subr.bf16.mxu0 0
        %3315 = vmatpush1.bf16.msra.mxu0 %v2946
        %3316 = vmatprep.subr.bf16.mxu0 0
        %3317 = vmatpush1.bf16.msra.mxu0 0
        %3318 = vmatprep.subr.bf16.mxu0 0
        %3319 = vmatpush1.bf16.msra.mxu0 0
        %3320 = vmatprep.subr.bf16.mxu0 0
        %3321 = vmatpush1.bf16.msra.mxu0 0
        %3322 = vmatprep.subr.bf16.mxu0 0
        %3323 = vmatpush1.bf16.msra.mxu0 0
        %3324 = vmatprep.subr.bf16.mxu0 0
        %3325 = vmatpush1.bf16.msra.mxu0 0
        %3326 = vmatprep.subr.bf16.mxu0 0
        %3327 = vmatpush1.bf16.msra.mxu0 0
        %3328 = vmatprep.subr.bf16.mxu0 0
        %3329 = vmatpush1.bf16.msra.mxu0 0
        %3330 = vmatprep.subr.bf16.mxu0 0
        %3331 = vmatpush1.bf16.msra.mxu0 0
        %3332 = vmatprep.mubr.bf16.mxu0 0
        %3333 = vmatmul.mubr.bf16.gmra.mrb[0].mxu0 %v2690
        %v3334 = vpop.f32.mrb[0].mxu0
        %v3335 = vadd.f32 0.0, %v3334
        %v3336 = vpop.f32.mrb[0].mxu0
        %v3337 = vpop.f32.mrb[0].mxu0
        %v3338 = vpop.f32.mrb[0].mxu0
        %3339 = vdwg.mxu0
        %3340 = vmatprep.subr.bf16.mxu0 0
        %3341 = vmatpush1.bf16.msra.mxu0 %v3084
        %3342 = vmatprep.subr.bf16.mxu0 0
        %3343 = vmatpush1.bf16.msra.mxu0 %v3085
        %3344 = vmatprep.subr.bf16.mxu0 0
        %3345 = vmatpush1.bf16.msra.mxu0 %v3086
        %3346 = vmatprep.subr.bf16.mxu0 0
        %3347 = vmatpush1.bf16.msra.mxu0 %v3087
        %3348 = vmatprep.subr.bf16.mxu0 0
        %3349 = vmatpush1.bf16.msra.mxu0 %v3088
        %3350 = vmatprep.subr.bf16.mxu0 0
        %3351 = vmatpush1.bf16.msra.mxu0 %v3089
        %3352 = vmatprep.subr.bf16.mxu0 0
        %3353 = vmatpush1.bf16.msra.mxu0 %v3090
        %3354 = vmatprep.subr.bf16.mxu0 0
        %3355 = vmatpush1.bf16.msra.mxu0 %v3091
        %3356 = vmatprep.subr.bf16.mxu0 0
        %3357 = vmatpush1.bf16.msra.mxu0 0
        %3358 = vmatprep.subr.bf16.mxu0 0
        %3359 = vmatpush1.bf16.msra.mxu0 0
        %3360 = vmatprep.subr.bf16.mxu0 0
        %3361 = vmatpush1.bf16.msra.mxu0 0
        %3362 = vmatprep.subr.bf16.mxu0 0
        %3363 = vmatpush1.bf16.msra.mxu0 0
        %3364 = vmatprep.subr.bf16.mxu0 0
        %3365 = vmatpush1.bf16.msra.mxu0 0
        %3366 = vmatprep.subr.bf16.mxu0 0
        %3367 = vmatpush1.bf16.msra.mxu0 0
        %3368 = vmatprep.subr.bf16.mxu0 0
        %3369 = vmatpush1.bf16.msra.mxu0 0
        %3370 = vmatprep.subr.bf16.mxu0 0
        %3371 = vmatpush1.bf16.msra.mxu0 0
        %3372 = vmatprep.mubr.bf16.mxu0 0
        %3373 = vmatmul.mubr.bf16.gmra.mrb[0].mxu0 %v3299
        %v3374 = vpop.f32.mrb[0].mxu0
        %v3375 = vadd.f32 %v3335, %v3374
        %v3376 = vpop.f32.mrb[0].mxu0
        %v3377 = vpop.f32.mrb[0].mxu0
        %v3378 = vpop.f32.mrb[0].mxu0
        %3379 = vdwg.mxu0
        %v3380 = vadd.f32 %v3375, %v3201
        %vm3381 = vcmp.gt.f32.partialorder %v3380, 0.0
        %v3382 = vmul.f32 %v3380, 1.442695
        %v3383 = vpow.pop %v3382
        %v3384 = vsub.f32 %v3383, 1.0
        %v3385 = vsel %vm3381, %v3380, %v3384
        %v3386 = vmul.f32 %v3385, 0.17677669
        %v3387 = vpack.c.bf16 %v3386, %v3386
        %v3388 = vpack.c.bf16 %v3284, %v3283
        %v3389 = vpack.c.bf16 %v3286, %v3285
        %v3390 = vpack.c.bf16 %v3288, %v3287
        %v3391 = vpack.c.bf16 %v3290, %v3289
        %v3392 = vpack.c.bf16 %v3292, %v3291
        %v3393 = vpack.c.bf16 %v3294, %v3293
        %v3394 = vpack.c.bf16 %v3296, %v3295
        %v3395 = vpack.c.bf16 %v3298, %v3297
        %3396 = vmatprep.subr.bf16.mxu0 0
        %3397 = vmatpush1.bf16.xpose.msra.mxu0 %v3388
        %3398 = vmatprep.subr.bf16.mxu0 0
        %3399 = vmatpush1.bf16.xpose.msra.mxu0 %v3389
        %3400 = vmatprep.subr.bf16.mxu0 0
        %3401 = vmatpush1.bf16.xpose.msra.mxu0 %v3390
        %3402 = vmatprep.subr.bf16.mxu0 0
        %3403 = vmatpush1.bf16.xpose.msra.mxu0 %v3391
        %3404 = vmatprep.subr.bf16.mxu0 0
        %3405 = vmatpush1.bf16.xpose.msra.mxu0 %v3392
        %3406 = vmatprep.subr.bf16.mxu0 0
        %3407 = vmatpush1.bf16.xpose.msra.mxu0 %v3393
        %3408 = vmatprep.subr.bf16.mxu0 0
        %3409 = vmatpush1.bf16.xpose.msra.mxu0 %v3394
        %3410 = vmatprep.subr.bf16.mxu0 0
        %3411 = vmatpush1.bf16.xpose.msra.mxu0 %v3395
        %3412 = vmatprep.subr.bf16.mxu0 0
        %3413 = vmatpush1.bf16.xpose.msra.mxu0 0
        %3414 = vmatprep.subr.bf16.mxu0 0
        %3415 = vmatpush1.bf16.xpose.msra.mxu0 0
        %3416 = vmatprep.subr.bf16.mxu0 0
        %3417 = vmatpush1.bf16.xpose.msra.mxu0 0
        %3418 = vmatprep.subr.bf16.mxu0 0
        %3419 = vmatpush1.bf16.xpose.msra.mxu0 0
        %3420 = vmatprep.subr.bf16.mxu0 0
        %3421 = vmatpush1.bf16.xpose.msra.mxu0 0
        %3422 = vmatprep.subr.bf16.mxu0 0
        %3423 = vmatpush1.bf16.xpose.msra.mxu0 0
        %3424 = vmatprep.subr.bf16.mxu0 0
        %3425 = vmatpush1.bf16.xpose.msra.mxu0 0
        %3426 = vmatprep.subr.bf16.mxu0 0
        %3427 = vmatpush1.bf16.xpose.msra.mxu0 0
        %3428 = vmatprep.mubr.bf16.mxu0 0
        %3429 = vmatmul.mubr.bf16.gmra.mrb[0].mxu0 %v3387
        %v3430 = vpop.f32.mrb[0].mxu0
        %v3431 = vadd.f32 0.0, %v3430
        %v3432 = vpop.f32.mrb[0].mxu0
        %v3433 = vpop.f32.mrb[0].mxu0
        %v3434 = vpop.f32.mrb[0].mxu0
        %3435 = vdwg.mxu0
        %v3436 = vsel %vm384, %v3431, -1e+09
        %3437 = vmax.xlane.f32.xlu0 %v3436
        %v3438 = vpop.xlane.xlu0 %3437
        %v3439 = vsub.f32 %v3436, %v3438
        %v3440 = vmul.f32 %v3439, 1.442695
        %v3441 = vpow.pop %v3440
        %3442 = vadd.xlane.f32.xlu0 %v3441
        %v3443 = vpop.xlane.xlu0 %3442
        %v3444 = vrcp.pop %v3443
        %v3445 = vmul.f32 %v3443, %v3444
        %v3446 = vsub.f32 2.0, %v3445
        %v3447 = vmul.f32 %v3444, %v3446
        %v3448 = vmul.f32 %v3447, %v385
        %3450 = vset.pattern.permute.xlu0 0
        %3451 = vperm.xlu0 %3450, %v3448
        %v3452 = vpop.permute.xlu0 %3451
        %v3454 = vmul.f32 %v3441, %v3452
        %s3455 = smul.u32 8, 1
        %s3456 = sshll.u32 %s3455, 4
        %3457 = dma.done [#allocation3], %s3456
        %3458 = vst [vmem:[#allocation2] sm:$0xff] %v3454
        %s3459 = sadd.s32 %s1212, 2
        %s3460 = smul.u32 %s3459, 8
        %s3461 = smul.addr %s3460, 16
        %s3462 = scalar_lea.hbm %s11, %s3461
        // Predicated region
        $region81: #{subcross_gmn_forward.1} parent=63 // pred_check
          _
        $region82: #{subcross_gmn_forward.1} parent=63 // pred_check_branch
          %3464 = sbr.rel target = $region84
        $region83: #{subcross_gmn_forward.1} parent=63 // pred_region
          %3465 = sst [smem:[#allocation10]] [#allocation15]
          %3466 = sst [smem:[#allocation11]] [#allocation14]
        $region84: #{subcross_gmn_forward.1} parent=63 // pred_fallthru
          _
        %3468 = shalt.err (0)
        %s3470 = sshll.u32 [#allocation2], 4
        %s3471 = int_to_ptr.vmem [resolvable:$true] %s3470
        %3473 = dma.vmem_to_hbm [thread:$0]  %s3471, 128, %s3462, [#allocation3]
        %v3474 = vpack.c.bf16 %v3454, %v3454
        %v3475 = vpack.c.bf16 %v3385, %v3385
        %3476 = vxpose.xlu0.c.b16.start [1/8] %v3474, 128
        %3477 = vxpose.xlu0.c.b16.cont [2/8] 0, 128
        %3478 = vxpose.xlu0.c.b16.cont [3/8] 0, 128
        %3479 = vxpose.xlu0.c.b16.cont [4/8] 0, 128
        %3480 = vxpose.xlu0.c.b16.cont [5/8] 0, 128
        %3481 = vxpose.xlu0.c.b16.cont [6/8] 0, 128
        %3482 = vxpose.xlu0.c.b16.cont [7/8] 0, 128
        %3483 = vxpose.xlu0.c.b16.end [8/8] 0, 128
        %v3484 = vpop.trf.xlu0
        %v3485 = vpop.trf.xlu0
        %v3486 = vpop.trf.xlu0
        %v3487 = vpop.trf.xlu0
        %v3488 = vpop.trf.xlu0
        %v3489 = vpop.trf.xlu0
        %v3490 = vpop.trf.xlu0
        %v3491 = vpop.trf.xlu0
        %v3493 = vsel %vm607, %v3484, 0
        %v3496 = vsel %vm607, %v3485, 0
        %v3499 = vsel %vm607, %v3486, 0
        %v3502 = vsel %vm607, %v3487, 0
        %v3505 = vsel %vm607, %v3488, 0
        %v3508 = vsel %vm607, %v3489, 0
        %v3511 = vsel %vm607, %v3490, 0
        %v3514 = vsel %vm607, %v3491, 0
        %v3517 = vsel %vm611, %v3475, 0
        %3519 = vmatprep.subr.bf16.mxu0 0
        %3520 = vmatpush1.bf16.msra.mxu0 %v3517
        %3521 = vmatprep.subr.bf16.mxu0 0
        %3522 = vmatpush1.bf16.msra.mxu0 0
        %3523 = vmatprep.subr.bf16.mxu0 0
        %3524 = vmatpush1.bf16.msra.mxu0 0
        %3525 = vmatprep.subr.bf16.mxu0 0
        %3526 = vmatpush1.bf16.msra.mxu0 0
        %3527 = vmatprep.subr.bf16.mxu0 0
        %3528 = vmatpush1.bf16.msra.mxu0 0
        %3529 = vmatprep.subr.bf16.mxu0 0
        %3530 = vmatpush1.bf16.msra.mxu0 0
        %3531 = vmatprep.subr.bf16.mxu0 0
        %3532 = vmatpush1.bf16.msra.mxu0 0
        %3533 = vmatprep.subr.bf16.mxu0 0
        %3534 = vmatpush1.bf16.msra.mxu0 0
        %3535 = vmatprep.subr.bf16.mxu0 0
        %3536 = vmatpush1.bf16.msra.mxu0 0
        %3537 = vmatprep.subr.bf16.mxu0 0
        %3538 = vmatpush1.bf16.msra.mxu0 0
        %3539 = vmatprep.subr.bf16.mxu0 0
        %3540 = vmatpush1.bf16.msra.mxu0 0
        %3541 = vmatprep.subr.bf16.mxu0 0
        %3542 = vmatpush1.bf16.msra.mxu0 0
        %3543 = vmatprep.subr.bf16.mxu0 0
        %3544 = vmatpush1.bf16.msra.mxu0 0
        %3545 = vmatprep.subr.bf16.mxu0 0
        %3546 = vmatpush1.bf16.msra.mxu0 0
        %3547 = vmatprep.subr.bf16.mxu0 0
        %3548 = vmatpush1.bf16.msra.mxu0 0
        %3549 = vmatprep.subr.bf16.mxu0 0
        %3550 = vmatpush1.bf16.msra.mxu0 0
        %3551 = vmatprep.mubr.bf16.mxu0 0
        %3552 = vmatmul.mubr.bf16.gmra.mrb[0].mxu0 %v3493
        %v3553 = vpop.f32.mrb[0].mxu0
        %v3554 = vadd.f32 0.0, %v3553
        %v3555 = vpop.f32.mrb[0].mxu0
        %v3556 = vpop.f32.mrb[0].mxu0
        %v3557 = vadd.f32 0.0, %v3556
        %v3558 = vpop.f32.mrb[0].mxu0
        %3559 = vmatprep.mubr.bf16.mxu0 0
        %3560 = vmatmul.mubr.bf16.gmra.mrb[0].mxu0 %v3496
        %v3561 = vpop.f32.mrb[0].mxu0
        %v3562 = vadd.f32 0.0, %v3561
        %v3563 = vpop.f32.mrb[0].mxu0
        %v3564 = vpop.f32.mrb[0].mxu0
        %v3565 = vadd.f32 0.0, %v3564
        %v3566 = vpop.f32.mrb[0].mxu0
        %3567 = vmatprep.mubr.bf16.mxu0 0
        %3568 = vmatmul.mubr.bf16.gmra.mrb[0].mxu0 %v3499
        %v3569 = vpop.f32.mrb[0].mxu0
        %v3570 = vadd.f32 0.0, %v3569
        %v3571 = vpop.f32.mrb[0].mxu0
        %v3572 = vpop.f32.mrb[0].mxu0
        %v3573 = vadd.f32 0.0, %v3572
        %v3574 = vpop.f32.mrb[0].mxu0
        %3575 = vmatprep.mubr.bf16.mxu0 0
        %3576 = vmatmul.mubr.bf16.gmra.mrb[0].mxu0 %v3502
        %v3577 = vpop.f32.mrb[0].mxu0
        %v3578 = vadd.f32 0.0, %v3577
        %v3579 = vpop.f32.mrb[0].mxu0
        %v3580 = vpop.f32.mrb[0].mxu0
        %v3581 = vadd.f32 0.0, %v3580
        %v3582 = vpop.f32.mrb[0].mxu0
        %3583 = vmatprep.mubr.bf16.mxu0 0
        %3584 = vmatmul.mubr.bf16.gmra.mrb[0].mxu0 %v3505
        %v3585 = vpop.f32.mrb[0].mxu0
        %v3586 = vadd.f32 0.0, %v3585
        %v3587 = vpop.f32.mrb[0].mxu0
        %v3588 = vpop.f32.mrb[0].mxu0
        %v3589 = vadd.f32 0.0, %v3588
        %v3590 = vpop.f32.mrb[0].mxu0
        %3591 = vmatprep.mubr.bf16.mxu0 0
        %3592 = vmatmul.mubr.bf16.gmra.mrb[0].mxu0 %v3508
        %v3593 = vpop.f32.mrb[0].mxu0
        %v3594 = vadd.f32 0.0, %v3593
        %v3595 = vpop.f32.mrb[0].mxu0
        %v3596 = vpop.f32.mrb[0].mxu0
        %v3597 = vadd.f32 0.0, %v3596
        %v3598 = vpop.f32.mrb[0].mxu0
        %3599 = vmatprep.mubr.bf16.mxu0 0
        %3600 = vmatmul.mubr.bf16.gmra.mrb[0].mxu0 %v3511
        %v3601 = vpop.f32.mrb[0].mxu0
        %v3602 = vadd.f32 0.0, %v3601
        %v3603 = vpop.f32.mrb[0].mxu0
        %v3604 = vpop.f32.mrb[0].mxu0
        %v3605 = vadd.f32 0.0, %v3604
        %v3606 = vpop.f32.mrb[0].mxu0
        %3607 = vmatprep.mubr.bf16.mxu0 0
        %3608 = vmatmul.mubr.bf16.gmra.mrb[0].mxu0 %v3514
        %v3609 = vpop.f32.mrb[0].mxu0
        %v3610 = vadd.f32 0.0, %v3609
        %v3611 = vpop.f32.mrb[0].mxu0
        %v3612 = vpop.f32.mrb[0].mxu0
        %v3613 = vadd.f32 0.0, %v3612
        %v3614 = vpop.f32.mrb[0].mxu0
        %3615 = vdwg.mxu0
        %3616 = vmatprep.subr.bf16.mxu0 0
        %3617 = vmatpush1.bf16.msra.mxu0 %v3388
        %3618 = vmatprep.subr.bf16.mxu0 0
        %3619 = vmatpush1.bf16.msra.mxu0 %v3389
        %3620 = vmatprep.subr.bf16.mxu0 0
        %3621 = vmatpush1.bf16.msra.mxu0 %v3390
        %3622 = vmatprep.subr.bf16.mxu0 0
        %3623 = vmatpush1.bf16.msra.mxu0 %v3391
        %3624 = vmatprep.subr.bf16.mxu0 0
        %3625 = vmatpush1.bf16.msra.mxu0 %v3392
        %3626 = vmatprep.subr.bf16.mxu0 0
        %3627 = vmatpush1.bf16.msra.mxu0 %v3393
        %3628 = vmatprep.subr.bf16.mxu0 0
        %3629 = vmatpush1.bf16.msra.mxu0 %v3394
        %3630 = vmatprep.subr.bf16.mxu0 0
        %3631 = vmatpush1.bf16.msra.mxu0 %v3395
        %3632 = vmatprep.subr.bf16.mxu0 0
        %3633 = vmatpush1.bf16.msra.mxu0 0
        %3634 = vmatprep.subr.bf16.mxu0 0
        %3635 = vmatpush1.bf16.msra.mxu0 0
        %3636 = vmatprep.subr.bf16.mxu0 0
        %3637 = vmatpush1.bf16.msra.mxu0 0
        %3638 = vmatprep.subr.bf16.mxu0 0
        %3639 = vmatpush1.bf16.msra.mxu0 0
        %3640 = vmatprep.subr.bf16.mxu0 0
        %3641 = vmatpush1.bf16.msra.mxu0 0
        %3642 = vmatprep.subr.bf16.mxu0 0
        %3643 = vmatpush1.bf16.msra.mxu0 0
        %3644 = vmatprep.subr.bf16.mxu0 0
        %3645 = vmatpush1.bf16.msra.mxu0 0
        %3646 = vmatprep.subr.bf16.mxu0 0
        %3647 = vmatpush1.bf16.msra.mxu0 0
        %3648 = vmatprep.mubr.bf16.mxu0 0
        %3649 = vmatmul.mubr.bf16.gmra.mrb[0].mxu0 %v3474
        %v3650 = vpop.f32.mrb[0].mxu0
        %v3651 = vadd.f32 0.0, %v3650
        %v3652 = vpop.f32.mrb[0].mxu0
        %v3653 = vpop.f32.mrb[0].mxu0
        %v3654 = vpop.f32.mrb[0].mxu0
        %3655 = vdwg.mxu0
        %s3656 = sld [smem:[#allocation4 + $0x100]]
        %v3657 = vld [vmem:[%s360] sm:$0xff]
        %v3658 = vld [vmem:[%s360 + $0x8] sm:$0xff]
        %v3659 = vld [vmem:[%s360 + $0x10] sm:$0xff]
        %v3660 = vld [vmem:[%s360 + $0x18] sm:$0xff]
        %v3661 = vld [vmem:[%s360 + $0x20] sm:$0xff]
        %v3662 = vld [vmem:[%s360 + $0x28] sm:$0xff]
        %v3663 = vld [vmem:[%s360 + $0x30] sm:$0xff]
        %v3664 = vld [vmem:[%s360 + $0x38] sm:$0xff]
        %v3665 = vld [vmem:[%s360 + $0x40] sm:$0xff]
        %v3666 = vld [vmem:[%s360 + $0x48] sm:$0xff]
        %v3667 = vld [vmem:[%s360 + $0x50] sm:$0xff]
        %v3668 = vld [vmem:[%s360 + $0x58] sm:$0xff]
        %v3669 = vld [vmem:[%s360 + $0x60] sm:$0xff]
        %v3670 = vld [vmem:[%s360 + $0x68] sm:$0xff]
        %v3671 = vld [vmem:[%s360 + $0x70] sm:$0xff]
        %v3672 = vld [vmem:[%s360 + $0x78] sm:$0xff]
        %v3673 = vstv %s3656
        %v3674 = vmul.f32 %v3673, %v3657
        %v3675 = vmul.f32 %v3673, %v3658
        %v3676 = vmul.f32 %v3673, %v3659
        %v3677 = vmul.f32 %v3673, %v3660
        %v3678 = vmul.f32 %v3673, %v3661
        %v3679 = vmul.f32 %v3673, %v3662
        %v3680 = vmul.f32 %v3673, %v3663
        %v3681 = vmul.f32 %v3673, %v3664
        %v3682 = vmul.f32 %v3673, %v3665
        %v3683 = vmul.f32 %v3673, %v3666
        %v3684 = vmul.f32 %v3673, %v3667
        %v3685 = vmul.f32 %v3673, %v3668
        %v3686 = vmul.f32 %v3673, %v3669
        %v3687 = vmul.f32 %v3673, %v3670
        %v3688 = vmul.f32 %v3673, %v3671
        %v3689 = vmul.f32 %v3673, %v3672
        %s3690 = sld [smem:[#allocation4 + $0x101]]
        %v3691 = vstv %s3690
        %v3692 = vmul.f32 %v3691, %v3283
        %v3693 = vmul.f32 %v3691, %v3284
        %v3694 = vmul.f32 %v3691, %v3285
        %v3695 = vmul.f32 %v3691, %v3286
        %v3696 = vmul.f32 %v3691, %v3287
        %v3697 = vmul.f32 %v3691, %v3288
        %v3698 = vmul.f32 %v3691, %v3289
        %v3699 = vmul.f32 %v3691, %v3290
        %v3700 = vmul.f32 %v3691, %v3291
        %v3701 = vmul.f32 %v3691, %v3292
        %v3702 = vmul.f32 %v3691, %v3293
        %v3703 = vmul.f32 %v3691, %v3294
        %v3704 = vmul.f32 %v3691, %v3295
        %v3705 = vmul.f32 %v3691, %v3296
        %v3706 = vmul.f32 %v3691, %v3297
        %v3707 = vmul.f32 %v3691, %v3298
        %v3708 = vadd.f32 %v3674, %v3692
        %v3709 = vadd.f32 %v3675, %v3693
        %v3710 = vadd.f32 %v3676, %v3694
        %v3711 = vadd.f32 %v3677, %v3695
        %v3712 = vadd.f32 %v3678, %v3696
        %v3713 = vadd.f32 %v3679, %v3697
        %v3714 = vadd.f32 %v3680, %v3698
        %v3715 = vadd.f32 %v3681, %v3699
        %v3716 = vadd.f32 %v3682, %v3700
        %v3717 = vadd.f32 %v3683, %v3701
        %v3718 = vadd.f32 %v3684, %v3702
        %v3719 = vadd.f32 %v3685, %v3703
        %v3720 = vadd.f32 %v3686, %v3704
        %v3721 = vadd.f32 %v3687, %v3705
        %v3722 = vadd.f32 %v3688, %v3706
        %v3723 = vadd.f32 %v3689, %v3707
        %s3724 = sld [smem:[#allocation4 + $0x102]]
        %v3725 = vstv %s3724
        %v3726 = vmul.f32 %v3725, %v3554
        %v3727 = vmul.f32 %v3725, %v3557
        %v3728 = vmul.f32 %v3725, %v3562
        %v3729 = vmul.f32 %v3725, %v3565
        %v3730 = vmul.f32 %v3725, %v3570
        %v3731 = vmul.f32 %v3725, %v3573
        %v3732 = vmul.f32 %v3725, %v3578
        %v3733 = vmul.f32 %v3725, %v3581
        %v3734 = vmul.f32 %v3725, %v3586
        %v3735 = vmul.f32 %v3725, %v3589
        %v3736 = vmul.f32 %v3725, %v3594
        %v3737 = vmul.f32 %v3725, %v3597
        %v3738 = vmul.f32 %v3725, %v3602
        %v3739 = vmul.f32 %v3725, %v3605
        %v3740 = vmul.f32 %v3725, %v3610
        %v3741 = vmul.f32 %v3725, %v3613
        %v3742 = vadd.f32 %v3708, %v3726
        %v3743 = vadd.f32 %v3709, %v3727
        %v3744 = vadd.f32 %v3710, %v3728
        %v3745 = vadd.f32 %v3711, %v3729
        %v3746 = vadd.f32 %v3712, %v3730
        %v3747 = vadd.f32 %v3713, %v3731
        %v3748 = vadd.f32 %v3714, %v3732
        %v3749 = vadd.f32 %v3715, %v3733
        %v3750 = vadd.f32 %v3716, %v3734
        %v3751 = vadd.f32 %v3717, %v3735
        %v3752 = vadd.f32 %v3718, %v3736
        %v3753 = vadd.f32 %v3719, %v3737
        %v3754 = vadd.f32 %v3720, %v3738
        %v3755 = vadd.f32 %v3721, %v3739
        %v3756 = vadd.f32 %v3722, %v3740
        %v3757 = vadd.f32 %v3723, %v3741
        %s3758 = sld [smem:[#allocation6 + $0x100]]
        %v3759 = vld [vmem:[%s364] sm:$0xff]
        %v3760 = vstv %s3758
        %v3761 = vmul.f32 %v3760, %v3759
        %s3762 = sld [smem:[#allocation6 + $0x101]]
        %v3763 = vstv %s3762
        %v3764 = vmul.f32 %v3763, %v3385
        %v3765 = vadd.f32 %v3761, %v3764
        %s3766 = sld [smem:[#allocation6 + $0x102]]
        %v3767 = vstv %s3766
        %v3768 = vmul.f32 %v3767, %v3651
        %v3769 = vadd.f32 %v3765, %v3768
        %v3770 = vmul.f32 %v3769, 0.17677669
        %v3771 = vpack.c.bf16 %v3770, %v3770
        %v3772 = vpack.c.bf16 %v3743, %v3742
        %v3773 = vpack.c.bf16 %v3745, %v3744
        %v3774 = vpack.c.bf16 %v3747, %v3746
        %v3775 = vpack.c.bf16 %v3749, %v3748
        %v3776 = vpack.c.bf16 %v3751, %v3750
        %v3777 = vpack.c.bf16 %v3753, %v3752
        %v3778 = vpack.c.bf16 %v3755, %v3754
        %v3779 = vpack.c.bf16 %v3757, %v3756
        %3780 = vmatprep.subr.bf16.mxu0 0
        %3781 = vmatpush1.bf16.xpose.msra.mxu0 %v3772
        %3782 = vmatprep.subr.bf16.mxu0 0
        %3783 = vmatpush1.bf16.xpose.msra.mxu0 %v3773
        %3784 = vmatprep.subr.bf16.mxu0 0
        %3785 = vmatpush1.bf16.xpose.msra.mxu0 %v3774
        %3786 = vmatprep.subr.bf16.mxu0 0
        %3787 = vmatpush1.bf16.xpose.msra.mxu0 %v3775
        %3788 = vmatprep.subr.bf16.mxu0 0
        %3789 = vmatpush1.bf16.xpose.msra.mxu0 %v3776
        %3790 = vmatprep.subr.bf16.mxu0 0
        %3791 = vmatpush1.bf16.xpose.msra.mxu0 %v3777
        %3792 = vmatprep.subr.bf16.mxu0 0
        %3793 = vmatpush1.bf16.xpose.msra.mxu0 %v3778
        %3794 = vmatprep.subr.bf16.mxu0 0
        %3795 = vmatpush1.bf16.xpose.msra.mxu0 %v3779
        %3796 = vmatprep.subr.bf16.mxu0 0
        %3797 = vmatpush1.bf16.xpose.msra.mxu0 0
        %3798 = vmatprep.subr.bf16.mxu0 0
        %3799 = vmatpush1.bf16.xpose.msra.mxu0 0
        %3800 = vmatprep.subr.bf16.mxu0 0
        %3801 = vmatpush1.bf16.xpose.msra.mxu0 0
        %3802 = vmatprep.subr.bf16.mxu0 0
        %3803 = vmatpush1.bf16.xpose.msra.mxu0 0
        %3804 = vmatprep.subr.bf16.mxu0 0
        %3805 = vmatpush1.bf16.xpose.msra.mxu0 0
        %3806 = vmatprep.subr.bf16.mxu0 0
        %3807 = vmatpush1.bf16.xpose.msra.mxu0 0
        %3808 = vmatprep.subr.bf16.mxu0 0
        %3809 = vmatpush1.bf16.xpose.msra.mxu0 0
        %3810 = vmatprep.subr.bf16.mxu0 0
        %3811 = vmatpush1.bf16.xpose.msra.mxu0 0
        %3812 = vmatprep.mubr.bf16.mxu0 0
        %3813 = vmatmul.mubr.bf16.gmra.mrb[0].mxu0 %v3771
        %v3814 = vpop.f32.mrb[0].mxu0
        %v3815 = vadd.f32 0.0, %v3814
        %v3816 = vpop.f32.mrb[0].mxu0
        %v3817 = vpop.f32.mrb[0].mxu0
        %v3818 = vpop.f32.mrb[0].mxu0
        %3819 = vdwg.mxu0
        %v3820 = vsel %vm384, %v3815, -1e+09
        %3821 = vmax.xlane.f32.xlu0 %v3820
        %v3822 = vpop.xlane.xlu0 %3821
        %v3823 = vsub.f32 %v3820, %v3822
        %v3824 = vmul.f32 %v3823, 1.442695
        %v3825 = vpow.pop %v3824
        %3826 = vadd.xlane.f32.xlu0 %v3825
        %v3827 = vpop.xlane.xlu0 %3826
        %v3828 = vrcp.pop %v3827
        %v3829 = vmul.f32 %v3827, %v3828
        %v3830 = vsub.f32 2.0, %v3829
        %v3831 = vmul.f32 %v3828, %v3830
        %v3832 = vmul.f32 %v3831, %v385
        %3834 = vset.pattern.permute.xlu0 0
        %3835 = vperm.xlu0 %3834, %v3832
        %v3836 = vpop.permute.xlu0 %3835
        %v3838 = vmul.f32 %v3825, %v3836
        %s3839 = sshll.u32 %s3455, 4
        %3840 = dma.done %s2338, %s3839
        %3841 = vst [vmem:[%s2332] sm:$0xff] %v3838
        %s3842 = sadd.s32 %s1212, 3
        %s3843 = smul.u32 %s3842, 8
        %s3844 = smul.addr %s3843, 16
        %s3845 = scalar_lea.hbm %s11, %s3844
        // Predicated region
        $region85: #{subcross_gmn_forward.1} parent=63 // pred_check
          _
        $region86: #{subcross_gmn_forward.1} parent=63 // pred_check_branch
          %3847 = sbr.rel target = $region88
        $region87: #{subcross_gmn_forward.1} parent=63 // pred_region
          %3848 = sst [smem:[#allocation10]] [#allocation17]
          %3849 = sst [smem:[#allocation11]] [#allocation16]
        $region88: #{subcross_gmn_forward.1} parent=63 // pred_fallthru
          _
        %3851 = shalt.err (0)
        %s3853 = sshll.u32 %s2332, 4
        %s3854 = int_to_ptr.vmem [resolvable:$true] %s3853
        %3856 = dma.vmem_to_hbm [thread:$0]  %s3854, 128, %s3845, %s2338
        %s3857 = sshll.u32 %s3455, 4
        %3858 = dma.done [#allocation3], %s3857
        %s3859 = sshll.u32 %s3455, 4
        %3860 = dma.done %s2338, %s3859
      $region64: #{subcross_gmn_forward.1} parent=5 // pred_fallthru
        _
    $region6: #{subcross_gmn_forward.1} parent=1 // loop_footer
      %s23 = sadd.s32 1, %s19
    $region7: #{subcross_gmn_forward.1} parent=1 // loop_footer_branch
      %18 = sbr.rel target = $region3
    $region8: #{subcross_gmn_forward.1} parent=1 // loop_exit
      _
    %3861 = vsyncpa [#allocation5], 1
    %s3862 = scalar_lea.sflag [#allocation5], 1
    %3863 = vsyncpa %s3862, 1
    %3864 = vsyncpa [#allocation7], 1
  %3865 = vsyncmov [#allocation3]
  %s3866 = vpop.sfrf %3865
  %p3867 = scmp.eq.s32.totalorder %s3866, 0
  %p3868 = pneg %p3867
  %3870 = shalt.err (%p3868)
  %s3871 = scalar_lea.sflag [#allocation3], 1
  %3872 = vsyncmov %s3871
  %s3873 = vpop.sfrf %3872
  %p3874 = scmp.eq.s32.totalorder %s3873, 0
  %p3875 = pneg %p3874
  %3877 = shalt.err (%p3875)

</llo_original>
